<compile_context>
chip_gen: v7x
topology: tpu7x:2x2x1
jax: 0.10.0
libtpu: 0.0.40
codegen_flags: <defaults>
</compile_context>

<pallas_src>
import jax
import jax.numpy as jnp
from jax.experimental import pallas as pl
from jax.experimental.pallas import tpu as pltpu

NUM_LAYERS = 20
FEATURES = 10
AUG = FEATURES + 1      # augmented (affine) dimension: [x | 1]
F_PAD = 128             # lane-aligned width for all padded operands


def _affine_chain_kernel(xa_ref, a_ref, o_ref):
    """Compose 20 augmented affine layers with a balanced matmul tree, then
    apply the composite once to the augmented activations.

    xa_ref: (B_pad, 128)       augmented, lane-dense activations [x | 1 | 0..]
    a_ref : (20, 128, 128)     per-layer augmented matrix [[W.T,0],[b,1]],
                               zero-padded to 128x128
    o_ref : (B_pad, 128)       padded output (cols 0..9 hold the result)
    """
    mats = [a_ref[i] for i in range(NUM_LAYERS)]

    # Balanced tree reduce preserving left-to-right layer order:
    #   20 -> 10 -> 5 -> 3 -> 2 -> 1.
    # All matmuls within a level are independent -> MXU pipelines them
    # (vs. the previous 20-deep serial dependency chain).
    while len(mats) > 1:
        nxt = [
            jnp.dot(mats[2 * j], mats[2 * j + 1],
                    preferred_element_type=jnp.float32)
            for j in range(len(mats) // 2)
        ]
        if len(mats) % 2:
            nxt.append(mats[-1])
        mats = nxt

    # Single application; biases are already folded into the composite.
    o_ref[...] = jnp.dot(xa_ref[...], mats[0],
                         preferred_element_type=jnp.float32)


def module_list_forward(x, weights, biases):
    """x: (B, 10) f32; weights: (20, 10, 10) (out, in); biases: (20, 10)."""
    x = x.astype(jnp.float32)
    batch = x.shape[0]
    b_pad = max(8, ((batch + 7) // 8) * 8)       # sublane-align the batch

    # Augmented affine matrix per layer, zero-padded to lane-dense 128x128:
    #   [x, 1] @ [[W.T, 0], [b, 1]] = [x @ W.T + b, 1]
    a = jnp.zeros((NUM_LAYERS, F_PAD, F_PAD), jnp.float32)
    a = a.at[:, :FEATURES, :FEATURES].set(
        jnp.transpose(weights.astype(jnp.float32), (0, 2, 1)))
    a = a.at[:, FEATURES, :FEATURES].set(biases.astype(jnp.float32))
    a = a.at[:, FEATURES, FEATURES].set(1.0)

    # Augmented, lane-dense activations: [x | 1 | 0 ... 0].
    xa = jnp.zeros((b_pad, F_PAD), jnp.float32)
    xa = xa.at[:batch, :FEATURES].set(x)
    xa = xa.at[:batch, FEATURES].set(1.0)

    # Total working set ~1.3 MiB -> keep everything VMEM-resident, no grid.
    # TODO(synk): for very large batches, add a batch-axis grid ("parallel")
    # so v7x's two TensorCores split the rows after a one-time composition.
    out = pl.pallas_call(
        _affine_chain_kernel,
        out_shape=jax.ShapeDtypeStruct((b_pad, F_PAD), jnp.float32),
        in_specs=[
            pl.BlockSpec(memory_space=pltpu.MemorySpace.VMEM),
            pl.BlockSpec(memory_space=pltpu.MemorySpace.VMEM),
        ],
        out_specs=pl.BlockSpec(memory_space=pltpu.MemorySpace.VMEM),
    )(xa, a)

    return out[:batch, :FEATURES].astype(x.dtype)


def _reference_forward(x, weights, biases):
    for i in range(NUM_LAYERS):
        x = x @ weights[i].T + biases[i]
    return x


if __name__ == "__main__":
    key = jax.random.PRNGKey(0)
    kx, kw, kb = jax.random.split(key, 3)

    batch = 8
    # Deterministic parameter init mimicking nn.Linear default:
    # U(-1/sqrt(fan_in), 1/sqrt(fan_in)) with fan_in = 10.
    bound = 1.0 / jnp.sqrt(jnp.float32(FEATURES))
    weights = jax.random.uniform(
        kw, (NUM_LAYERS, FEATURES, FEATURES), jnp.float32, -bound, bound
    )
    biases = jax.random.uniform(
        kb, (NUM_LAYERS, FEATURES), jnp.float32, -bound, bound
    )
    x = jax.random.normal(kx, (batch, FEATURES), jnp.float32)

    out = module_list_forward(x, weights, biases)
    out = jax.block_until_ready(out)

    ref = _reference_forward(x, weights, biases)
    assert out.shape == (batch, FEATURES)
    assert jnp.allclose(out, ref, atol=1e-4, rtol=1e-4)

    print("KERNEL_OK")
</pallas_src>

<mosaic_0001>
module attributes {stable_mosaic.version = 11 : i64} {
  func.func @_affine_chain_kernel(%arg0: memref<8x128xf32, #tpu.memory_space<vmem>>, %arg1: memref<20x128x128xf32, #tpu.memory_space<vmem>>, %arg2: memref<8x128xf32, #tpu.memory_space<vmem>>) attributes {dimension_semantics = [], scalar_prefetch = 0 : i64, scratch_operands = 0 : i64, tpu.core_type = #tpu.core_type<tc>} {
    %c0 = arith.constant 0 : index
    %c0_0 = arith.constant 0 : index
    %c0_1 = arith.constant 0 : index
    %0 = vector.load %arg1[%c0, %c0_0, %c0_1] : memref<20x128x128xf32, #tpu.memory_space<vmem>>, vector<1x128x128xf32>
    %1 = vector.shape_cast %0 : vector<1x128x128xf32> to vector<128x128xf32>
    %c1 = arith.constant 1 : index
    %c0_2 = arith.constant 0 : index
    %c0_3 = arith.constant 0 : index
    %2 = vector.load %arg1[%c1, %c0_2, %c0_3] : memref<20x128x128xf32, #tpu.memory_space<vmem>>, vector<1x128x128xf32>
    %3 = vector.shape_cast %2 : vector<1x128x128xf32> to vector<128x128xf32>
    %c2 = arith.constant 2 : index
    %c0_4 = arith.constant 0 : index
    %c0_5 = arith.constant 0 : index
    %4 = vector.load %arg1[%c2, %c0_4, %c0_5] : memref<20x128x128xf32, #tpu.memory_space<vmem>>, vector<1x128x128xf32>
    %5 = vector.shape_cast %4 : vector<1x128x128xf32> to vector<128x128xf32>
    %c3 = arith.constant 3 : index
    %c0_6 = arith.constant 0 : index
    %c0_7 = arith.constant 0 : index
    %6 = vector.load %arg1[%c3, %c0_6, %c0_7] : memref<20x128x128xf32, #tpu.memory_space<vmem>>, vector<1x128x128xf32>
    %7 = vector.shape_cast %6 : vector<1x128x128xf32> to vector<128x128xf32>
    %c4 = arith.constant 4 : index
    %c0_8 = arith.constant 0 : index
    %c0_9 = arith.constant 0 : index
    %8 = vector.load %arg1[%c4, %c0_8, %c0_9] : memref<20x128x128xf32, #tpu.memory_space<vmem>>, vector<1x128x128xf32>
    %9 = vector.shape_cast %8 : vector<1x128x128xf32> to vector<128x128xf32>
    %c5 = arith.constant 5 : index
    %c0_10 = arith.constant 0 : index
    %c0_11 = arith.constant 0 : index
    %10 = vector.load %arg1[%c5, %c0_10, %c0_11] : memref<20x128x128xf32, #tpu.memory_space<vmem>>, vector<1x128x128xf32>
    %11 = vector.shape_cast %10 : vector<1x128x128xf32> to vector<128x128xf32>
    %c6 = arith.constant 6 : index
    %c0_12 = arith.constant 0 : index
    %c0_13 = arith.constant 0 : index
    %12 = vector.load %arg1[%c6, %c0_12, %c0_13] : memref<20x128x128xf32, #tpu.memory_space<vmem>>, vector<1x128x128xf32>
    %13 = vector.shape_cast %12 : vector<1x128x128xf32> to vector<128x128xf32>
    %c7 = arith.constant 7 : index
    %c0_14 = arith.constant 0 : index
    %c0_15 = arith.constant 0 : index
    %14 = vector.load %arg1[%c7, %c0_14, %c0_15] : memref<20x128x128xf32, #tpu.memory_space<vmem>>, vector<1x128x128xf32>
    %15 = vector.shape_cast %14 : vector<1x128x128xf32> to vector<128x128xf32>
    %c8 = arith.constant 8 : index
    %c0_16 = arith.constant 0 : index
    %c0_17 = arith.constant 0 : index
    %16 = vector.load %arg1[%c8, %c0_16, %c0_17] : memref<20x128x128xf32, #tpu.memory_space<vmem>>, vector<1x128x128xf32>
    %17 = vector.shape_cast %16 : vector<1x128x128xf32> to vector<128x128xf32>
    %c9 = arith.constant 9 : index
    %c0_18 = arith.constant 0 : index
    %c0_19 = arith.constant 0 : index
    %18 = vector.load %arg1[%c9, %c0_18, %c0_19] : memref<20x128x128xf32, #tpu.memory_space<vmem>>, vector<1x128x128xf32>
    %19 = vector.shape_cast %18 : vector<1x128x128xf32> to vector<128x128xf32>
    %c10 = arith.constant 10 : index
    %c0_20 = arith.constant 0 : index
    %c0_21 = arith.constant 0 : index
    %20 = vector.load %arg1[%c10, %c0_20, %c0_21] : memref<20x128x128xf32, #tpu.memory_space<vmem>>, vector<1x128x128xf32>
    %21 = vector.shape_cast %20 : vector<1x128x128xf32> to vector<128x128xf32>
    %c11 = arith.constant 11 : index
    %c0_22 = arith.constant 0 : index
    %c0_23 = arith.constant 0 : index
    %22 = vector.load %arg1[%c11, %c0_22, %c0_23] : memref<20x128x128xf32, #tpu.memory_space<vmem>>, vector<1x128x128xf32>
    %23 = vector.shape_cast %22 : vector<1x128x128xf32> to vector<128x128xf32>
    %c12 = arith.constant 12 : index
    %c0_24 = arith.constant 0 : index
    %c0_25 = arith.constant 0 : index
    %24 = vector.load %arg1[%c12, %c0_24, %c0_25] : memref<20x128x128xf32, #tpu.memory_space<vmem>>, vector<1x128x128xf32>
    %25 = vector.shape_cast %24 : vector<1x128x128xf32> to vector<128x128xf32>
    %c13 = arith.constant 13 : index
    %c0_26 = arith.constant 0 : index
    %c0_27 = arith.constant 0 : index
    %26 = vector.load %arg1[%c13, %c0_26, %c0_27] : memref<20x128x128xf32, #tpu.memory_space<vmem>>, vector<1x128x128xf32>
    %27 = vector.shape_cast %26 : vector<1x128x128xf32> to vector<128x128xf32>
    %c14 = arith.constant 14 : index
    %c0_28 = arith.constant 0 : index
    %c0_29 = arith.constant 0 : index
    %28 = vector.load %arg1[%c14, %c0_28, %c0_29] : memref<20x128x128xf32, #tpu.memory_space<vmem>>, vector<1x128x128xf32>
    %29 = vector.shape_cast %28 : vector<1x128x128xf32> to vector<128x128xf32>
    %c15 = arith.constant 15 : index
    %c0_30 = arith.constant 0 : index
    %c0_31 = arith.constant 0 : index
    %30 = vector.load %arg1[%c15, %c0_30, %c0_31] : memref<20x128x128xf32, #tpu.memory_space<vmem>>, vector<1x128x128xf32>
    %31 = vector.shape_cast %30 : vector<1x128x128xf32> to vector<128x128xf32>
    %c16 = arith.constant 16 : index
    %c0_32 = arith.constant 0 : index
    %c0_33 = arith.constant 0 : index
    %32 = vector.load %arg1[%c16, %c0_32, %c0_33] : memref<20x128x128xf32, #tpu.memory_space<vmem>>, vector<1x128x128xf32>
    %33 = vector.shape_cast %32 : vector<1x128x128xf32> to vector<128x128xf32>
    %c17 = arith.constant 17 : index
    %c0_34 = arith.constant 0 : index
    %c0_35 = arith.constant 0 : index
    %34 = vector.load %arg1[%c17, %c0_34, %c0_35] : memref<20x128x128xf32, #tpu.memory_space<vmem>>, vector<1x128x128xf32>
    %35 = vector.shape_cast %34 : vector<1x128x128xf32> to vector<128x128xf32>
    %c18 = arith.constant 18 : index
    %c0_36 = arith.constant 0 : index
    %c0_37 = arith.constant 0 : index
    %36 = vector.load %arg1[%c18, %c0_36, %c0_37] : memref<20x128x128xf32, #tpu.memory_space<vmem>>, vector<1x128x128xf32>
    %37 = vector.shape_cast %36 : vector<1x128x128xf32> to vector<128x128xf32>
    %c19 = arith.constant 19 : index
    %c0_38 = arith.constant 0 : index
    %c0_39 = arith.constant 0 : index
    %38 = vector.load %arg1[%c19, %c0_38, %c0_39] : memref<20x128x128xf32, #tpu.memory_space<vmem>>, vector<1x128x128xf32>
    %39 = vector.shape_cast %38 : vector<1x128x128xf32> to vector<128x128xf32>
    %cst = arith.constant dense<0.000000e+00> : vector<128x128xf32>
    %40 = tpu.matmul %1, %3, %cst {dimension_numbers = #tpu.dot_dimension_numbers<[1], [0], [0], [1], [0, 0, 1, 1], [], []>} : vector<128x128xf32>, vector<128x128xf32>, vector<128x128xf32> -> vector<128x128xf32>
    %cst_40 = arith.constant dense<0.000000e+00> : vector<128x128xf32>
    %41 = tpu.matmul %5, %7, %cst_40 {dimension_numbers = #tpu.dot_dimension_numbers<[1], [0], [0], [1], [0, 0, 1, 1], [], []>} : vector<128x128xf32>, vector<128x128xf32>, vector<128x128xf32> -> vector<128x128xf32>
    %cst_41 = arith.constant dense<0.000000e+00> : vector<128x128xf32>
    %42 = tpu.matmul %9, %11, %cst_41 {dimension_numbers = #tpu.dot_dimension_numbers<[1], [0], [0], [1], [0, 0, 1, 1], [], []>} : vector<128x128xf32>, vector<128x128xf32>, vector<128x128xf32> -> vector<128x128xf32>
    %cst_42 = arith.constant dense<0.000000e+00> : vector<128x128xf32>
    %43 = tpu.matmul %13, %15, %cst_42 {dimension_numbers = #tpu.dot_dimension_numbers<[1], [0], [0], [1], [0, 0, 1, 1], [], []>} : vector<128x128xf32>, vector<128x128xf32>, vector<128x128xf32> -> vector<128x128xf32>
    %cst_43 = arith.constant dense<0.000000e+00> : vector<128x128xf32>
    %44 = tpu.matmul %17, %19, %cst_43 {dimension_numbers = #tpu.dot_dimension_numbers<[1], [0], [0], [1], [0, 0, 1, 1], [], []>} : vector<128x128xf32>, vector<128x128xf32>, vector<128x128xf32> -> vector<128x128xf32>
    %cst_44 = arith.constant dense<0.000000e+00> : vector<128x128xf32>
    %45 = tpu.matmul %21, %23, %cst_44 {dimension_numbers = #tpu.dot_dimension_numbers<[1], [0], [0], [1], [0, 0, 1, 1], [], []>} : vector<128x128xf32>, vector<128x128xf32>, vector<128x128xf32> -> vector<128x128xf32>
    %cst_45 = arith.constant dense<0.000000e+00> : vector<128x128xf32>
    %46 = tpu.matmul %25, %27, %cst_45 {dimension_numbers = #tpu.dot_dimension_numbers<[1], [0], [0], [1], [0, 0, 1, 1], [], []>} : vector<128x128xf32>, vector<128x128xf32>, vector<128x128xf32> -> vector<128x128xf32>
    %cst_46 = arith.constant dense<0.000000e+00> : vector<128x128xf32>
    %47 = tpu.matmul %29, %31, %cst_46 {dimension_numbers = #tpu.dot_dimension_numbers<[1], [0], [0], [1], [0, 0, 1, 1], [], []>} : vector<128x128xf32>, vector<128x128xf32>, vector<128x128xf32> -> vector<128x128xf32>
    %cst_47 = arith.constant dense<0.000000e+00> : vector<128x128xf32>
    %48 = tpu.matmul %33, %35, %cst_47 {dimension_numbers = #tpu.dot_dimension_numbers<[1], [0], [0], [1], [0, 0, 1, 1], [], []>} : vector<128x128xf32>, vector<128x128xf32>, vector<128x128xf32> -> vector<128x128xf32>
    %cst_48 = arith.constant dense<0.000000e+00> : vector<128x128xf32>
    %49 = tpu.matmul %37, %39, %cst_48 {dimension_numbers = #tpu.dot_dimension_numbers<[1], [0], [0], [1], [0, 0, 1, 1], [], []>} : vector<128x128xf32>, vector<128x128xf32>, vector<128x128xf32> -> vector<128x128xf32>
    %cst_49 = arith.constant dense<0.000000e+00> : vector<128x128xf32>
    %50 = tpu.matmul %40, %41, %cst_49 {dimension_numbers = #tpu.dot_dimension_numbers<[1], [0], [0], [1], [0, 0, 1, 1], [], []>} : vector<128x128xf32>, vector<128x128xf32>, vector<128x128xf32> -> vector<128x128xf32>
    %cst_50 = arith.constant dense<0.000000e+00> : vector<128x128xf32>
    %51 = tpu.matmul %42, %43, %cst_50 {dimension_numbers = #tpu.dot_dimension_numbers<[1], [0], [0], [1], [0, 0, 1, 1], [], []>} : vector<128x128xf32>, vector<128x128xf32>, vector<128x128xf32> -> vector<128x128xf32>
    %cst_51 = arith.constant dense<0.000000e+00> : vector<128x128xf32>
    %52 = tpu.matmul %44, %45, %cst_51 {dimension_numbers = #tpu.dot_dimension_numbers<[1], [0], [0], [1], [0, 0, 1, 1], [], []>} : vector<128x128xf32>, vector<128x128xf32>, vector<128x128xf32> -> vector<128x128xf32>
    %cst_52 = arith.constant dense<0.000000e+00> : vector<128x128xf32>
    %53 = tpu.matmul %46, %47, %cst_52 {dimension_numbers = #tpu.dot_dimension_numbers<[1], [0], [0], [1], [0, 0, 1, 1], [], []>} : vector<128x128xf32>, vector<128x128xf32>, vector<128x128xf32> -> vector<128x128xf32>
    %cst_53 = arith.constant dense<0.000000e+00> : vector<128x128xf32>
    %54 = tpu.matmul %48, %49, %cst_53 {dimension_numbers = #tpu.dot_dimension_numbers<[1], [0], [0], [1], [0, 0, 1, 1], [], []>} : vector<128x128xf32>, vector<128x128xf32>, vector<128x128xf32> -> vector<128x128xf32>
    %cst_54 = arith.constant dense<0.000000e+00> : vector<128x128xf32>
    %55 = tpu.matmul %50, %51, %cst_54 {dimension_numbers = #tpu.dot_dimension_numbers<[1], [0], [0], [1], [0, 0, 1, 1], [], []>} : vector<128x128xf32>, vector<128x128xf32>, vector<128x128xf32> -> vector<128x128xf32>
    %cst_55 = arith.constant dense<0.000000e+00> : vector<128x128xf32>
    %56 = tpu.matmul %52, %53, %cst_55 {dimension_numbers = #tpu.dot_dimension_numbers<[1], [0], [0], [1], [0, 0, 1, 1], [], []>} : vector<128x128xf32>, vector<128x128xf32>, vector<128x128xf32> -> vector<128x128xf32>
    %cst_56 = arith.constant dense<0.000000e+00> : vector<128x128xf32>
    %57 = tpu.matmul %55, %56, %cst_56 {dimension_numbers = #tpu.dot_dimension_numbers<[1], [0], [0], [1], [0, 0, 1, 1], [], []>} : vector<128x128xf32>, vector<128x128xf32>, vector<128x128xf32> -> vector<128x128xf32>
    %cst_57 = arith.constant dense<0.000000e+00> : vector<128x128xf32>
    %58 = tpu.matmul %57, %54, %cst_57 {dimension_numbers = #tpu.dot_dimension_numbers<[1], [0], [0], [1], [0, 0, 1, 1], [], []>} : vector<128x128xf32>, vector<128x128xf32>, vector<128x128xf32> -> vector<128x128xf32>
    %c0_58 = arith.constant 0 : index
    %c0_59 = arith.constant 0 : index
    %59 = vector.load %arg0[%c0_58, %c0_59] : memref<8x128xf32, #tpu.memory_space<vmem>>, vector<8x128xf32>
    %cst_60 = arith.constant dense<0.000000e+00> : vector<8x128xf32>
    %60 = tpu.matmul %59, %58, %cst_60 {dimension_numbers = #tpu.dot_dimension_numbers<[1], [0], [0], [1], [0, 0, 1, 1], [], []>} : vector<8x128xf32>, vector<128x128xf32>, vector<8x128xf32> -> vector<8x128xf32>
    %c0_61 = arith.constant 0 : index
    %c0_62 = arith.constant 0 : index
    %61 = vector.load %arg2[%c0_61, %c0_62] : memref<8x128xf32, #tpu.memory_space<vmem>>, vector<8x128xf32>
    tpu.vector_store %arg2[%c0_61, %c0_62], %60 {strides = array<i32>} : memref<8x128xf32, #tpu.memory_space<vmem>>, vector<8x128xf32>,
    return
  }
}

</mosaic_0001>

<llo_original>
// kernel: tpu_custom_call.1
$region0: #{tpu_custom_call.1}
  #allocation0 [shape = 'u32[]', space=smem, size = 0x4, offset = 0x4, fixed_abs, tag = 'smem constant byte address 0x4 - core index']
  #allocation1 [shape = 'u32[144,128]{1,0:T(1,128)}', space=vmem, size = 0x12000, scoped, tag = 'internal scratch']
  %s0 = inlined_call_operand.hbm [shape: f32[8,128], index: 0, kind: input, shape index: {}]
  %s1 = inlined_call_operand.hbm [shape: f32[20,128,128], index: 1, kind: input, shape index: {}]
  %s2 = inlined_call_operand.hbm [shape: f32[8,128], index: 2, kind: output, shape index: {}]
  %s3 = sld [smem:[#allocation0]]
  $region26: #{tpu_custom_call.1} parent=0
    _
  %s5 = ssub.s32 1, %s3
  %s6 = scalar_select 0, %s5, %s3
  $region1: #{tpu_custom_call.1} parent=0
    #allocation2 [shape = 'u8[4096]{0}', space=vmem, size = 0x1000, scoped, tag = 'input window, operand 0, single buffered']
    #allocation3 [shape = 's32[1]{0}', space=sflag, size = 0x4, scoped, tag = 'scoped memory for tpu_custom_call.1']
    #allocation4 [shape = 's32[1]{0}', space=sflag, size = 0x4, scoped, tag = 'scoped memory for tpu_custom_call.1']
    #allocation5 [shape = 'u8[1310720]{0}', space=vmem, size = 0x140000, scoped, tag = 'input window, operand 1, single buffered']
    #allocation6 [shape = 's32[1]{0}', space=sflag, size = 0x4, scoped, tag = 'scoped memory for tpu_custom_call.1']
    #allocation7 [shape = 'u8[4096]{0}', space=vmem, size = 0x1000, scoped, tag = 'output window, operand 0, single buffered']
    %7 = vsyncpa [#allocation3], 0
    %8 = vsyncpa [#allocation6], 0
    %9 = vsyncpa [#allocation4], 0
    // Predicated region
    $region2: #{tpu_custom_call.1} parent=1 // pred_check
      _
    $region3: #{tpu_custom_call.1} parent=1 // pred_check_branch
      %11 = sbr.rel (0) target = $region5
    $region4: #{tpu_custom_call.1} parent=1 // pred_region
      %s13 = ssub.s32 128, 128
      %14 = vsyncadd [#allocation3], %s13
      %s16 = sshll.u32 [#allocation2], 4
      %s17 = int_to_ptr.vmem [resolvable:$true] %s16
      %19 = dma.hbm_to_vmem [thread:$0]  %s0, 128, %s17, [#allocation3]
    $region5: #{tpu_custom_call.1} parent=1 // pred_fallthru
      _
    // Predicated region
    $region6: #{tpu_custom_call.1} parent=1 // pred_check
      _
    $region7: #{tpu_custom_call.1} parent=1 // pred_check_branch
      %21 = sbr.rel (0) target = $region9
    $region8: #{tpu_custom_call.1} parent=1 // pred_region
      %s23 = ssub.s32 40960, 40960
      %24 = vsyncadd [#allocation6], %s23
      %s25 = sshll.u32 [#allocation5], 4
      %s26 = int_to_ptr.vmem [resolvable:$true] %s25
      %31 = dma.hbm_to_vmem [thread:$0]  %s1, 40960, %s26, [#allocation6], 128, 128, 8
    $region9: #{tpu_custom_call.1} parent=1 // pred_fallthru
      _
    // Predicated region
    $region10: #{tpu_custom_call.1} parent=1 // pred_check
      _
    $region11: #{tpu_custom_call.1} parent=1 // pred_check_branch
      %33 = sbr.rel (0) target = $region13
    $region12: #{tpu_custom_call.1} parent=1 // pred_region
      %34 = dma.done [#allocation3], 128
    $region13: #{tpu_custom_call.1} parent=1 // pred_fallthru
      _
    // Predicated region
    $region14: #{tpu_custom_call.1} parent=1 // pred_check
      _
    $region15: #{tpu_custom_call.1} parent=1 // pred_check_branch
      %36 = sbr.rel (0) target = $region17
    $region16: #{tpu_custom_call.1} parent=1 // pred_region
      %37 = dma.done [#allocation6], 40960
    $region17: #{tpu_custom_call.1} parent=1 // pred_fallthru
      _
    %v38 = vld [vmem:[#allocation5] sm:$0xff]
    %v39 = vld [vmem:[#allocation5 + $0x8] sm:$0xff]
    %v40 = vld [vmem:[#allocation5 + $0x10] sm:$0xff]
    %v41 = vld [vmem:[#allocation5 + $0x18] sm:$0xff]
    %v42 = vld [vmem:[#allocation5 + $0x20] sm:$0xff]
    %v43 = vld [vmem:[#allocation5 + $0x28] sm:$0xff]
    %v44 = vld [vmem:[#allocation5 + $0x30] sm:$0xff]
    %v45 = vld [vmem:[#allocation5 + $0x38] sm:$0xff]
    %v46 = vld [vmem:[#allocation5 + $0x40] sm:$0xff]
    %v47 = vld [vmem:[#allocation5 + $0x48] sm:$0xff]
    %v48 = vld [vmem:[#allocation5 + $0x50] sm:$0xff]
    %v49 = vld [vmem:[#allocation5 + $0x58] sm:$0xff]
    %v50 = vld [vmem:[#allocation5 + $0x60] sm:$0xff]
    %v51 = vld [vmem:[#allocation5 + $0x68] sm:$0xff]
    %v52 = vld [vmem:[#allocation5 + $0x70] sm:$0xff]
    %v53 = vld [vmem:[#allocation5 + $0x78] sm:$0xff]
    %s54 = scalar_lea.vmem [#allocation5], 128
    %v55 = vld [vmem:[%s54] sm:$0xff]
    %v56 = vld [vmem:[%s54 + $0x8] sm:$0xff]
    %v57 = vld [vmem:[%s54 + $0x10] sm:$0xff]
    %v58 = vld [vmem:[%s54 + $0x18] sm:$0xff]
    %v59 = vld [vmem:[%s54 + $0x20] sm:$0xff]
    %v60 = vld [vmem:[%s54 + $0x28] sm:$0xff]
    %v61 = vld [vmem:[%s54 + $0x30] sm:$0xff]
    %v62 = vld [vmem:[%s54 + $0x38] sm:$0xff]
    %v63 = vld [vmem:[%s54 + $0x40] sm:$0xff]
    %v64 = vld [vmem:[%s54 + $0x48] sm:$0xff]
    %v65 = vld [vmem:[%s54 + $0x50] sm:$0xff]
    %v66 = vld [vmem:[%s54 + $0x58] sm:$0xff]
    %v67 = vld [vmem:[%s54 + $0x60] sm:$0xff]
    %v68 = vld [vmem:[%s54 + $0x68] sm:$0xff]
    %v69 = vld [vmem:[%s54 + $0x70] sm:$0xff]
    %v70 = vld [vmem:[%s54 + $0x78] sm:$0xff]
    %s71 = scalar_lea.vmem [#allocation5], 256
    %v72 = vld [vmem:[%s71] sm:$0xff]
    %v73 = vld [vmem:[%s71 + $0x8] sm:$0xff]
    %v74 = vld [vmem:[%s71 + $0x10] sm:$0xff]
    %v75 = vld [vmem:[%s71 + $0x18] sm:$0xff]
    %v76 = vld [vmem:[%s71 + $0x20] sm:$0xff]
    %v77 = vld [vmem:[%s71 + $0x28] sm:$0xff]
    %v78 = vld [vmem:[%s71 + $0x30] sm:$0xff]
    %v79 = vld [vmem:[%s71 + $0x38] sm:$0xff]
    %v80 = vld [vmem:[%s71 + $0x40] sm:$0xff]
    %v81 = vld [vmem:[%s71 + $0x48] sm:$0xff]
    %v82 = vld [vmem:[%s71 + $0x50] sm:$0xff]
    %v83 = vld [vmem:[%s71 + $0x58] sm:$0xff]
    %v84 = vld [vmem:[%s71 + $0x60] sm:$0xff]
    %v85 = vld [vmem:[%s71 + $0x68] sm:$0xff]
    %v86 = vld [vmem:[%s71 + $0x70] sm:$0xff]
    %v87 = vld [vmem:[%s71 + $0x78] sm:$0xff]
    %s88 = scalar_lea.vmem [#allocation5], 384
    %v89 = vld [vmem:[%s88] sm:$0xff]
    %v90 = vld [vmem:[%s88 + $0x8] sm:$0xff]
    %v91 = vld [vmem:[%s88 + $0x10] sm:$0xff]
    %v92 = vld [vmem:[%s88 + $0x18] sm:$0xff]
    %v93 = vld [vmem:[%s88 + $0x20] sm:$0xff]
    %v94 = vld [vmem:[%s88 + $0x28] sm:$0xff]
    %v95 = vld [vmem:[%s88 + $0x30] sm:$0xff]
    %v96 = vld [vmem:[%s88 + $0x38] sm:$0xff]
    %v97 = vld [vmem:[%s88 + $0x40] sm:$0xff]
    %v98 = vld [vmem:[%s88 + $0x48] sm:$0xff]
    %v99 = vld [vmem:[%s88 + $0x50] sm:$0xff]
    %v100 = vld [vmem:[%s88 + $0x58] sm:$0xff]
    %v101 = vld [vmem:[%s88 + $0x60] sm:$0xff]
    %v102 = vld [vmem:[%s88 + $0x68] sm:$0xff]
    %v103 = vld [vmem:[%s88 + $0x70] sm:$0xff]
    %v104 = vld [vmem:[%s88 + $0x78] sm:$0xff]
    %s105 = scalar_lea.vmem [#allocation5], 512
    %v106 = vld [vmem:[%s105] sm:$0xff]
    %v107 = vld [vmem:[%s105 + $0x8] sm:$0xff]
    %v108 = vld [vmem:[%s105 + $0x10] sm:$0xff]
    %v109 = vld [vmem:[%s105 + $0x18] sm:$0xff]
    %v110 = vld [vmem:[%s105 + $0x20] sm:$0xff]
    %v111 = vld [vmem:[%s105 + $0x28] sm:$0xff]
    %v112 = vld [vmem:[%s105 + $0x30] sm:$0xff]
    %v113 = vld [vmem:[%s105 + $0x38] sm:$0xff]
    %v114 = vld [vmem:[%s105 + $0x40] sm:$0xff]
    %v115 = vld [vmem:[%s105 + $0x48] sm:$0xff]
    %v116 = vld [vmem:[%s105 + $0x50] sm:$0xff]
    %v117 = vld [vmem:[%s105 + $0x58] sm:$0xff]
    %v118 = vld [vmem:[%s105 + $0x60] sm:$0xff]
    %v119 = vld [vmem:[%s105 + $0x68] sm:$0xff]
    %v120 = vld [vmem:[%s105 + $0x70] sm:$0xff]
    %v121 = vld [vmem:[%s105 + $0x78] sm:$0xff]
    %s122 = scalar_lea.vmem [#allocation5], 640
    %v123 = vld [vmem:[%s122] sm:$0xff]
    %v124 = vld [vmem:[%s122 + $0x8] sm:$0xff]
    %v125 = vld [vmem:[%s122 + $0x10] sm:$0xff]
    %v126 = vld [vmem:[%s122 + $0x18] sm:$0xff]
    %v127 = vld [vmem:[%s122 + $0x20] sm:$0xff]
    %v128 = vld [vmem:[%s122 + $0x28] sm:$0xff]
    %v129 = vld [vmem:[%s122 + $0x30] sm:$0xff]
    %v130 = vld [vmem:[%s122 + $0x38] sm:$0xff]
    %v131 = vld [vmem:[%s122 + $0x40] sm:$0xff]
    %v132 = vld [vmem:[%s122 + $0x48] sm:$0xff]
    %v133 = vld [vmem:[%s122 + $0x50] sm:$0xff]
    %v134 = vld [vmem:[%s122 + $0x58] sm:$0xff]
    %v135 = vld [vmem:[%s122 + $0x60] sm:$0xff]
    %v136 = vld [vmem:[%s122 + $0x68] sm:$0xff]
    %v137 = vld [vmem:[%s122 + $0x70] sm:$0xff]
    %v138 = vld [vmem:[%s122 + $0x78] sm:$0xff]
    %s139 = scalar_lea.vmem [#allocation5], 768
    %v140 = vld [vmem:[%s139] sm:$0xff]
    %v141 = vld [vmem:[%s139 + $0x8] sm:$0xff]
    %v142 = vld [vmem:[%s139 + $0x10] sm:$0xff]
    %v143 = vld [vmem:[%s139 + $0x18] sm:$0xff]
    %v144 = vld [vmem:[%s139 + $0x20] sm:$0xff]
    %v145 = vld [vmem:[%s139 + $0x28] sm:$0xff]
    %v146 = vld [vmem:[%s139 + $0x30] sm:$0xff]
    %v147 = vld [vmem:[%s139 + $0x38] sm:$0xff]
    %v148 = vld [vmem:[%s139 + $0x40] sm:$0xff]
    %v149 = vld [vmem:[%s139 + $0x48] sm:$0xff]
    %v150 = vld [vmem:[%s139 + $0x50] sm:$0xff]
    %v151 = vld [vmem:[%s139 + $0x58] sm:$0xff]
    %v152 = vld [vmem:[%s139 + $0x60] sm:$0xff]
    %v153 = vld [vmem:[%s139 + $0x68] sm:$0xff]
    %v154 = vld [vmem:[%s139 + $0x70] sm:$0xff]
    %v155 = vld [vmem:[%s139 + $0x78] sm:$0xff]
    %s156 = scalar_lea.vmem [#allocation5], 896
    %v157 = vld [vmem:[%s156] sm:$0xff]
    %v158 = vld [vmem:[%s156 + $0x8] sm:$0xff]
    %v159 = vld [vmem:[%s156 + $0x10] sm:$0xff]
    %v160 = vld [vmem:[%s156 + $0x18] sm:$0xff]
    %v161 = vld [vmem:[%s156 + $0x20] sm:$0xff]
    %v162 = vld [vmem:[%s156 + $0x28] sm:$0xff]
    %v163 = vld [vmem:[%s156 + $0x30] sm:$0xff]
    %v164 = vld [vmem:[%s156 + $0x38] sm:$0xff]
    %v165 = vld [vmem:[%s156 + $0x40] sm:$0xff]
    %v166 = vld [vmem:[%s156 + $0x48] sm:$0xff]
    %v167 = vld [vmem:[%s156 + $0x50] sm:$0xff]
    %v168 = vld [vmem:[%s156 + $0x58] sm:$0xff]
    %v169 = vld [vmem:[%s156 + $0x60] sm:$0xff]
    %v170 = vld [vmem:[%s156 + $0x68] sm:$0xff]
    %v171 = vld [vmem:[%s156 + $0x70] sm:$0xff]
    %v172 = vld [vmem:[%s156 + $0x78] sm:$0xff]
    %s173 = scalar_lea.vmem [#allocation5], 1024
    %v174 = vld [vmem:[%s173] sm:$0xff]
    %v175 = vld [vmem:[%s173 + $0x8] sm:$0xff]
    %v176 = vld [vmem:[%s173 + $0x10] sm:$0xff]
    %v177 = vld [vmem:[%s173 + $0x18] sm:$0xff]
    %v178 = vld [vmem:[%s173 + $0x20] sm:$0xff]
    %v179 = vld [vmem:[%s173 + $0x28] sm:$0xff]
    %v180 = vld [vmem:[%s173 + $0x30] sm:$0xff]
    %v181 = vld [vmem:[%s173 + $0x38] sm:$0xff]
    %v182 = vld [vmem:[%s173 + $0x40] sm:$0xff]
    %v183 = vld [vmem:[%s173 + $0x48] sm:$0xff]
    %v184 = vld [vmem:[%s173 + $0x50] sm:$0xff]
    %v185 = vld [vmem:[%s173 + $0x58] sm:$0xff]
    %v186 = vld [vmem:[%s173 + $0x60] sm:$0xff]
    %v187 = vld [vmem:[%s173 + $0x68] sm:$0xff]
    %v188 = vld [vmem:[%s173 + $0x70] sm:$0xff]
    %v189 = vld [vmem:[%s173 + $0x78] sm:$0xff]
    %s190 = scalar_lea.vmem [#allocation5], 1152
    %v191 = vld [vmem:[%s190] sm:$0xff]
    %v192 = vld [vmem:[%s190 + $0x8] sm:$0xff]
    %v193 = vld [vmem:[%s190 + $0x10] sm:$0xff]
    %v194 = vld [vmem:[%s190 + $0x18] sm:$0xff]
    %v195 = vld [vmem:[%s190 + $0x20] sm:$0xff]
    %v196 = vld [vmem:[%s190 + $0x28] sm:$0xff]
    %v197 = vld [vmem:[%s190 + $0x30] sm:$0xff]
    %v198 = vld [vmem:[%s190 + $0x38] sm:$0xff]
    %v199 = vld [vmem:[%s190 + $0x40] sm:$0xff]
    %v200 = vld [vmem:[%s190 + $0x48] sm:$0xff]
    %v201 = vld [vmem:[%s190 + $0x50] sm:$0xff]
    %v202 = vld [vmem:[%s190 + $0x58] sm:$0xff]
    %v203 = vld [vmem:[%s190 + $0x60] sm:$0xff]
    %v204 = vld [vmem:[%s190 + $0x68] sm:$0xff]
    %v205 = vld [vmem:[%s190 + $0x70] sm:$0xff]
    %v206 = vld [vmem:[%s190 + $0x78] sm:$0xff]
    %s207 = scalar_lea.vmem [#allocation5], 1280
    %v208 = vld [vmem:[%s207] sm:$0xff]
    %v209 = vld [vmem:[%s207 + $0x8] sm:$0xff]
    %v210 = vld [vmem:[%s207 + $0x10] sm:$0xff]
    %v211 = vld [vmem:[%s207 + $0x18] sm:$0xff]
    %v212 = vld [vmem:[%s207 + $0x20] sm:$0xff]
    %v213 = vld [vmem:[%s207 + $0x28] sm:$0xff]
    %v214 = vld [vmem:[%s207 + $0x30] sm:$0xff]
    %v215 = vld [vmem:[%s207 + $0x38] sm:$0xff]
    %v216 = vld [vmem:[%s207 + $0x40] sm:$0xff]
    %v217 = vld [vmem:[%s207 + $0x48] sm:$0xff]
    %v218 = vld [vmem:[%s207 + $0x50] sm:$0xff]
    %v219 = vld [vmem:[%s207 + $0x58] sm:$0xff]
    %v220 = vld [vmem:[%s207 + $0x60] sm:$0xff]
    %v221 = vld [vmem:[%s207 + $0x68] sm:$0xff]
    %v222 = vld [vmem:[%s207 + $0x70] sm:$0xff]
    %v223 = vld [vmem:[%s207 + $0x78] sm:$0xff]
    %s224 = scalar_lea.vmem [#allocation5], 1408
    %v225 = vld [vmem:[%s224] sm:$0xff]
    %v226 = vld [vmem:[%s224 + $0x8] sm:$0xff]
    %v227 = vld [vmem:[%s224 + $0x10] sm:$0xff]
    %v228 = vld [vmem:[%s224 + $0x18] sm:$0xff]
    %v229 = vld [vmem:[%s224 + $0x20] sm:$0xff]
    %v230 = vld [vmem:[%s224 + $0x28] sm:$0xff]
    %v231 = vld [vmem:[%s224 + $0x30] sm:$0xff]
    %v232 = vld [vmem:[%s224 + $0x38] sm:$0xff]
    %v233 = vld [vmem:[%s224 + $0x40] sm:$0xff]
    %v234 = vld [vmem:[%s224 + $0x48] sm:$0xff]
    %v235 = vld [vmem:[%s224 + $0x50] sm:$0xff]
    %v236 = vld [vmem:[%s224 + $0x58] sm:$0xff]
    %v237 = vld [vmem:[%s224 + $0x60] sm:$0xff]
    %v238 = vld [vmem:[%s224 + $0x68] sm:$0xff]
    %v239 = vld [vmem:[%s224 + $0x70] sm:$0xff]
    %v240 = vld [vmem:[%s224 + $0x78] sm:$0xff]
    %s241 = scalar_lea.vmem [#allocation5], 1536
    %v242 = vld [vmem:[%s241] sm:$0xff]
    %v243 = vld [vmem:[%s241 + $0x8] sm:$0xff]
    %v244 = vld [vmem:[%s241 + $0x10] sm:$0xff]
    %v245 = vld [vmem:[%s241 + $0x18] sm:$0xff]
    %v246 = vld [vmem:[%s241 + $0x20] sm:$0xff]
    %v247 = vld [vmem:[%s241 + $0x28] sm:$0xff]
    %v248 = vld [vmem:[%s241 + $0x30] sm:$0xff]
    %v249 = vld [vmem:[%s241 + $0x38] sm:$0xff]
    %v250 = vld [vmem:[%s241 + $0x40] sm:$0xff]
    %v251 = vld [vmem:[%s241 + $0x48] sm:$0xff]
    %v252 = vld [vmem:[%s241 + $0x50] sm:$0xff]
    %v253 = vld [vmem:[%s241 + $0x58] sm:$0xff]
    %v254 = vld [vmem:[%s241 + $0x60] sm:$0xff]
    %v255 = vld [vmem:[%s241 + $0x68] sm:$0xff]
    %v256 = vld [vmem:[%s241 + $0x70] sm:$0xff]
    %v257 = vld [vmem:[%s241 + $0x78] sm:$0xff]
    %s258 = scalar_lea.vmem [#allocation5], 1664
    %v259 = vld [vmem:[%s258] sm:$0xff]
    %v260 = vld [vmem:[%s258 + $0x8] sm:$0xff]
    %v261 = vld [vmem:[%s258 + $0x10] sm:$0xff]
    %v262 = vld [vmem:[%s258 + $0x18] sm:$0xff]
    %v263 = vld [vmem:[%s258 + $0x20] sm:$0xff]
    %v264 = vld [vmem:[%s258 + $0x28] sm:$0xff]
    %v265 = vld [vmem:[%s258 + $0x30] sm:$0xff]
    %v266 = vld [vmem:[%s258 + $0x38] sm:$0xff]
    %v267 = vld [vmem:[%s258 + $0x40] sm:$0xff]
    %v268 = vld [vmem:[%s258 + $0x48] sm:$0xff]
    %v269 = vld [vmem:[%s258 + $0x50] sm:$0xff]
    %v270 = vld [vmem:[%s258 + $0x58] sm:$0xff]
    %v271 = vld [vmem:[%s258 + $0x60] sm:$0xff]
    %v272 = vld [vmem:[%s258 + $0x68] sm:$0xff]
    %v273 = vld [vmem:[%s258 + $0x70] sm:$0xff]
    %v274 = vld [vmem:[%s258 + $0x78] sm:$0xff]
    %s275 = scalar_lea.vmem [#allocation5], 1792
    %v276 = vld [vmem:[%s275] sm:$0xff]
    %v277 = vld [vmem:[%s275 + $0x8] sm:$0xff]
    %v278 = vld [vmem:[%s275 + $0x10] sm:$0xff]
    %v279 = vld [vmem:[%s275 + $0x18] sm:$0xff]
    %v280 = vld [vmem:[%s275 + $0x20] sm:$0xff]
    %v281 = vld [vmem:[%s275 + $0x28] sm:$0xff]
    %v282 = vld [vmem:[%s275 + $0x30] sm:$0xff]
    %v283 = vld [vmem:[%s275 + $0x38] sm:$0xff]
    %v284 = vld [vmem:[%s275 + $0x40] sm:$0xff]
    %v285 = vld [vmem:[%s275 + $0x48] sm:$0xff]
    %v286 = vld [vmem:[%s275 + $0x50] sm:$0xff]
    %v287 = vld [vmem:[%s275 + $0x58] sm:$0xff]
    %v288 = vld [vmem:[%s275 + $0x60] sm:$0xff]
    %v289 = vld [vmem:[%s275 + $0x68] sm:$0xff]
    %v290 = vld [vmem:[%s275 + $0x70] sm:$0xff]
    %v291 = vld [vmem:[%s275 + $0x78] sm:$0xff]
    %s292 = scalar_lea.vmem [#allocation5], 1920
    %v293 = vld [vmem:[%s292] sm:$0xff]
    %v294 = vld [vmem:[%s292 + $0x8] sm:$0xff]
    %v295 = vld [vmem:[%s292 + $0x10] sm:$0xff]
    %v296 = vld [vmem:[%s292 + $0x18] sm:$0xff]
    %v297 = vld [vmem:[%s292 + $0x20] sm:$0xff]
    %v298 = vld [vmem:[%s292 + $0x28] sm:$0xff]
    %v299 = vld [vmem:[%s292 + $0x30] sm:$0xff]
    %v300 = vld [vmem:[%s292 + $0x38] sm:$0xff]
    %v301 = vld [vmem:[%s292 + $0x40] sm:$0xff]
    %v302 = vld [vmem:[%s292 + $0x48] sm:$0xff]
    %v303 = vld [vmem:[%s292 + $0x50] sm:$0xff]
    %v304 = vld [vmem:[%s292 + $0x58] sm:$0xff]
    %v305 = vld [vmem:[%s292 + $0x60] sm:$0xff]
    %v306 = vld [vmem:[%s292 + $0x68] sm:$0xff]
    %v307 = vld [vmem:[%s292 + $0x70] sm:$0xff]
    %v308 = vld [vmem:[%s292 + $0x78] sm:$0xff]
    %s309 = scalar_lea.vmem [#allocation5], 2048
    %v310 = vld [vmem:[%s309] sm:$0xff]
    %v311 = vld [vmem:[%s309 + $0x8] sm:$0xff]
    %v312 = vld [vmem:[%s309 + $0x10] sm:$0xff]
    %v313 = vld [vmem:[%s309 + $0x18] sm:$0xff]
    %v314 = vld [vmem:[%s309 + $0x20] sm:$0xff]
    %v315 = vld [vmem:[%s309 + $0x28] sm:$0xff]
    %v316 = vld [vmem:[%s309 + $0x30] sm:$0xff]
    %v317 = vld [vmem:[%s309 + $0x38] sm:$0xff]
    %v318 = vld [vmem:[%s309 + $0x40] sm:$0xff]
    %v319 = vld [vmem:[%s309 + $0x48] sm:$0xff]
    %v320 = vld [vmem:[%s309 + $0x50] sm:$0xff]
    %v321 = vld [vmem:[%s309 + $0x58] sm:$0xff]
    %v322 = vld [vmem:[%s309 + $0x60] sm:$0xff]
    %v323 = vld [vmem:[%s309 + $0x68] sm:$0xff]
    %v324 = vld [vmem:[%s309 + $0x70] sm:$0xff]
    %v325 = vld [vmem:[%s309 + $0x78] sm:$0xff]
    %s326 = scalar_lea.vmem [#allocation5], 2176
    %v327 = vld [vmem:[%s326] sm:$0xff]
    %v328 = vld [vmem:[%s326 + $0x8] sm:$0xff]
    %v329 = vld [vmem:[%s326 + $0x10] sm:$0xff]
    %v330 = vld [vmem:[%s326 + $0x18] sm:$0xff]
    %v331 = vld [vmem:[%s326 + $0x20] sm:$0xff]
    %v332 = vld [vmem:[%s326 + $0x28] sm:$0xff]
    %v333 = vld [vmem:[%s326 + $0x30] sm:$0xff]
    %v334 = vld [vmem:[%s326 + $0x38] sm:$0xff]
    %v335 = vld [vmem:[%s326 + $0x40] sm:$0xff]
    %v336 = vld [vmem:[%s326 + $0x48] sm:$0xff]
    %v337 = vld [vmem:[%s326 + $0x50] sm:$0xff]
    %v338 = vld [vmem:[%s326 + $0x58] sm:$0xff]
    %v339 = vld [vmem:[%s326 + $0x60] sm:$0xff]
    %v340 = vld [vmem:[%s326 + $0x68] sm:$0xff]
    %v341 = vld [vmem:[%s326 + $0x70] sm:$0xff]
    %v342 = vld [vmem:[%s326 + $0x78] sm:$0xff]
    %s343 = scalar_lea.vmem [#allocation5], 2304
    %v344 = vld [vmem:[%s343] sm:$0xff]
    %v345 = vld [vmem:[%s343 + $0x8] sm:$0xff]
    %v346 = vld [vmem:[%s343 + $0x10] sm:$0xff]
    %v347 = vld [vmem:[%s343 + $0x18] sm:$0xff]
    %v348 = vld [vmem:[%s343 + $0x20] sm:$0xff]
    %v349 = vld [vmem:[%s343 + $0x28] sm:$0xff]
    %v350 = vld [vmem:[%s343 + $0x30] sm:$0xff]
    %v351 = vld [vmem:[%s343 + $0x38] sm:$0xff]
    %v352 = vld [vmem:[%s343 + $0x40] sm:$0xff]
    %v353 = vld [vmem:[%s343 + $0x48] sm:$0xff]
    %v354 = vld [vmem:[%s343 + $0x50] sm:$0xff]
    %v355 = vld [vmem:[%s343 + $0x58] sm:$0xff]
    %v356 = vld [vmem:[%s343 + $0x60] sm:$0xff]
    %v357 = vld [vmem:[%s343 + $0x68] sm:$0xff]
    %v358 = vld [vmem:[%s343 + $0x70] sm:$0xff]
    %v359 = vld [vmem:[%s343 + $0x78] sm:$0xff]
    %s360 = scalar_lea.vmem [#allocation5], 2432
    %v361 = vld [vmem:[%s360] sm:$0xff]
    %v362 = vld [vmem:[%s360 + $0x8] sm:$0xff]
    %v363 = vld [vmem:[%s360 + $0x10] sm:$0xff]
    %v364 = vld [vmem:[%s360 + $0x18] sm:$0xff]
    %v365 = vld [vmem:[%s360 + $0x20] sm:$0xff]
    %v366 = vld [vmem:[%s360 + $0x28] sm:$0xff]
    %v367 = vld [vmem:[%s360 + $0x30] sm:$0xff]
    %v368 = vld [vmem:[%s360 + $0x38] sm:$0xff]
    %v369 = vld [vmem:[%s360 + $0x40] sm:$0xff]
    %v370 = vld [vmem:[%s360 + $0x48] sm:$0xff]
    %v371 = vld [vmem:[%s360 + $0x50] sm:$0xff]
    %v372 = vld [vmem:[%s360 + $0x58] sm:$0xff]
    %v373 = vld [vmem:[%s360 + $0x60] sm:$0xff]
    %v374 = vld [vmem:[%s360 + $0x68] sm:$0xff]
    %v375 = vld [vmem:[%s360 + $0x70] sm:$0xff]
    %v376 = vld [vmem:[%s360 + $0x78] sm:$0xff]
    %377 = vmatprep.subr.mxu0 0.0
    %378 = vmatpush1.msra.mxu0 %v55
    %379 = vmatprep.subr.mxu0 0.0
    %380 = vmatpush1.msra.mxu0 %v56
    %381 = vmatprep.subr.mxu0 0.0
    %382 = vmatpush1.msra.mxu0 %v57
    %383 = vmatprep.subr.mxu0 0.0
    %384 = vmatpush1.msra.mxu0 %v58
    %385 = vmatprep.subr.mxu0 0.0
    %386 = vmatpush1.msra.mxu0 %v59
    %387 = vmatprep.subr.mxu0 0.0
    %388 = vmatpush1.msra.mxu0 %v60
    %389 = vmatprep.subr.mxu0 0.0
    %390 = vmatpush1.msra.mxu0 %v61
    %391 = vmatprep.subr.mxu0 0.0
    %392 = vmatpush1.msra.mxu0 %v62
    %393 = vmatprep.subr.mxu0 0.0
    %394 = vmatpush1.msra.mxu0 %v63
    %395 = vmatprep.subr.mxu0 0.0
    %396 = vmatpush1.msra.mxu0 %v64
    %397 = vmatprep.subr.mxu0 0.0
    %398 = vmatpush1.msra.mxu0 %v65
    %399 = vmatprep.subr.mxu0 0.0
    %400 = vmatpush1.msra.mxu0 %v66
    %401 = vmatprep.subr.mxu0 0.0
    %402 = vmatpush1.msra.mxu0 %v67
    %403 = vmatprep.subr.mxu0 0.0
    %404 = vmatpush1.msra.mxu0 %v68
    %405 = vmatprep.subr.mxu0 0.0
    %406 = vmatpush1.msra.mxu0 %v69
    %407 = vmatprep.subr.mxu0 0.0
    %408 = vmatpush1.msra.mxu0 %v70
    %409 = vmatprep.subr.mxu0 0.0
    %410 = vmatpush1.msra.mxu0 0.0
    %411 = vmatprep.subr.mxu0 0.0
    %412 = vmatpush1.msra.mxu0 0.0
    %413 = vmatprep.subr.mxu0 0.0
    %414 = vmatpush1.msra.mxu0 0.0
    %415 = vmatprep.subr.mxu0 0.0
    %416 = vmatpush1.msra.mxu0 0.0
    %417 = vmatprep.subr.mxu0 0.0
    %418 = vmatpush1.msra.mxu0 0.0
    %419 = vmatprep.subr.mxu0 0.0
    %420 = vmatpush1.msra.mxu0 0.0
    %421 = vmatprep.subr.mxu0 0.0
    %422 = vmatpush1.msra.mxu0 0.0
    %423 = vmatprep.subr.mxu0 0.0
    %424 = vmatpush1.msra.mxu0 0.0
    %425 = vmatprep.subr.mxu0 0.0
    %426 = vmatpush1.msra.mxu0 0.0
    %427 = vmatprep.subr.mxu0 0.0
    %428 = vmatpush1.msra.mxu0 0.0
    %429 = vmatprep.subr.mxu0 0.0
    %430 = vmatpush1.msra.mxu0 0.0
    %431 = vmatprep.subr.mxu0 0.0
    %432 = vmatpush1.msra.mxu0 0.0
    %433 = vmatprep.subr.mxu0 0.0
    %434 = vmatpush1.msra.mxu0 0.0
    %435 = vmatprep.subr.mxu0 0.0
    %436 = vmatpush1.msra.mxu0 0.0
    %437 = vmatprep.subr.mxu0 0.0
    %438 = vmatpush1.msra.mxu0 0.0
    %439 = vmatprep.subr.mxu0 0.0
    %440 = vmatpush1.msra.mxu0 0.0
    %441 = vmatprep.mubr.f32.mxu0 0.0
    %442 = vmatmul.mubr.f32.gmra.mrb[0].mxu0 %v38
    %v443 = vpop.f32.mrb[0].mxu0
    %v444 = vadd.f32 0.0, %v443
    %v445 = vpop.f32.mrb[0].mxu0
    %446 = vmatprep.mubr.f32.mxu0 0.0
    %447 = vmatmul.mubr.f32.gmra.mrb[0].mxu0 %v39
    %v448 = vpop.f32.mrb[0].mxu0
    %v449 = vadd.f32 0.0, %v448
    %v450 = vpop.f32.mrb[0].mxu0
    %451 = vmatprep.mubr.f32.mxu0 0.0
    %452 = vmatmul.mubr.f32.gmra.mrb[0].mxu0 %v40
    %v453 = vpop.f32.mrb[0].mxu0
    %v454 = vadd.f32 0.0, %v453
    %v455 = vpop.f32.mrb[0].mxu0
    %456 = vmatprep.mubr.f32.mxu0 0.0
    %457 = vmatmul.mubr.f32.gmra.mrb[0].mxu0 %v41
    %v458 = vpop.f32.mrb[0].mxu0
    %v459 = vadd.f32 0.0, %v458
    %v460 = vpop.f32.mrb[0].mxu0
    %461 = vmatprep.mubr.f32.mxu0 0.0
    %462 = vmatmul.mubr.f32.gmra.mrb[0].mxu0 %v42
    %v463 = vpop.f32.mrb[0].mxu0
    %v464 = vadd.f32 0.0, %v463
    %v465 = vpop.f32.mrb[0].mxu0
    %466 = vmatprep.mubr.f32.mxu0 0.0
    %467 = vmatmul.mubr.f32.gmra.mrb[0].mxu0 %v43
    %v468 = vpop.f32.mrb[0].mxu0
    %v469 = vadd.f32 0.0, %v468
    %v470 = vpop.f32.mrb[0].mxu0
    %471 = vmatprep.mubr.f32.mxu0 0.0
    %472 = vmatmul.mubr.f32.gmra.mrb[0].mxu0 %v44
    %v473 = vpop.f32.mrb[0].mxu0
    %v474 = vadd.f32 0.0, %v473
    %v475 = vpop.f32.mrb[0].mxu0
    %476 = vmatprep.mubr.f32.mxu0 0.0
    %477 = vmatmul.mubr.f32.gmra.mrb[0].mxu0 %v45
    %v478 = vpop.f32.mrb[0].mxu0
    %v479 = vadd.f32 0.0, %v478
    %v480 = vpop.f32.mrb[0].mxu0
    %481 = vmatprep.mubr.f32.mxu0 0.0
    %482 = vmatmul.mubr.f32.gmra.mrb[0].mxu0 %v46
    %v483 = vpop.f32.mrb[0].mxu0
    %v484 = vadd.f32 0.0, %v483
    %v485 = vpop.f32.mrb[0].mxu0
    %486 = vmatprep.mubr.f32.mxu0 0.0
    %487 = vmatmul.mubr.f32.gmra.mrb[0].mxu0 %v47
    %v488 = vpop.f32.mrb[0].mxu0
    %v489 = vadd.f32 0.0, %v488
    %v490 = vpop.f32.mrb[0].mxu0
    %491 = vmatprep.mubr.f32.mxu0 0.0
    %492 = vmatmul.mubr.f32.gmra.mrb[0].mxu0 %v48
    %v493 = vpop.f32.mrb[0].mxu0
    %v494 = vadd.f32 0.0, %v493
    %v495 = vpop.f32.mrb[0].mxu0
    %496 = vmatprep.mubr.f32.mxu0 0.0
    %497 = vmatmul.mubr.f32.gmra.mrb[0].mxu0 %v49
    %v498 = vpop.f32.mrb[0].mxu0
    %v499 = vadd.f32 0.0, %v498
    %v500 = vpop.f32.mrb[0].mxu0
    %501 = vmatprep.mubr.f32.mxu0 0.0
    %502 = vmatmul.mubr.f32.gmra.mrb[0].mxu0 %v50
    %v503 = vpop.f32.mrb[0].mxu0
    %v504 = vadd.f32 0.0, %v503
    %v505 = vpop.f32.mrb[0].mxu0
    %506 = vmatprep.mubr.f32.mxu0 0.0
    %507 = vmatmul.mubr.f32.gmra.mrb[0].mxu0 %v51
    %v508 = vpop.f32.mrb[0].mxu0
    %v509 = vadd.f32 0.0, %v508
    %v510 = vpop.f32.mrb[0].mxu0
    %511 = vmatprep.mubr.f32.mxu0 0.0
    %512 = vmatmul.mubr.f32.gmra.mrb[0].mxu0 %v52
    %v513 = vpop.f32.mrb[0].mxu0
    %v514 = vadd.f32 0.0, %v513
    %v515 = vpop.f32.mrb[0].mxu0
    %516 = vmatprep.mubr.f32.mxu0 0.0
    %517 = vmatmul.mubr.f32.gmra.mrb[0].mxu0 %v53
    %v518 = vpop.f32.mrb[0].mxu0
    %v519 = vadd.f32 0.0, %v518
    %v520 = vpop.f32.mrb[0].mxu0
    %521 = vdwg.mxu0
    %522 = vmatprep.subr.mxu0 0.0
    %523 = vmatpush1.msra.mxu0 %v89
    %524 = vmatprep.subr.mxu0 0.0
    %525 = vmatpush1.msra.mxu0 %v90
    %526 = vmatprep.subr.mxu0 0.0
    %527 = vmatpush1.msra.mxu0 %v91
    %528 = vmatprep.subr.mxu0 0.0
    %529 = vmatpush1.msra.mxu0 %v92
    %530 = vmatprep.subr.mxu0 0.0
    %531 = vmatpush1.msra.mxu0 %v93
    %532 = vmatprep.subr.mxu0 0.0
    %533 = vmatpush1.msra.mxu0 %v94
    %534 = vmatprep.subr.mxu0 0.0
    %535 = vmatpush1.msra.mxu0 %v95
    %536 = vmatprep.subr.mxu0 0.0
    %537 = vmatpush1.msra.mxu0 %v96
    %538 = vmatprep.subr.mxu0 0.0
    %539 = vmatpush1.msra.mxu0 %v97
    %540 = vmatprep.subr.mxu0 0.0
    %541 = vmatpush1.msra.mxu0 %v98
    %542 = vmatprep.subr.mxu0 0.0
    %543 = vmatpush1.msra.mxu0 %v99
    %544 = vmatprep.subr.mxu0 0.0
    %545 = vmatpush1.msra.mxu0 %v100
    %546 = vmatprep.subr.mxu0 0.0
    %547 = vmatpush1.msra.mxu0 %v101
    %548 = vmatprep.subr.mxu0 0.0
    %549 = vmatpush1.msra.mxu0 %v102
    %550 = vmatprep.subr.mxu0 0.0
    %551 = vmatpush1.msra.mxu0 %v103
    %552 = vmatprep.subr.mxu0 0.0
    %553 = vmatpush1.msra.mxu0 %v104
    %554 = vmatprep.subr.mxu0 0.0
    %555 = vmatpush1.msra.mxu0 0.0
    %556 = vmatprep.subr.mxu0 0.0
    %557 = vmatpush1.msra.mxu0 0.0
    %558 = vmatprep.subr.mxu0 0.0
    %559 = vmatpush1.msra.mxu0 0.0
    %560 = vmatprep.subr.mxu0 0.0
    %561 = vmatpush1.msra.mxu0 0.0
    %562 = vmatprep.subr.mxu0 0.0
    %563 = vmatpush1.msra.mxu0 0.0
    %564 = vmatprep.subr.mxu0 0.0
    %565 = vmatpush1.msra.mxu0 0.0
    %566 = vmatprep.subr.mxu0 0.0
    %567 = vmatpush1.msra.mxu0 0.0
    %568 = vmatprep.subr.mxu0 0.0
    %569 = vmatpush1.msra.mxu0 0.0
    %570 = vmatprep.subr.mxu0 0.0
    %571 = vmatpush1.msra.mxu0 0.0
    %572 = vmatprep.subr.mxu0 0.0
    %573 = vmatpush1.msra.mxu0 0.0
    %574 = vmatprep.subr.mxu0 0.0
    %575 = vmatpush1.msra.mxu0 0.0
    %576 = vmatprep.subr.mxu0 0.0
    %577 = vmatpush1.msra.mxu0 0.0
    %578 = vmatprep.subr.mxu0 0.0
    %579 = vmatpush1.msra.mxu0 0.0
    %580 = vmatprep.subr.mxu0 0.0
    %581 = vmatpush1.msra.mxu0 0.0
    %582 = vmatprep.subr.mxu0 0.0
    %583 = vmatpush1.msra.mxu0 0.0
    %584 = vmatprep.subr.mxu0 0.0
    %585 = vmatpush1.msra.mxu0 0.0
    %586 = vmatprep.mubr.f32.mxu0 0.0
    %587 = vmatmul.mubr.f32.gmra.mrb[0].mxu0 %v72
    %v588 = vpop.f32.mrb[0].mxu0
    %v589 = vadd.f32 0.0, %v588
    %v590 = vpop.f32.mrb[0].mxu0
    %591 = vmatprep.mubr.f32.mxu0 0.0
    %592 = vmatmul.mubr.f32.gmra.mrb[0].mxu0 %v73
    %v593 = vpop.f32.mrb[0].mxu0
    %v594 = vadd.f32 0.0, %v593
    %v595 = vpop.f32.mrb[0].mxu0
    %596 = vmatprep.mubr.f32.mxu0 0.0
    %597 = vmatmul.mubr.f32.gmra.mrb[0].mxu0 %v74
    %v598 = vpop.f32.mrb[0].mxu0
    %v599 = vadd.f32 0.0, %v598
    %v600 = vpop.f32.mrb[0].mxu0
    %601 = vmatprep.mubr.f32.mxu0 0.0
    %602 = vmatmul.mubr.f32.gmra.mrb[0].mxu0 %v75
    %v603 = vpop.f32.mrb[0].mxu0
    %v604 = vadd.f32 0.0, %v603
    %v605 = vpop.f32.mrb[0].mxu0
    %606 = vmatprep.mubr.f32.mxu0 0.0
    %607 = vmatmul.mubr.f32.gmra.mrb[0].mxu0 %v76
    %v608 = vpop.f32.mrb[0].mxu0
    %v609 = vadd.f32 0.0, %v608
    %v610 = vpop.f32.mrb[0].mxu0
    %611 = vmatprep.mubr.f32.mxu0 0.0
    %612 = vmatmul.mubr.f32.gmra.mrb[0].mxu0 %v77
    %v613 = vpop.f32.mrb[0].mxu0
    %v614 = vadd.f32 0.0, %v613
    %v615 = vpop.f32.mrb[0].mxu0
    %616 = vmatprep.mubr.f32.mxu0 0.0
    %617 = vmatmul.mubr.f32.gmra.mrb[0].mxu0 %v78
    %v618 = vpop.f32.mrb[0].mxu0
    %v619 = vadd.f32 0.0, %v618
    %v620 = vpop.f32.mrb[0].mxu0
    %621 = vmatprep.mubr.f32.mxu0 0.0
    %622 = vmatmul.mubr.f32.gmra.mrb[0].mxu0 %v79
    %v623 = vpop.f32.mrb[0].mxu0
    %v624 = vadd.f32 0.0, %v623
    %v625 = vpop.f32.mrb[0].mxu0
    %626 = vmatprep.mubr.f32.mxu0 0.0
    %627 = vmatmul.mubr.f32.gmra.mrb[0].mxu0 %v80
    %v628 = vpop.f32.mrb[0].mxu0
    %v629 = vadd.f32 0.0, %v628
    %v630 = vpop.f32.mrb[0].mxu0
    %631 = vmatprep.mubr.f32.mxu0 0.0
    %632 = vmatmul.mubr.f32.gmra.mrb[0].mxu0 %v81
    %v633 = vpop.f32.mrb[0].mxu0
    %v634 = vadd.f32 0.0, %v633
    %v635 = vpop.f32.mrb[0].mxu0
    %636 = vmatprep.mubr.f32.mxu0 0.0
    %637 = vmatmul.mubr.f32.gmra.mrb[0].mxu0 %v82
    %v638 = vpop.f32.mrb[0].mxu0
    %v639 = vadd.f32 0.0, %v638
    %v640 = vpop.f32.mrb[0].mxu0
    %641 = vmatprep.mubr.f32.mxu0 0.0
    %642 = vmatmul.mubr.f32.gmra.mrb[0].mxu0 %v83
    %v643 = vpop.f32.mrb[0].mxu0
    %v644 = vadd.f32 0.0, %v643
    %v645 = vpop.f32.mrb[0].mxu0
    %646 = vmatprep.mubr.f32.mxu0 0.0
    %647 = vmatmul.mubr.f32.gmra.mrb[0].mxu0 %v84
    %v648 = vpop.f32.mrb[0].mxu0
    %v649 = vadd.f32 0.0, %v648
    %v650 = vpop.f32.mrb[0].mxu0
    %651 = vmatprep.mubr.f32.mxu0 0.0
    %652 = vmatmul.mubr.f32.gmra.mrb[0].mxu0 %v85
    %v653 = vpop.f32.mrb[0].mxu0
    %v654 = vadd.f32 0.0, %v653
    %v655 = vpop.f32.mrb[0].mxu0
    %656 = vmatprep.mubr.f32.mxu0 0.0
    %657 = vmatmul.mubr.f32.gmra.mrb[0].mxu0 %v86
    %v658 = vpop.f32.mrb[0].mxu0
    %v659 = vadd.f32 0.0, %v658
    %v660 = vpop.f32.mrb[0].mxu0
    %661 = vmatprep.mubr.f32.mxu0 0.0
    %662 = vmatmul.mubr.f32.gmra.mrb[0].mxu0 %v87
    %v663 = vpop.f32.mrb[0].mxu0
    %v664 = vadd.f32 0.0, %v663
    %v665 = vpop.f32.mrb[0].mxu0
    %666 = vdwg.mxu0
    %667 = vmatprep.subr.mxu0 0.0
    %668 = vmatpush1.msra.mxu0 %v123
    %669 = vmatprep.subr.mxu0 0.0
    %670 = vmatpush1.msra.mxu0 %v124
    %671 = vmatprep.subr.mxu0 0.0
    %672 = vmatpush1.msra.mxu0 %v125
    %673 = vmatprep.subr.mxu0 0.0
    %674 = vmatpush1.msra.mxu0 %v126
    %675 = vmatprep.subr.mxu0 0.0
    %676 = vmatpush1.msra.mxu0 %v127
    %677 = vmatprep.subr.mxu0 0.0
    %678 = vmatpush1.msra.mxu0 %v128
    %679 = vmatprep.subr.mxu0 0.0
    %680 = vmatpush1.msra.mxu0 %v129
    %681 = vmatprep.subr.mxu0 0.0
    %682 = vmatpush1.msra.mxu0 %v130
    %683 = vmatprep.subr.mxu0 0.0
    %684 = vmatpush1.msra.mxu0 %v131
    %685 = vmatprep.subr.mxu0 0.0
    %686 = vmatpush1.msra.mxu0 %v132
    %687 = vmatprep.subr.mxu0 0.0
    %688 = vmatpush1.msra.mxu0 %v133
    %689 = vmatprep.subr.mxu0 0.0
    %690 = vmatpush1.msra.mxu0 %v134
    %691 = vmatprep.subr.mxu0 0.0
    %692 = vmatpush1.msra.mxu0 %v135
    %693 = vmatprep.subr.mxu0 0.0
    %694 = vmatpush1.msra.mxu0 %v136
    %695 = vmatprep.subr.mxu0 0.0
    %696 = vmatpush1.msra.mxu0 %v137
    %697 = vmatprep.subr.mxu0 0.0
    %698 = vmatpush1.msra.mxu0 %v138
    %699 = vmatprep.subr.mxu0 0.0
    %700 = vmatpush1.msra.mxu0 0.0
    %701 = vmatprep.subr.mxu0 0.0
    %702 = vmatpush1.msra.mxu0 0.0
    %703 = vmatprep.subr.mxu0 0.0
    %704 = vmatpush1.msra.mxu0 0.0
    %705 = vmatprep.subr.mxu0 0.0
    %706 = vmatpush1.msra.mxu0 0.0
    %707 = vmatprep.subr.mxu0 0.0
    %708 = vmatpush1.msra.mxu0 0.0
    %709 = vmatprep.subr.mxu0 0.0
    %710 = vmatpush1.msra.mxu0 0.0
    %711 = vmatprep.subr.mxu0 0.0
    %712 = vmatpush1.msra.mxu0 0.0
    %713 = vmatprep.subr.mxu0 0.0
    %714 = vmatpush1.msra.mxu0 0.0
    %715 = vmatprep.subr.mxu0 0.0
    %716 = vmatpush1.msra.mxu0 0.0
    %717 = vmatprep.subr.mxu0 0.0
    %718 = vmatpush1.msra.mxu0 0.0
    %719 = vmatprep.subr.mxu0 0.0
    %720 = vmatpush1.msra.mxu0 0.0
    %721 = vmatprep.subr.mxu0 0.0
    %722 = vmatpush1.msra.mxu0 0.0
    %723 = vmatprep.subr.mxu0 0.0
    %724 = vmatpush1.msra.mxu0 0.0
    %725 = vmatprep.subr.mxu0 0.0
    %726 = vmatpush1.msra.mxu0 0.0
    %727 = vmatprep.subr.mxu0 0.0
    %728 = vmatpush1.msra.mxu0 0.0
    %729 = vmatprep.subr.mxu0 0.0
    %730 = vmatpush1.msra.mxu0 0.0
    %731 = vmatprep.mubr.f32.mxu0 0.0
    %732 = vmatmul.mubr.f32.gmra.mrb[0].mxu0 %v106
    %v733 = vpop.f32.mrb[0].mxu0
    %v734 = vadd.f32 0.0, %v733
    %v735 = vpop.f32.mrb[0].mxu0
    %736 = vmatprep.mubr.f32.mxu0 0.0
    %737 = vmatmul.mubr.f32.gmra.mrb[0].mxu0 %v107
    %v738 = vpop.f32.mrb[0].mxu0
    %v739 = vadd.f32 0.0, %v738
    %v740 = vpop.f32.mrb[0].mxu0
    %741 = vmatprep.mubr.f32.mxu0 0.0
    %742 = vmatmul.mubr.f32.gmra.mrb[0].mxu0 %v108
    %v743 = vpop.f32.mrb[0].mxu0
    %v744 = vadd.f32 0.0, %v743
    %v745 = vpop.f32.mrb[0].mxu0
    %746 = vmatprep.mubr.f32.mxu0 0.0
    %747 = vmatmul.mubr.f32.gmra.mrb[0].mxu0 %v109
    %v748 = vpop.f32.mrb[0].mxu0
    %v749 = vadd.f32 0.0, %v748
    %v750 = vpop.f32.mrb[0].mxu0
    %751 = vmatprep.mubr.f32.mxu0 0.0
    %752 = vmatmul.mubr.f32.gmra.mrb[0].mxu0 %v110
    %v753 = vpop.f32.mrb[0].mxu0
    %v754 = vadd.f32 0.0, %v753
    %v755 = vpop.f32.mrb[0].mxu0
    %756 = vmatprep.mubr.f32.mxu0 0.0
    %757 = vmatmul.mubr.f32.gmra.mrb[0].mxu0 %v111
    %v758 = vpop.f32.mrb[0].mxu0
    %v759 = vadd.f32 0.0, %v758
    %v760 = vpop.f32.mrb[0].mxu0
    %761 = vmatprep.mubr.f32.mxu0 0.0
    %762 = vmatmul.mubr.f32.gmra.mrb[0].mxu0 %v112
    %v763 = vpop.f32.mrb[0].mxu0
    %v764 = vadd.f32 0.0, %v763
    %v765 = vpop.f32.mrb[0].mxu0
    %766 = vmatprep.mubr.f32.mxu0 0.0
    %767 = vmatmul.mubr.f32.gmra.mrb[0].mxu0 %v113
    %v768 = vpop.f32.mrb[0].mxu0
    %v769 = vadd.f32 0.0, %v768
    %v770 = vpop.f32.mrb[0].mxu0
    %771 = vmatprep.mubr.f32.mxu0 0.0
    %772 = vmatmul.mubr.f32.gmra.mrb[0].mxu0 %v114
    %v773 = vpop.f32.mrb[0].mxu0
    %v774 = vadd.f32 0.0, %v773
    %v775 = vpop.f32.mrb[0].mxu0
    %776 = vmatprep.mubr.f32.mxu0 0.0
    %777 = vmatmul.mubr.f32.gmra.mrb[0].mxu0 %v115
    %v778 = vpop.f32.mrb[0].mxu0
    %v779 = vadd.f32 0.0, %v778
    %v780 = vpop.f32.mrb[0].mxu0
    %781 = vmatprep.mubr.f32.mxu0 0.0
    %782 = vmatmul.mubr.f32.gmra.mrb[0].mxu0 %v116
    %v783 = vpop.f32.mrb[0].mxu0
    %v784 = vadd.f32 0.0, %v783
    %v785 = vpop.f32.mrb[0].mxu0
    %786 = vmatprep.mubr.f32.mxu0 0.0
    %787 = vmatmul.mubr.f32.gmra.mrb[0].mxu0 %v117
    %v788 = vpop.f32.mrb[0].mxu0
    %v789 = vadd.f32 0.0, %v788
    %v790 = vpop.f32.mrb[0].mxu0
    %791 = vmatprep.mubr.f32.mxu0 0.0
    %792 = vmatmul.mubr.f32.gmra.mrb[0].mxu0 %v118
    %v793 = vpop.f32.mrb[0].mxu0
    %v794 = vadd.f32 0.0, %v793
    %v795 = vpop.f32.mrb[0].mxu0
    %796 = vmatprep.mubr.f32.mxu0 0.0
    %797 = vmatmul.mubr.f32.gmra.mrb[0].mxu0 %v119
    %v798 = vpop.f32.mrb[0].mxu0
    %v799 = vadd.f32 0.0, %v798
    %v800 = vpop.f32.mrb[0].mxu0
    %801 = vmatprep.mubr.f32.mxu0 0.0
    %802 = vmatmul.mubr.f32.gmra.mrb[0].mxu0 %v120
    %v803 = vpop.f32.mrb[0].mxu0
    %v804 = vadd.f32 0.0, %v803
    %v805 = vpop.f32.mrb[0].mxu0
    %806 = vmatprep.mubr.f32.mxu0 0.0
    %807 = vmatmul.mubr.f32.gmra.mrb[0].mxu0 %v121
    %v808 = vpop.f32.mrb[0].mxu0
    %v809 = vadd.f32 0.0, %v808
    %v810 = vpop.f32.mrb[0].mxu0
    %811 = vdwg.mxu0
    %812 = vmatprep.subr.mxu0 0.0
    %813 = vmatpush1.msra.mxu0 %v157
    %814 = vmatprep.subr.mxu0 0.0
    %815 = vmatpush1.msra.mxu0 %v158
    %816 = vmatprep.subr.mxu0 0.0
    %817 = vmatpush1.msra.mxu0 %v159
    %818 = vmatprep.subr.mxu0 0.0
    %819 = vmatpush1.msra.mxu0 %v160
    %820 = vmatprep.subr.mxu0 0.0
    %821 = vmatpush1.msra.mxu0 %v161
    %822 = vmatprep.subr.mxu0 0.0
    %823 = vmatpush1.msra.mxu0 %v162
    %824 = vmatprep.subr.mxu0 0.0
    %825 = vmatpush1.msra.mxu0 %v163
    %826 = vmatprep.subr.mxu0 0.0
    %827 = vmatpush1.msra.mxu0 %v164
    %828 = vmatprep.subr.mxu0 0.0
    %829 = vmatpush1.msra.mxu0 %v165
    %830 = vmatprep.subr.mxu0 0.0
    %831 = vmatpush1.msra.mxu0 %v166
    %832 = vmatprep.subr.mxu0 0.0
    %833 = vmatpush1.msra.mxu0 %v167
    %834 = vmatprep.subr.mxu0 0.0
    %835 = vmatpush1.msra.mxu0 %v168
    %836 = vmatprep.subr.mxu0 0.0
    %837 = vmatpush1.msra.mxu0 %v169
    %838 = vmatprep.subr.mxu0 0.0
    %839 = vmatpush1.msra.mxu0 %v170
    %840 = vmatprep.subr.mxu0 0.0
    %841 = vmatpush1.msra.mxu0 %v171
    %842 = vmatprep.subr.mxu0 0.0
    %843 = vmatpush1.msra.mxu0 %v172
    %844 = vmatprep.subr.mxu0 0.0
    %845 = vmatpush1.msra.mxu0 0.0
    %846 = vmatprep.subr.mxu0 0.0
    %847 = vmatpush1.msra.mxu0 0.0
    %848 = vmatprep.subr.mxu0 0.0
    %849 = vmatpush1.msra.mxu0 0.0
    %850 = vmatprep.subr.mxu0 0.0
    %851 = vmatpush1.msra.mxu0 0.0
    %852 = vmatprep.subr.mxu0 0.0
    %853 = vmatpush1.msra.mxu0 0.0
    %854 = vmatprep.subr.mxu0 0.0
    %855 = vmatpush1.msra.mxu0 0.0
    %856 = vmatprep.subr.mxu0 0.0
    %857 = vmatpush1.msra.mxu0 0.0
    %858 = vmatprep.subr.mxu0 0.0
    %859 = vmatpush1.msra.mxu0 0.0
    %860 = vmatprep.subr.mxu0 0.0
    %861 = vmatpush1.msra.mxu0 0.0
    %862 = vmatprep.subr.mxu0 0.0
    %863 = vmatpush1.msra.mxu0 0.0
    %864 = vmatprep.subr.mxu0 0.0
    %865 = vmatpush1.msra.mxu0 0.0
    %866 = vmatprep.subr.mxu0 0.0
    %867 = vmatpush1.msra.mxu0 0.0
    %868 = vmatprep.subr.mxu0 0.0
    %869 = vmatpush1.msra.mxu0 0.0
    %870 = vmatprep.subr.mxu0 0.0
    %871 = vmatpush1.msra.mxu0 0.0
    %872 = vmatprep.subr.mxu0 0.0
    %873 = vmatpush1.msra.mxu0 0.0
    %874 = vmatprep.subr.mxu0 0.0
    %875 = vmatpush1.msra.mxu0 0.0
    %876 = vmatprep.mubr.f32.mxu0 0.0
    %877 = vmatmul.mubr.f32.gmra.mrb[0].mxu0 %v140
    %v878 = vpop.f32.mrb[0].mxu0
    %v879 = vadd.f32 0.0, %v878
    %v880 = vpop.f32.mrb[0].mxu0
    %881 = vmatprep.mubr.f32.mxu0 0.0
    %882 = vmatmul.mubr.f32.gmra.mrb[0].mxu0 %v141
    %v883 = vpop.f32.mrb[0].mxu0
    %v884 = vadd.f32 0.0, %v883
    %v885 = vpop.f32.mrb[0].mxu0
    %886 = vmatprep.mubr.f32.mxu0 0.0
    %887 = vmatmul.mubr.f32.gmra.mrb[0].mxu0 %v142
    %v888 = vpop.f32.mrb[0].mxu0
    %v889 = vadd.f32 0.0, %v888
    %v890 = vpop.f32.mrb[0].mxu0
    %891 = vmatprep.mubr.f32.mxu0 0.0
    %892 = vmatmul.mubr.f32.gmra.mrb[0].mxu0 %v143
    %v893 = vpop.f32.mrb[0].mxu0
    %v894 = vadd.f32 0.0, %v893
    %v895 = vpop.f32.mrb[0].mxu0
    %896 = vmatprep.mubr.f32.mxu0 0.0
    %897 = vmatmul.mubr.f32.gmra.mrb[0].mxu0 %v144
    %v898 = vpop.f32.mrb[0].mxu0
    %v899 = vadd.f32 0.0, %v898
    %v900 = vpop.f32.mrb[0].mxu0
    %901 = vmatprep.mubr.f32.mxu0 0.0
    %902 = vmatmul.mubr.f32.gmra.mrb[0].mxu0 %v145
    %v903 = vpop.f32.mrb[0].mxu0
    %v904 = vadd.f32 0.0, %v903
    %v905 = vpop.f32.mrb[0].mxu0
    %906 = vmatprep.mubr.f32.mxu0 0.0
    %907 = vmatmul.mubr.f32.gmra.mrb[0].mxu0 %v146
    %v908 = vpop.f32.mrb[0].mxu0
    %v909 = vadd.f32 0.0, %v908
    %v910 = vpop.f32.mrb[0].mxu0
    %911 = vmatprep.mubr.f32.mxu0 0.0
    %912 = vmatmul.mubr.f32.gmra.mrb[0].mxu0 %v147
    %v913 = vpop.f32.mrb[0].mxu0
    %v914 = vadd.f32 0.0, %v913
    %v915 = vpop.f32.mrb[0].mxu0
    %916 = vmatprep.mubr.f32.mxu0 0.0
    %917 = vmatmul.mubr.f32.gmra.mrb[0].mxu0 %v148
    %v918 = vpop.f32.mrb[0].mxu0
    %v919 = vadd.f32 0.0, %v918
    %v920 = vpop.f32.mrb[0].mxu0
    %921 = vmatprep.mubr.f32.mxu0 0.0
    %922 = vmatmul.mubr.f32.gmra.mrb[0].mxu0 %v149
    %v923 = vpop.f32.mrb[0].mxu0
    %v924 = vadd.f32 0.0, %v923
    %v925 = vpop.f32.mrb[0].mxu0
    %926 = vmatprep.mubr.f32.mxu0 0.0
    %927 = vmatmul.mubr.f32.gmra.mrb[0].mxu0 %v150
    %v928 = vpop.f32.mrb[0].mxu0
    %v929 = vadd.f32 0.0, %v928
    %v930 = vpop.f32.mrb[0].mxu0
    %931 = vmatprep.mubr.f32.mxu0 0.0
    %932 = vmatmul.mubr.f32.gmra.mrb[0].mxu0 %v151
    %v933 = vpop.f32.mrb[0].mxu0
    %v934 = vadd.f32 0.0, %v933
    %v935 = vpop.f32.mrb[0].mxu0
    %936 = vmatprep.mubr.f32.mxu0 0.0
    %937 = vmatmul.mubr.f32.gmra.mrb[0].mxu0 %v152
    %v938 = vpop.f32.mrb[0].mxu0
    %v939 = vadd.f32 0.0, %v938
    %v940 = vpop.f32.mrb[0].mxu0
    %941 = vmatprep.mubr.f32.mxu0 0.0
    %942 = vmatmul.mubr.f32.gmra.mrb[0].mxu0 %v153
    %v943 = vpop.f32.mrb[0].mxu0
    %v944 = vadd.f32 0.0, %v943
    %v945 = vpop.f32.mrb[0].mxu0
    %946 = vmatprep.mubr.f32.mxu0 0.0
    %947 = vmatmul.mubr.f32.gmra.mrb[0].mxu0 %v154
    %v948 = vpop.f32.mrb[0].mxu0
    %v949 = vadd.f32 0.0, %v948
    %v950 = vpop.f32.mrb[0].mxu0
    %951 = vmatprep.mubr.f32.mxu0 0.0
    %952 = vmatmul.mubr.f32.gmra.mrb[0].mxu0 %v155
    %v953 = vpop.f32.mrb[0].mxu0
    %v954 = vadd.f32 0.0, %v953
    %v955 = vpop.f32.mrb[0].mxu0
    %956 = vdwg.mxu0
    %957 = vmatprep.subr.mxu0 0.0
    %958 = vmatpush1.msra.mxu0 %v191
    %959 = vmatprep.subr.mxu0 0.0
    %960 = vmatpush1.msra.mxu0 %v192
    %961 = vmatprep.subr.mxu0 0.0
    %962 = vmatpush1.msra.mxu0 %v193
    %963 = vmatprep.subr.mxu0 0.0
    %964 = vmatpush1.msra.mxu0 %v194
    %965 = vmatprep.subr.mxu0 0.0
    %966 = vmatpush1.msra.mxu0 %v195
    %967 = vmatprep.subr.mxu0 0.0
    %968 = vmatpush1.msra.mxu0 %v196
    %969 = vmatprep.subr.mxu0 0.0
    %970 = vmatpush1.msra.mxu0 %v197
    %971 = vmatprep.subr.mxu0 0.0
    %972 = vmatpush1.msra.mxu0 %v198
    %973 = vmatprep.subr.mxu0 0.0
    %974 = vmatpush1.msra.mxu0 %v199
    %975 = vmatprep.subr.mxu0 0.0
    %976 = vmatpush1.msra.mxu0 %v200
    %977 = vmatprep.subr.mxu0 0.0
    %978 = vmatpush1.msra.mxu0 %v201
    %979 = vmatprep.subr.mxu0 0.0
    %980 = vmatpush1.msra.mxu0 %v202
    %981 = vmatprep.subr.mxu0 0.0
    %982 = vmatpush1.msra.mxu0 %v203
    %983 = vmatprep.subr.mxu0 0.0
    %984 = vmatpush1.msra.mxu0 %v204
    %985 = vmatprep.subr.mxu0 0.0
    %986 = vmatpush1.msra.mxu0 %v205
    %987 = vmatprep.subr.mxu0 0.0
    %988 = vmatpush1.msra.mxu0 %v206
    %989 = vmatprep.subr.mxu0 0.0
    %990 = vmatpush1.msra.mxu0 0.0
    %991 = vmatprep.subr.mxu0 0.0
    %992 = vmatpush1.msra.mxu0 0.0
    %993 = vmatprep.subr.mxu0 0.0
    %994 = vmatpush1.msra.mxu0 0.0
    %995 = vmatprep.subr.mxu0 0.0
    %996 = vmatpush1.msra.mxu0 0.0
    %997 = vmatprep.subr.mxu0 0.0
    %998 = vmatpush1.msra.mxu0 0.0
    %999 = vmatprep.subr.mxu0 0.0
    %1000 = vmatpush1.msra.mxu0 0.0
    %1001 = vmatprep.subr.mxu0 0.0
    %1002 = vmatpush1.msra.mxu0 0.0
    %1003 = vmatprep.subr.mxu0 0.0
    %1004 = vmatpush1.msra.mxu0 0.0
    %1005 = vmatprep.subr.mxu0 0.0
    %1006 = vmatpush1.msra.mxu0 0.0
    %1007 = vmatprep.subr.mxu0 0.0
    %1008 = vmatpush1.msra.mxu0 0.0
    %1009 = vmatprep.subr.mxu0 0.0
    %1010 = vmatpush1.msra.mxu0 0.0
    %1011 = vmatprep.subr.mxu0 0.0
    %1012 = vmatpush1.msra.mxu0 0.0
    %1013 = vmatprep.subr.mxu0 0.0
    %1014 = vmatpush1.msra.mxu0 0.0
    %1015 = vmatprep.subr.mxu0 0.0
    %1016 = vmatpush1.msra.mxu0 0.0
    %1017 = vmatprep.subr.mxu0 0.0
    %1018 = vmatpush1.msra.mxu0 0.0
    %1019 = vmatprep.subr.mxu0 0.0
    %1020 = vmatpush1.msra.mxu0 0.0
    %1021 = vmatprep.mubr.f32.mxu0 0.0
    %1022 = vmatmul.mubr.f32.gmra.mrb[0].mxu0 %v174
    %v1023 = vpop.f32.mrb[0].mxu0
    %v1024 = vadd.f32 0.0, %v1023
    %v1025 = vpop.f32.mrb[0].mxu0
    %1026 = vmatprep.mubr.f32.mxu0 0.0
    %1027 = vmatmul.mubr.f32.gmra.mrb[0].mxu0 %v175
    %v1028 = vpop.f32.mrb[0].mxu0
    %v1029 = vadd.f32 0.0, %v1028
    %v1030 = vpop.f32.mrb[0].mxu0
    %1031 = vmatprep.mubr.f32.mxu0 0.0
    %1032 = vmatmul.mubr.f32.gmra.mrb[0].mxu0 %v176
    %v1033 = vpop.f32.mrb[0].mxu0
    %v1034 = vadd.f32 0.0, %v1033
    %v1035 = vpop.f32.mrb[0].mxu0
    %1036 = vmatprep.mubr.f32.mxu0 0.0
    %1037 = vmatmul.mubr.f32.gmra.mrb[0].mxu0 %v177
    %v1038 = vpop.f32.mrb[0].mxu0
    %v1039 = vadd.f32 0.0, %v1038
    %v1040 = vpop.f32.mrb[0].mxu0
    %1041 = vmatprep.mubr.f32.mxu0 0.0
    %1042 = vmatmul.mubr.f32.gmra.mrb[0].mxu0 %v178
    %v1043 = vpop.f32.mrb[0].mxu0
    %v1044 = vadd.f32 0.0, %v1043
    %v1045 = vpop.f32.mrb[0].mxu0
    %1046 = vmatprep.mubr.f32.mxu0 0.0
    %1047 = vmatmul.mubr.f32.gmra.mrb[0].mxu0 %v179
    %v1048 = vpop.f32.mrb[0].mxu0
    %v1049 = vadd.f32 0.0, %v1048
    %v1050 = vpop.f32.mrb[0].mxu0
    %1051 = vmatprep.mubr.f32.mxu0 0.0
    %1052 = vmatmul.mubr.f32.gmra.mrb[0].mxu0 %v180
    %v1053 = vpop.f32.mrb[0].mxu0
    %v1054 = vadd.f32 0.0, %v1053
    %v1055 = vpop.f32.mrb[0].mxu0
    %1056 = vmatprep.mubr.f32.mxu0 0.0
    %1057 = vmatmul.mubr.f32.gmra.mrb[0].mxu0 %v181
    %v1058 = vpop.f32.mrb[0].mxu0
    %v1059 = vadd.f32 0.0, %v1058
    %v1060 = vpop.f32.mrb[0].mxu0
    %1061 = vmatprep.mubr.f32.mxu0 0.0
    %1062 = vmatmul.mubr.f32.gmra.mrb[0].mxu0 %v182
    %v1063 = vpop.f32.mrb[0].mxu0
    %v1064 = vadd.f32 0.0, %v1063
    %v1065 = vpop.f32.mrb[0].mxu0
    %1066 = vmatprep.mubr.f32.mxu0 0.0
    %1067 = vmatmul.mubr.f32.gmra.mrb[0].mxu0 %v183
    %v1068 = vpop.f32.mrb[0].mxu0
    %v1069 = vadd.f32 0.0, %v1068
    %v1070 = vpop.f32.mrb[0].mxu0
    %1071 = vmatprep.mubr.f32.mxu0 0.0
    %1072 = vmatmul.mubr.f32.gmra.mrb[0].mxu0 %v184
    %v1073 = vpop.f32.mrb[0].mxu0
    %v1074 = vadd.f32 0.0, %v1073
    %v1075 = vpop.f32.mrb[0].mxu0
    %1076 = vmatprep.mubr.f32.mxu0 0.0
    %1077 = vmatmul.mubr.f32.gmra.mrb[0].mxu0 %v185
    %v1078 = vpop.f32.mrb[0].mxu0
    %v1079 = vadd.f32 0.0, %v1078
    %v1080 = vpop.f32.mrb[0].mxu0
    %1081 = vmatprep.mubr.f32.mxu0 0.0
    %1082 = vmatmul.mubr.f32.gmra.mrb[0].mxu0 %v186
    %v1083 = vpop.f32.mrb[0].mxu0
    %v1084 = vadd.f32 0.0, %v1083
    %v1085 = vpop.f32.mrb[0].mxu0
    %1086 = vmatprep.mubr.f32.mxu0 0.0
    %1087 = vmatmul.mubr.f32.gmra.mrb[0].mxu0 %v187
    %v1088 = vpop.f32.mrb[0].mxu0
    %v1089 = vadd.f32 0.0, %v1088
    %v1090 = vpop.f32.mrb[0].mxu0
    %1091 = vmatprep.mubr.f32.mxu0 0.0
    %1092 = vmatmul.mubr.f32.gmra.mrb[0].mxu0 %v188
    %v1093 = vpop.f32.mrb[0].mxu0
    %v1094 = vadd.f32 0.0, %v1093
    %v1095 = vpop.f32.mrb[0].mxu0
    %1096 = vmatprep.mubr.f32.mxu0 0.0
    %1097 = vmatmul.mubr.f32.gmra.mrb[0].mxu0 %v189
    %v1098 = vpop.f32.mrb[0].mxu0
    %v1099 = vadd.f32 0.0, %v1098
    %v1100 = vpop.f32.mrb[0].mxu0
    %1101 = vdwg.mxu0
    %1102 = vmatprep.subr.mxu0 0.0
    %1103 = vmatpush1.msra.mxu0 %v225
    %1104 = vmatprep.subr.mxu0 0.0
    %1105 = vmatpush1.msra.mxu0 %v226
    %1106 = vmatprep.subr.mxu0 0.0
    %1107 = vmatpush1.msra.mxu0 %v227
    %1108 = vmatprep.subr.mxu0 0.0
    %1109 = vmatpush1.msra.mxu0 %v228
    %1110 = vmatprep.subr.mxu0 0.0
    %1111 = vmatpush1.msra.mxu0 %v229
    %1112 = vmatprep.subr.mxu0 0.0
    %1113 = vmatpush1.msra.mxu0 %v230
    %1114 = vmatprep.subr.mxu0 0.0
    %1115 = vmatpush1.msra.mxu0 %v231
    %1116 = vmatprep.subr.mxu0 0.0
    %1117 = vmatpush1.msra.mxu0 %v232
    %1118 = vmatprep.subr.mxu0 0.0
    %1119 = vmatpush1.msra.mxu0 %v233
    %1120 = vmatprep.subr.mxu0 0.0
    %1121 = vmatpush1.msra.mxu0 %v234
    %1122 = vmatprep.subr.mxu0 0.0
    %1123 = vmatpush1.msra.mxu0 %v235
    %1124 = vmatprep.subr.mxu0 0.0
    %1125 = vmatpush1.msra.mxu0 %v236
    %1126 = vmatprep.subr.mxu0 0.0
    %1127 = vmatpush1.msra.mxu0 %v237
    %1128 = vmatprep.subr.mxu0 0.0
    %1129 = vmatpush1.msra.mxu0 %v238
    %1130 = vmatprep.subr.mxu0 0.0
    %1131 = vmatpush1.msra.mxu0 %v239
    %1132 = vmatprep.subr.mxu0 0.0
    %1133 = vmatpush1.msra.mxu0 %v240
    %1134 = vmatprep.subr.mxu0 0.0
    %1135 = vmatpush1.msra.mxu0 0.0
    %1136 = vmatprep.subr.mxu0 0.0
    %1137 = vmatpush1.msra.mxu0 0.0
    %1138 = vmatprep.subr.mxu0 0.0
    %1139 = vmatpush1.msra.mxu0 0.0
    %1140 = vmatprep.subr.mxu0 0.0
    %1141 = vmatpush1.msra.mxu0 0.0
    %1142 = vmatprep.subr.mxu0 0.0
    %1143 = vmatpush1.msra.mxu0 0.0
    %1144 = vmatprep.subr.mxu0 0.0
    %1145 = vmatpush1.msra.mxu0 0.0
    %1146 = vmatprep.subr.mxu0 0.0
    %1147 = vmatpush1.msra.mxu0 0.0
    %1148 = vmatprep.subr.mxu0 0.0
    %1149 = vmatpush1.msra.mxu0 0.0
    %1150 = vmatprep.subr.mxu0 0.0
    %1151 = vmatpush1.msra.mxu0 0.0
    %1152 = vmatprep.subr.mxu0 0.0
    %1153 = vmatpush1.msra.mxu0 0.0
    %1154 = vmatprep.subr.mxu0 0.0
    %1155 = vmatpush1.msra.mxu0 0.0
    %1156 = vmatprep.subr.mxu0 0.0
    %1157 = vmatpush1.msra.mxu0 0.0
    %1158 = vmatprep.subr.mxu0 0.0
    %1159 = vmatpush1.msra.mxu0 0.0
    %1160 = vmatprep.subr.mxu0 0.0
    %1161 = vmatpush1.msra.mxu0 0.0
    %1162 = vmatprep.subr.mxu0 0.0
    %1163 = vmatpush1.msra.mxu0 0.0
    %1164 = vmatprep.subr.mxu0 0.0
    %1165 = vmatpush1.msra.mxu0 0.0
    %1166 = vmatprep.mubr.f32.mxu0 0.0
    %1167 = vmatmul.mubr.f32.gmra.mrb[0].mxu0 %v208
    %v1168 = vpop.f32.mrb[0].mxu0
    %v1169 = vadd.f32 0.0, %v1168
    %v1170 = vpop.f32.mrb[0].mxu0
    %1171 = vmatprep.mubr.f32.mxu0 0.0
    %1172 = vmatmul.mubr.f32.gmra.mrb[0].mxu0 %v209
    %v1173 = vpop.f32.mrb[0].mxu0
    %v1174 = vadd.f32 0.0, %v1173
    %v1175 = vpop.f32.mrb[0].mxu0
    %1176 = vmatprep.mubr.f32.mxu0 0.0
    %1177 = vmatmul.mubr.f32.gmra.mrb[0].mxu0 %v210
    %v1178 = vpop.f32.mrb[0].mxu0
    %v1179 = vadd.f32 0.0, %v1178
    %v1180 = vpop.f32.mrb[0].mxu0
    %1181 = vmatprep.mubr.f32.mxu0 0.0
    %1182 = vmatmul.mubr.f32.gmra.mrb[0].mxu0 %v211
    %v1183 = vpop.f32.mrb[0].mxu0
    %v1184 = vadd.f32 0.0, %v1183
    %v1185 = vpop.f32.mrb[0].mxu0
    %1186 = vmatprep.mubr.f32.mxu0 0.0
    %1187 = vmatmul.mubr.f32.gmra.mrb[0].mxu0 %v212
    %v1188 = vpop.f32.mrb[0].mxu0
    %v1189 = vadd.f32 0.0, %v1188
    %v1190 = vpop.f32.mrb[0].mxu0
    %1191 = vmatprep.mubr.f32.mxu0 0.0
    %1192 = vmatmul.mubr.f32.gmra.mrb[0].mxu0 %v213
    %v1193 = vpop.f32.mrb[0].mxu0
    %v1194 = vadd.f32 0.0, %v1193
    %v1195 = vpop.f32.mrb[0].mxu0
    %1196 = vmatprep.mubr.f32.mxu0 0.0
    %1197 = vmatmul.mubr.f32.gmra.mrb[0].mxu0 %v214
    %v1198 = vpop.f32.mrb[0].mxu0
    %v1199 = vadd.f32 0.0, %v1198
    %v1200 = vpop.f32.mrb[0].mxu0
    %1201 = vmatprep.mubr.f32.mxu0 0.0
    %1202 = vmatmul.mubr.f32.gmra.mrb[0].mxu0 %v215
    %v1203 = vpop.f32.mrb[0].mxu0
    %v1204 = vadd.f32 0.0, %v1203
    %v1205 = vpop.f32.mrb[0].mxu0
    %1206 = vmatprep.mubr.f32.mxu0 0.0
    %1207 = vmatmul.mubr.f32.gmra.mrb[0].mxu0 %v216
    %v1208 = vpop.f32.mrb[0].mxu0
    %v1209 = vadd.f32 0.0, %v1208
    %v1210 = vpop.f32.mrb[0].mxu0
    %1211 = vmatprep.mubr.f32.mxu0 0.0
    %1212 = vmatmul.mubr.f32.gmra.mrb[0].mxu0 %v217
    %v1213 = vpop.f32.mrb[0].mxu0
    %v1214 = vadd.f32 0.0, %v1213
    %v1215 = vpop.f32.mrb[0].mxu0
    %1216 = vmatprep.mubr.f32.mxu0 0.0
    %1217 = vmatmul.mubr.f32.gmra.mrb[0].mxu0 %v218
    %v1218 = vpop.f32.mrb[0].mxu0
    %v1219 = vadd.f32 0.0, %v1218
    %v1220 = vpop.f32.mrb[0].mxu0
    %1221 = vmatprep.mubr.f32.mxu0 0.0
    %1222 = vmatmul.mubr.f32.gmra.mrb[0].mxu0 %v219
    %v1223 = vpop.f32.mrb[0].mxu0
    %v1224 = vadd.f32 0.0, %v1223
    %v1225 = vpop.f32.mrb[0].mxu0
    %1226 = vmatprep.mubr.f32.mxu0 0.0
    %1227 = vmatmul.mubr.f32.gmra.mrb[0].mxu0 %v220
    %v1228 = vpop.f32.mrb[0].mxu0
    %v1229 = vadd.f32 0.0, %v1228
    %v1230 = vpop.f32.mrb[0].mxu0
    %1231 = vmatprep.mubr.f32.mxu0 0.0
    %1232 = vmatmul.mubr.f32.gmra.mrb[0].mxu0 %v221
    %v1233 = vpop.f32.mrb[0].mxu0
    %v1234 = vadd.f32 0.0, %v1233
    %v1235 = vpop.f32.mrb[0].mxu0
    %1236 = vmatprep.mubr.f32.mxu0 0.0
    %1237 = vmatmul.mubr.f32.gmra.mrb[0].mxu0 %v222
    %v1238 = vpop.f32.mrb[0].mxu0
    %v1239 = vadd.f32 0.0, %v1238
    %v1240 = vpop.f32.mrb[0].mxu0
    %1241 = vmatprep.mubr.f32.mxu0 0.0
    %1242 = vmatmul.mubr.f32.gmra.mrb[0].mxu0 %v223
    %v1243 = vpop.f32.mrb[0].mxu0
    %v1244 = vadd.f32 0.0, %v1243
    %v1245 = vpop.f32.mrb[0].mxu0
    %1246 = vdwg.mxu0
    %1247 = vmatprep.subr.mxu0 0.0
    %1248 = vmatpush1.msra.mxu0 %v259
    %1249 = vmatprep.subr.mxu0 0.0
    %1250 = vmatpush1.msra.mxu0 %v260
    %1251 = vmatprep.subr.mxu0 0.0
    %1252 = vmatpush1.msra.mxu0 %v261
    %1253 = vmatprep.subr.mxu0 0.0
    %1254 = vmatpush1.msra.mxu0 %v262
    %1255 = vmatprep.subr.mxu0 0.0
    %1256 = vmatpush1.msra.mxu0 %v263
    %1257 = vmatprep.subr.mxu0 0.0
    %1258 = vmatpush1.msra.mxu0 %v264
    %1259 = vmatprep.subr.mxu0 0.0
    %1260 = vmatpush1.msra.mxu0 %v265
    %1261 = vmatprep.subr.mxu0 0.0
    %1262 = vmatpush1.msra.mxu0 %v266
    %1263 = vmatprep.subr.mxu0 0.0
    %1264 = vmatpush1.msra.mxu0 %v267
    %1265 = vmatprep.subr.mxu0 0.0
    %1266 = vmatpush1.msra.mxu0 %v268
    %1267 = vmatprep.subr.mxu0 0.0
    %1268 = vmatpush1.msra.mxu0 %v269
    %1269 = vmatprep.subr.mxu0 0.0
    %1270 = vmatpush1.msra.mxu0 %v270
    %1271 = vmatprep.subr.mxu0 0.0
    %1272 = vmatpush1.msra.mxu0 %v271
    %1273 = vmatprep.subr.mxu0 0.0
    %1274 = vmatpush1.msra.mxu0 %v272
    %1275 = vmatprep.subr.mxu0 0.0
    %1276 = vmatpush1.msra.mxu0 %v273
    %1277 = vmatprep.subr.mxu0 0.0
    %1278 = vmatpush1.msra.mxu0 %v274
    %1279 = vmatprep.subr.mxu0 0.0
    %1280 = vmatpush1.msra.mxu0 0.0
    %1281 = vmatprep.subr.mxu0 0.0
    %1282 = vmatpush1.msra.mxu0 0.0
    %1283 = vmatprep.subr.mxu0 0.0
    %1284 = vmatpush1.msra.mxu0 0.0
    %1285 = vmatprep.subr.mxu0 0.0
    %1286 = vmatpush1.msra.mxu0 0.0
    %1287 = vmatprep.subr.mxu0 0.0
    %1288 = vmatpush1.msra.mxu0 0.0
    %1289 = vmatprep.subr.mxu0 0.0
    %1290 = vmatpush1.msra.mxu0 0.0
    %1291 = vmatprep.subr.mxu0 0.0
    %1292 = vmatpush1.msra.mxu0 0.0
    %1293 = vmatprep.subr.mxu0 0.0
    %1294 = vmatpush1.msra.mxu0 0.0
    %1295 = vmatprep.subr.mxu0 0.0
    %1296 = vmatpush1.msra.mxu0 0.0
    %1297 = vmatprep.subr.mxu0 0.0
    %1298 = vmatpush1.msra.mxu0 0.0
    %1299 = vmatprep.subr.mxu0 0.0
    %1300 = vmatpush1.msra.mxu0 0.0
    %1301 = vmatprep.subr.mxu0 0.0
    %1302 = vmatpush1.msra.mxu0 0.0
    %1303 = vmatprep.subr.mxu0 0.0
    %1304 = vmatpush1.msra.mxu0 0.0
    %1305 = vmatprep.subr.mxu0 0.0
    %1306 = vmatpush1.msra.mxu0 0.0
    %1307 = vmatprep.subr.mxu0 0.0
    %1308 = vmatpush1.msra.mxu0 0.0
    %1309 = vmatprep.subr.mxu0 0.0
    %1310 = vmatpush1.msra.mxu0 0.0
    %1311 = vmatprep.mubr.f32.mxu0 0.0
    %1312 = vmatmul.mubr.f32.gmra.mrb[0].mxu0 %v242
    %v1313 = vpop.f32.mrb[0].mxu0
    %v1314 = vadd.f32 0.0, %v1313
    %v1315 = vpop.f32.mrb[0].mxu0
    %1316 = vmatprep.mubr.f32.mxu0 0.0
    %1317 = vmatmul.mubr.f32.gmra.mrb[0].mxu0 %v243
    %v1318 = vpop.f32.mrb[0].mxu0
    %v1319 = vadd.f32 0.0, %v1318
    %v1320 = vpop.f32.mrb[0].mxu0
    %1321 = vmatprep.mubr.f32.mxu0 0.0
    %1322 = vmatmul.mubr.f32.gmra.mrb[0].mxu0 %v244
    %v1323 = vpop.f32.mrb[0].mxu0
    %v1324 = vadd.f32 0.0, %v1323
    %v1325 = vpop.f32.mrb[0].mxu0
    %1326 = vmatprep.mubr.f32.mxu0 0.0
    %1327 = vmatmul.mubr.f32.gmra.mrb[0].mxu0 %v245
    %v1328 = vpop.f32.mrb[0].mxu0
    %v1329 = vadd.f32 0.0, %v1328
    %v1330 = vpop.f32.mrb[0].mxu0
    %1331 = vmatprep.mubr.f32.mxu0 0.0
    %1332 = vmatmul.mubr.f32.gmra.mrb[0].mxu0 %v246
    %v1333 = vpop.f32.mrb[0].mxu0
    %v1334 = vadd.f32 0.0, %v1333
    %v1335 = vpop.f32.mrb[0].mxu0
    %1336 = vmatprep.mubr.f32.mxu0 0.0
    %1337 = vmatmul.mubr.f32.gmra.mrb[0].mxu0 %v247
    %v1338 = vpop.f32.mrb[0].mxu0
    %v1339 = vadd.f32 0.0, %v1338
    %v1340 = vpop.f32.mrb[0].mxu0
    %1341 = vmatprep.mubr.f32.mxu0 0.0
    %1342 = vmatmul.mubr.f32.gmra.mrb[0].mxu0 %v248
    %v1343 = vpop.f32.mrb[0].mxu0
    %v1344 = vadd.f32 0.0, %v1343
    %v1345 = vpop.f32.mrb[0].mxu0
    %1346 = vmatprep.mubr.f32.mxu0 0.0
    %1347 = vmatmul.mubr.f32.gmra.mrb[0].mxu0 %v249
    %v1348 = vpop.f32.mrb[0].mxu0
    %v1349 = vadd.f32 0.0, %v1348
    %v1350 = vpop.f32.mrb[0].mxu0
    %1351 = vmatprep.mubr.f32.mxu0 0.0
    %1352 = vmatmul.mubr.f32.gmra.mrb[0].mxu0 %v250
    %v1353 = vpop.f32.mrb[0].mxu0
    %v1354 = vadd.f32 0.0, %v1353
    %v1355 = vpop.f32.mrb[0].mxu0
    %1356 = vmatprep.mubr.f32.mxu0 0.0
    %1357 = vmatmul.mubr.f32.gmra.mrb[0].mxu0 %v251
    %v1358 = vpop.f32.mrb[0].mxu0
    %v1359 = vadd.f32 0.0, %v1358
    %v1360 = vpop.f32.mrb[0].mxu0
    %1361 = vmatprep.mubr.f32.mxu0 0.0
    %1362 = vmatmul.mubr.f32.gmra.mrb[0].mxu0 %v252
    %v1363 = vpop.f32.mrb[0].mxu0
    %v1364 = vadd.f32 0.0, %v1363
    %v1365 = vpop.f32.mrb[0].mxu0
    %1366 = vmatprep.mubr.f32.mxu0 0.0
    %1367 = vmatmul.mubr.f32.gmra.mrb[0].mxu0 %v253
    %v1368 = vpop.f32.mrb[0].mxu0
    %v1369 = vadd.f32 0.0, %v1368
    %v1370 = vpop.f32.mrb[0].mxu0
    %1371 = vmatprep.mubr.f32.mxu0 0.0
    %1372 = vmatmul.mubr.f32.gmra.mrb[0].mxu0 %v254
    %v1373 = vpop.f32.mrb[0].mxu0
    %v1374 = vadd.f32 0.0, %v1373
    %v1375 = vpop.f32.mrb[0].mxu0
    %1376 = vmatprep.mubr.f32.mxu0 0.0
    %1377 = vmatmul.mubr.f32.gmra.mrb[0].mxu0 %v255
    %v1378 = vpop.f32.mrb[0].mxu0
    %v1379 = vadd.f32 0.0, %v1378
    %v1380 = vpop.f32.mrb[0].mxu0
    %1381 = vmatprep.mubr.f32.mxu0 0.0
    %1382 = vmatmul.mubr.f32.gmra.mrb[0].mxu0 %v256
    %v1383 = vpop.f32.mrb[0].mxu0
    %v1384 = vadd.f32 0.0, %v1383
    %v1385 = vpop.f32.mrb[0].mxu0
    %1386 = vmatprep.mubr.f32.mxu0 0.0
    %1387 = vmatmul.mubr.f32.gmra.mrb[0].mxu0 %v257
    %v1388 = vpop.f32.mrb[0].mxu0
    %v1389 = vadd.f32 0.0, %v1388
    %v1390 = vpop.f32.mrb[0].mxu0
    %1391 = vdwg.mxu0
    %1392 = vmatprep.subr.mxu0 0.0
    %1393 = vmatpush1.msra.mxu0 %v293
    %1394 = vmatprep.subr.mxu0 0.0
    %1395 = vmatpush1.msra.mxu0 %v294
    %1396 = vmatprep.subr.mxu0 0.0
    %1397 = vmatpush1.msra.mxu0 %v295
    %1398 = vmatprep.subr.mxu0 0.0
    %1399 = vmatpush1.msra.mxu0 %v296
    %1400 = vmatprep.subr.mxu0 0.0
    %1401 = vmatpush1.msra.mxu0 %v297
    %1402 = vmatprep.subr.mxu0 0.0
    %1403 = vmatpush1.msra.mxu0 %v298
    %1404 = vmatprep.subr.mxu0 0.0
    %1405 = vmatpush1.msra.mxu0 %v299
    %1406 = vmatprep.subr.mxu0 0.0
    %1407 = vmatpush1.msra.mxu0 %v300
    %1408 = vmatprep.subr.mxu0 0.0
    %1409 = vmatpush1.msra.mxu0 %v301
    %1410 = vmatprep.subr.mxu0 0.0
    %1411 = vmatpush1.msra.mxu0 %v302
    %1412 = vmatprep.subr.mxu0 0.0
    %1413 = vmatpush1.msra.mxu0 %v303
    %1414 = vmatprep.subr.mxu0 0.0
    %1415 = vmatpush1.msra.mxu0 %v304
    %1416 = vmatprep.subr.mxu0 0.0
    %1417 = vmatpush1.msra.mxu0 %v305
    %1418 = vmatprep.subr.mxu0 0.0
    %1419 = vmatpush1.msra.mxu0 %v306
    %1420 = vmatprep.subr.mxu0 0.0
    %1421 = vmatpush1.msra.mxu0 %v307
    %1422 = vmatprep.subr.mxu0 0.0
    %1423 = vmatpush1.msra.mxu0 %v308
    %1424 = vmatprep.subr.mxu0 0.0
    %1425 = vmatpush1.msra.mxu0 0.0
    %1426 = vmatprep.subr.mxu0 0.0
    %1427 = vmatpush1.msra.mxu0 0.0
    %1428 = vmatprep.subr.mxu0 0.0
    %1429 = vmatpush1.msra.mxu0 0.0
    %1430 = vmatprep.subr.mxu0 0.0
    %1431 = vmatpush1.msra.mxu0 0.0
    %1432 = vmatprep.subr.mxu0 0.0
    %1433 = vmatpush1.msra.mxu0 0.0
    %1434 = vmatprep.subr.mxu0 0.0
    %1435 = vmatpush1.msra.mxu0 0.0
    %1436 = vmatprep.subr.mxu0 0.0
    %1437 = vmatpush1.msra.mxu0 0.0
    %1438 = vmatprep.subr.mxu0 0.0
    %1439 = vmatpush1.msra.mxu0 0.0
    %1440 = vmatprep.subr.mxu0 0.0
    %1441 = vmatpush1.msra.mxu0 0.0
    %1442 = vmatprep.subr.mxu0 0.0
    %1443 = vmatpush1.msra.mxu0 0.0
    %1444 = vmatprep.subr.mxu0 0.0
    %1445 = vmatpush1.msra.mxu0 0.0
    %1446 = vmatprep.subr.mxu0 0.0
    %1447 = vmatpush1.msra.mxu0 0.0
    %1448 = vmatprep.subr.mxu0 0.0
    %1449 = vmatpush1.msra.mxu0 0.0
    %1450 = vmatprep.subr.mxu0 0.0
    %1451 = vmatpush1.msra.mxu0 0.0
    %1452 = vmatprep.subr.mxu0 0.0
    %1453 = vmatpush1.msra.mxu0 0.0
    %1454 = vmatprep.subr.mxu0 0.0
    %1455 = vmatpush1.msra.mxu0 0.0
    %1456 = vmatprep.mubr.f32.mxu0 0.0
    %1457 = vmatmul.mubr.f32.gmra.mrb[0].mxu0 %v276
    %v1458 = vpop.f32.mrb[0].mxu0
    %v1459 = vadd.f32 0.0, %v1458
    %v1460 = vpop.f32.mrb[0].mxu0
    %1461 = vmatprep.mubr.f32.mxu0 0.0
    %1462 = vmatmul.mubr.f32.gmra.mrb[0].mxu0 %v277
    %v1463 = vpop.f32.mrb[0].mxu0
    %v1464 = vadd.f32 0.0, %v1463
    %v1465 = vpop.f32.mrb[0].mxu0
    %1466 = vmatprep.mubr.f32.mxu0 0.0
    %1467 = vmatmul.mubr.f32.gmra.mrb[0].mxu0 %v278
    %v1468 = vpop.f32.mrb[0].mxu0
    %v1469 = vadd.f32 0.0, %v1468
    %v1470 = vpop.f32.mrb[0].mxu0
    %1471 = vmatprep.mubr.f32.mxu0 0.0
    %1472 = vmatmul.mubr.f32.gmra.mrb[0].mxu0 %v279
    %v1473 = vpop.f32.mrb[0].mxu0
    %v1474 = vadd.f32 0.0, %v1473
    %v1475 = vpop.f32.mrb[0].mxu0
    %1476 = vmatprep.mubr.f32.mxu0 0.0
    %1477 = vmatmul.mubr.f32.gmra.mrb[0].mxu0 %v280
    %v1478 = vpop.f32.mrb[0].mxu0
    %v1479 = vadd.f32 0.0, %v1478
    %v1480 = vpop.f32.mrb[0].mxu0
    %1481 = vmatprep.mubr.f32.mxu0 0.0
    %1482 = vmatmul.mubr.f32.gmra.mrb[0].mxu0 %v281
    %v1483 = vpop.f32.mrb[0].mxu0
    %v1484 = vadd.f32 0.0, %v1483
    %v1485 = vpop.f32.mrb[0].mxu0
    %1486 = vmatprep.mubr.f32.mxu0 0.0
    %1487 = vmatmul.mubr.f32.gmra.mrb[0].mxu0 %v282
    %v1488 = vpop.f32.mrb[0].mxu0
    %v1489 = vadd.f32 0.0, %v1488
    %v1490 = vpop.f32.mrb[0].mxu0
    %1491 = vmatprep.mubr.f32.mxu0 0.0
    %1492 = vmatmul.mubr.f32.gmra.mrb[0].mxu0 %v283
    %v1493 = vpop.f32.mrb[0].mxu0
    %v1494 = vadd.f32 0.0, %v1493
    %v1495 = vpop.f32.mrb[0].mxu0
    %1496 = vmatprep.mubr.f32.mxu0 0.0
    %1497 = vmatmul.mubr.f32.gmra.mrb[0].mxu0 %v284
    %v1498 = vpop.f32.mrb[0].mxu0
    %v1499 = vadd.f32 0.0, %v1498
    %v1500 = vpop.f32.mrb[0].mxu0
    %1501 = vmatprep.mubr.f32.mxu0 0.0
    %1502 = vmatmul.mubr.f32.gmra.mrb[0].mxu0 %v285
    %v1503 = vpop.f32.mrb[0].mxu0
    %v1504 = vadd.f32 0.0, %v1503
    %v1505 = vpop.f32.mrb[0].mxu0
    %1506 = vmatprep.mubr.f32.mxu0 0.0
    %1507 = vmatmul.mubr.f32.gmra.mrb[0].mxu0 %v286
    %v1508 = vpop.f32.mrb[0].mxu0
    %v1509 = vadd.f32 0.0, %v1508
    %v1510 = vpop.f32.mrb[0].mxu0
    %1511 = vmatprep.mubr.f32.mxu0 0.0
    %1512 = vmatmul.mubr.f32.gmra.mrb[0].mxu0 %v287
    %v1513 = vpop.f32.mrb[0].mxu0
    %v1514 = vadd.f32 0.0, %v1513
    %v1515 = vpop.f32.mrb[0].mxu0
    %1516 = vmatprep.mubr.f32.mxu0 0.0
    %1517 = vmatmul.mubr.f32.gmra.mrb[0].mxu0 %v288
    %v1518 = vpop.f32.mrb[0].mxu0
    %v1519 = vadd.f32 0.0, %v1518
    %v1520 = vpop.f32.mrb[0].mxu0
    %1521 = vmatprep.mubr.f32.mxu0 0.0
    %1522 = vmatmul.mubr.f32.gmra.mrb[0].mxu0 %v289
    %v1523 = vpop.f32.mrb[0].mxu0
    %v1524 = vadd.f32 0.0, %v1523
    %v1525 = vpop.f32.mrb[0].mxu0
    %1526 = vmatprep.mubr.f32.mxu0 0.0
    %1527 = vmatmul.mubr.f32.gmra.mrb[0].mxu0 %v290
    %v1528 = vpop.f32.mrb[0].mxu0
    %v1529 = vadd.f32 0.0, %v1528
    %v1530 = vpop.f32.mrb[0].mxu0
    %1531 = vmatprep.mubr.f32.mxu0 0.0
    %1532 = vmatmul.mubr.f32.gmra.mrb[0].mxu0 %v291
    %v1533 = vpop.f32.mrb[0].mxu0
    %v1534 = vadd.f32 0.0, %v1533
    %v1535 = vpop.f32.mrb[0].mxu0
    %1536 = vdwg.mxu0
    %1537 = vmatprep.subr.mxu0 0.0
    %1538 = vmatpush1.msra.mxu0 %v327
    %1539 = vmatprep.subr.mxu0 0.0
    %1540 = vmatpush1.msra.mxu0 %v328
    %1541 = vmatprep.subr.mxu0 0.0
    %1542 = vmatpush1.msra.mxu0 %v329
    %1543 = vmatprep.subr.mxu0 0.0
    %1544 = vmatpush1.msra.mxu0 %v330
    %1545 = vmatprep.subr.mxu0 0.0
    %1546 = vmatpush1.msra.mxu0 %v331
    %1547 = vmatprep.subr.mxu0 0.0
    %1548 = vmatpush1.msra.mxu0 %v332
    %1549 = vmatprep.subr.mxu0 0.0
    %1550 = vmatpush1.msra.mxu0 %v333
    %1551 = vmatprep.subr.mxu0 0.0
    %1552 = vmatpush1.msra.mxu0 %v334
    %1553 = vmatprep.subr.mxu0 0.0
    %1554 = vmatpush1.msra.mxu0 %v335
    %1555 = vmatprep.subr.mxu0 0.0
    %1556 = vmatpush1.msra.mxu0 %v336
    %1557 = vmatprep.subr.mxu0 0.0
    %1558 = vmatpush1.msra.mxu0 %v337
    %1559 = vmatprep.subr.mxu0 0.0
    %1560 = vmatpush1.msra.mxu0 %v338
    %1561 = vmatprep.subr.mxu0 0.0
    %1562 = vmatpush1.msra.mxu0 %v339
    %1563 = vmatprep.subr.mxu0 0.0
    %1564 = vmatpush1.msra.mxu0 %v340
    %1565 = vmatprep.subr.mxu0 0.0
    %1566 = vmatpush1.msra.mxu0 %v341
    %1567 = vmatprep.subr.mxu0 0.0
    %1568 = vmatpush1.msra.mxu0 %v342
    %1569 = vmatprep.subr.mxu0 0.0
    %1570 = vmatpush1.msra.mxu0 0.0
    %1571 = vmatprep.subr.mxu0 0.0
    %1572 = vmatpush1.msra.mxu0 0.0
    %1573 = vmatprep.subr.mxu0 0.0
    %1574 = vmatpush1.msra.mxu0 0.0
    %1575 = vmatprep.subr.mxu0 0.0
    %1576 = vmatpush1.msra.mxu0 0.0
    %1577 = vmatprep.subr.mxu0 0.0
    %1578 = vmatpush1.msra.mxu0 0.0
    %1579 = vmatprep.subr.mxu0 0.0
    %1580 = vmatpush1.msra.mxu0 0.0
    %1581 = vmatprep.subr.mxu0 0.0
    %1582 = vmatpush1.msra.mxu0 0.0
    %1583 = vmatprep.subr.mxu0 0.0
    %1584 = vmatpush1.msra.mxu0 0.0
    %1585 = vmatprep.subr.mxu0 0.0
    %1586 = vmatpush1.msra.mxu0 0.0
    %1587 = vmatprep.subr.mxu0 0.0
    %1588 = vmatpush1.msra.mxu0 0.0
    %1589 = vmatprep.subr.mxu0 0.0
    %1590 = vmatpush1.msra.mxu0 0.0
    %1591 = vmatprep.subr.mxu0 0.0
    %1592 = vmatpush1.msra.mxu0 0.0
    %1593 = vmatprep.subr.mxu0 0.0
    %1594 = vmatpush1.msra.mxu0 0.0
    %1595 = vmatprep.subr.mxu0 0.0
    %1596 = vmatpush1.msra.mxu0 0.0
    %1597 = vmatprep.subr.mxu0 0.0
    %1598 = vmatpush1.msra.mxu0 0.0
    %1599 = vmatprep.subr.mxu0 0.0
    %1600 = vmatpush1.msra.mxu0 0.0
    %1601 = vmatprep.mubr.f32.mxu0 0.0
    %1602 = vmatmul.mubr.f32.gmra.mrb[0].mxu0 %v310
    %v1603 = vpop.f32.mrb[0].mxu0
    %v1604 = vadd.f32 0.0, %v1603
    %v1605 = vpop.f32.mrb[0].mxu0
    %1606 = vmatprep.mubr.f32.mxu0 0.0
    %1607 = vmatmul.mubr.f32.gmra.mrb[0].mxu0 %v311
    %v1608 = vpop.f32.mrb[0].mxu0
    %v1609 = vadd.f32 0.0, %v1608
    %v1610 = vpop.f32.mrb[0].mxu0
    %1611 = vmatprep.mubr.f32.mxu0 0.0
    %1612 = vmatmul.mubr.f32.gmra.mrb[0].mxu0 %v312
    %v1613 = vpop.f32.mrb[0].mxu0
    %v1614 = vadd.f32 0.0, %v1613
    %v1615 = vpop.f32.mrb[0].mxu0
    %1616 = vmatprep.mubr.f32.mxu0 0.0
    %1617 = vmatmul.mubr.f32.gmra.mrb[0].mxu0 %v313
    %v1618 = vpop.f32.mrb[0].mxu0
    %v1619 = vadd.f32 0.0, %v1618
    %v1620 = vpop.f32.mrb[0].mxu0
    %1621 = vmatprep.mubr.f32.mxu0 0.0
    %1622 = vmatmul.mubr.f32.gmra.mrb[0].mxu0 %v314
    %v1623 = vpop.f32.mrb[0].mxu0
    %v1624 = vadd.f32 0.0, %v1623
    %v1625 = vpop.f32.mrb[0].mxu0
    %1626 = vmatprep.mubr.f32.mxu0 0.0
    %1627 = vmatmul.mubr.f32.gmra.mrb[0].mxu0 %v315
    %v1628 = vpop.f32.mrb[0].mxu0
    %v1629 = vadd.f32 0.0, %v1628
    %v1630 = vpop.f32.mrb[0].mxu0
    %1631 = vmatprep.mubr.f32.mxu0 0.0
    %1632 = vmatmul.mubr.f32.gmra.mrb[0].mxu0 %v316
    %v1633 = vpop.f32.mrb[0].mxu0
    %v1634 = vadd.f32 0.0, %v1633
    %v1635 = vpop.f32.mrb[0].mxu0
    %1636 = vmatprep.mubr.f32.mxu0 0.0
    %1637 = vmatmul.mubr.f32.gmra.mrb[0].mxu0 %v317
    %v1638 = vpop.f32.mrb[0].mxu0
    %v1639 = vadd.f32 0.0, %v1638
    %v1640 = vpop.f32.mrb[0].mxu0
    %1641 = vmatprep.mubr.f32.mxu0 0.0
    %1642 = vmatmul.mubr.f32.gmra.mrb[0].mxu0 %v318
    %v1643 = vpop.f32.mrb[0].mxu0
    %v1644 = vadd.f32 0.0, %v1643
    %v1645 = vpop.f32.mrb[0].mxu0
    %1646 = vmatprep.mubr.f32.mxu0 0.0
    %1647 = vmatmul.mubr.f32.gmra.mrb[0].mxu0 %v319
    %v1648 = vpop.f32.mrb[0].mxu0
    %v1649 = vadd.f32 0.0, %v1648
    %v1650 = vpop.f32.mrb[0].mxu0
    %1651 = vmatprep.mubr.f32.mxu0 0.0
    %1652 = vmatmul.mubr.f32.gmra.mrb[0].mxu0 %v320
    %v1653 = vpop.f32.mrb[0].mxu0
    %v1654 = vadd.f32 0.0, %v1653
    %v1655 = vpop.f32.mrb[0].mxu0
    %1656 = vmatprep.mubr.f32.mxu0 0.0
    %1657 = vmatmul.mubr.f32.gmra.mrb[0].mxu0 %v321
    %v1658 = vpop.f32.mrb[0].mxu0
    %v1659 = vadd.f32 0.0, %v1658
    %v1660 = vpop.f32.mrb[0].mxu0
    %1661 = vmatprep.mubr.f32.mxu0 0.0
    %1662 = vmatmul.mubr.f32.gmra.mrb[0].mxu0 %v322
    %v1663 = vpop.f32.mrb[0].mxu0
    %v1664 = vadd.f32 0.0, %v1663
    %v1665 = vpop.f32.mrb[0].mxu0
    %1666 = vmatprep.mubr.f32.mxu0 0.0
    %1667 = vmatmul.mubr.f32.gmra.mrb[0].mxu0 %v323
    %v1668 = vpop.f32.mrb[0].mxu0
    %v1669 = vadd.f32 0.0, %v1668
    %v1670 = vpop.f32.mrb[0].mxu0
    %1671 = vmatprep.mubr.f32.mxu0 0.0
    %1672 = vmatmul.mubr.f32.gmra.mrb[0].mxu0 %v324
    %v1673 = vpop.f32.mrb[0].mxu0
    %v1674 = vadd.f32 0.0, %v1673
    %v1675 = vpop.f32.mrb[0].mxu0
    %1676 = vmatprep.mubr.f32.mxu0 0.0
    %1677 = vmatmul.mubr.f32.gmra.mrb[0].mxu0 %v325
    %v1678 = vpop.f32.mrb[0].mxu0
    %v1679 = vadd.f32 0.0, %v1678
    %v1680 = vpop.f32.mrb[0].mxu0
    %1681 = vdwg.mxu0
    %1682 = vmatprep.subr.mxu0 0.0
    %1683 = vmatpush1.msra.mxu0 %v361
    %1684 = vmatprep.subr.mxu0 0.0
    %1685 = vmatpush1.msra.mxu0 %v362
    %1686 = vmatprep.subr.mxu0 0.0
    %1687 = vmatpush1.msra.mxu0 %v363
    %1688 = vmatprep.subr.mxu0 0.0
    %1689 = vmatpush1.msra.mxu0 %v364
    %1690 = vmatprep.subr.mxu0 0.0
    %1691 = vmatpush1.msra.mxu0 %v365
    %1692 = vmatprep.subr.mxu0 0.0
    %1693 = vmatpush1.msra.mxu0 %v366
    %1694 = vmatprep.subr.mxu0 0.0
    %1695 = vmatpush1.msra.mxu0 %v367
    %1696 = vmatprep.subr.mxu0 0.0
    %1697 = vmatpush1.msra.mxu0 %v368
    %1698 = vmatprep.subr.mxu0 0.0
    %1699 = vmatpush1.msra.mxu0 %v369
    %1700 = vmatprep.subr.mxu0 0.0
    %1701 = vmatpush1.msra.mxu0 %v370
    %1702 = vmatprep.subr.mxu0 0.0
    %1703 = vmatpush1.msra.mxu0 %v371
    %1704 = vmatprep.subr.mxu0 0.0
    %1705 = vmatpush1.msra.mxu0 %v372
    %1706 = vmatprep.subr.mxu0 0.0
    %1707 = vmatpush1.msra.mxu0 %v373
    %1708 = vmatprep.subr.mxu0 0.0
    %1709 = vmatpush1.msra.mxu0 %v374
    %1710 = vmatprep.subr.mxu0 0.0
    %1711 = vmatpush1.msra.mxu0 %v375
    %1712 = vmatprep.subr.mxu0 0.0
    %1713 = vmatpush1.msra.mxu0 %v376
    %1714 = vmatprep.subr.mxu0 0.0
    %1715 = vmatpush1.msra.mxu0 0.0
    %1716 = vmatprep.subr.mxu0 0.0
    %1717 = vmatpush1.msra.mxu0 0.0
    %1718 = vmatprep.subr.mxu0 0.0
    %1719 = vmatpush1.msra.mxu0 0.0
    %1720 = vmatprep.subr.mxu0 0.0
    %1721 = vmatpush1.msra.mxu0 0.0
    %1722 = vmatprep.subr.mxu0 0.0
    %1723 = vmatpush1.msra.mxu0 0.0
    %1724 = vmatprep.subr.mxu0 0.0
    %1725 = vmatpush1.msra.mxu0 0.0
    %1726 = vmatprep.subr.mxu0 0.0
    %1727 = vmatpush1.msra.mxu0 0.0
    %1728 = vmatprep.subr.mxu0 0.0
    %1729 = vmatpush1.msra.mxu0 0.0
    %1730 = vmatprep.subr.mxu0 0.0
    %1731 = vmatpush1.msra.mxu0 0.0
    %1732 = vmatprep.subr.mxu0 0.0
    %1733 = vmatpush1.msra.mxu0 0.0
    %1734 = vmatprep.subr.mxu0 0.0
    %1735 = vmatpush1.msra.mxu0 0.0
    %1736 = vmatprep.subr.mxu0 0.0
    %1737 = vmatpush1.msra.mxu0 0.0
    %1738 = vmatprep.subr.mxu0 0.0
    %1739 = vmatpush1.msra.mxu0 0.0
    %1740 = vmatprep.subr.mxu0 0.0
    %1741 = vmatpush1.msra.mxu0 0.0
    %1742 = vmatprep.subr.mxu0 0.0
    %1743 = vmatpush1.msra.mxu0 0.0
    %1744 = vmatprep.subr.mxu0 0.0
    %1745 = vmatpush1.msra.mxu0 0.0
    %1746 = vmatprep.mubr.f32.mxu0 0.0
    %1747 = vmatmul.mubr.f32.gmra.mrb[0].mxu0 %v344
    %v1748 = vpop.f32.mrb[0].mxu0
    %v1749 = vadd.f32 0.0, %v1748
    %v1750 = vpop.f32.mrb[0].mxu0
    %1751 = vmatprep.mubr.f32.mxu0 0.0
    %1752 = vmatmul.mubr.f32.gmra.mrb[0].mxu0 %v345
    %v1753 = vpop.f32.mrb[0].mxu0
    %v1754 = vadd.f32 0.0, %v1753
    %v1755 = vpop.f32.mrb[0].mxu0
    %1756 = vmatprep.mubr.f32.mxu0 0.0
    %1757 = vmatmul.mubr.f32.gmra.mrb[0].mxu0 %v346
    %v1758 = vpop.f32.mrb[0].mxu0
    %v1759 = vadd.f32 0.0, %v1758
    %v1760 = vpop.f32.mrb[0].mxu0
    %1761 = vmatprep.mubr.f32.mxu0 0.0
    %1762 = vmatmul.mubr.f32.gmra.mrb[0].mxu0 %v347
    %v1763 = vpop.f32.mrb[0].mxu0
    %v1764 = vadd.f32 0.0, %v1763
    %v1765 = vpop.f32.mrb[0].mxu0
    %1766 = vmatprep.mubr.f32.mxu0 0.0
    %1767 = vmatmul.mubr.f32.gmra.mrb[0].mxu0 %v348
    %v1768 = vpop.f32.mrb[0].mxu0
    %v1769 = vadd.f32 0.0, %v1768
    %v1770 = vpop.f32.mrb[0].mxu0
    %1771 = vmatprep.mubr.f32.mxu0 0.0
    %1772 = vmatmul.mubr.f32.gmra.mrb[0].mxu0 %v349
    %v1773 = vpop.f32.mrb[0].mxu0
    %v1774 = vadd.f32 0.0, %v1773
    %v1775 = vpop.f32.mrb[0].mxu0
    %1776 = vmatprep.mubr.f32.mxu0 0.0
    %1777 = vmatmul.mubr.f32.gmra.mrb[0].mxu0 %v350
    %v1778 = vpop.f32.mrb[0].mxu0
    %v1779 = vadd.f32 0.0, %v1778
    %v1780 = vpop.f32.mrb[0].mxu0
    %1781 = vmatprep.mubr.f32.mxu0 0.0
    %1782 = vmatmul.mubr.f32.gmra.mrb[0].mxu0 %v351
    %v1783 = vpop.f32.mrb[0].mxu0
    %v1784 = vadd.f32 0.0, %v1783
    %v1785 = vpop.f32.mrb[0].mxu0
    %1786 = vmatprep.mubr.f32.mxu0 0.0
    %1787 = vmatmul.mubr.f32.gmra.mrb[0].mxu0 %v352
    %v1788 = vpop.f32.mrb[0].mxu0
    %v1789 = vadd.f32 0.0, %v1788
    %v1790 = vpop.f32.mrb[0].mxu0
    %1791 = vmatprep.mubr.f32.mxu0 0.0
    %1792 = vmatmul.mubr.f32.gmra.mrb[0].mxu0 %v353
    %v1793 = vpop.f32.mrb[0].mxu0
    %v1794 = vadd.f32 0.0, %v1793
    %v1795 = vpop.f32.mrb[0].mxu0
    %1796 = vmatprep.mubr.f32.mxu0 0.0
    %1797 = vmatmul.mubr.f32.gmra.mrb[0].mxu0 %v354
    %v1798 = vpop.f32.mrb[0].mxu0
    %v1799 = vadd.f32 0.0, %v1798
    %v1800 = vpop.f32.mrb[0].mxu0
    %1801 = vmatprep.mubr.f32.mxu0 0.0
    %1802 = vmatmul.mubr.f32.gmra.mrb[0].mxu0 %v355
    %v1803 = vpop.f32.mrb[0].mxu0
    %v1804 = vadd.f32 0.0, %v1803
    %v1805 = vpop.f32.mrb[0].mxu0
    %1806 = vmatprep.mubr.f32.mxu0 0.0
    %1807 = vmatmul.mubr.f32.gmra.mrb[0].mxu0 %v356
    %v1808 = vpop.f32.mrb[0].mxu0
    %v1809 = vadd.f32 0.0, %v1808
    %v1810 = vpop.f32.mrb[0].mxu0
    %1811 = vmatprep.mubr.f32.mxu0 0.0
    %1812 = vmatmul.mubr.f32.gmra.mrb[0].mxu0 %v357
    %v1813 = vpop.f32.mrb[0].mxu0
    %v1814 = vadd.f32 0.0, %v1813
    %v1815 = vpop.f32.mrb[0].mxu0
    %1816 = vmatprep.mubr.f32.mxu0 0.0
    %1817 = vmatmul.mubr.f32.gmra.mrb[0].mxu0 %v358
    %v1818 = vpop.f32.mrb[0].mxu0
    %v1819 = vadd.f32 0.0, %v1818
    %v1820 = vpop.f32.mrb[0].mxu0
    %1821 = vmatprep.mubr.f32.mxu0 0.0
    %1822 = vmatmul.mubr.f32.gmra.mrb[0].mxu0 %v359
    %v1823 = vpop.f32.mrb[0].mxu0
    %v1824 = vadd.f32 0.0, %v1823
    %v1825 = vpop.f32.mrb[0].mxu0
    %1826 = vdwg.mxu0
    %1827 = vmatprep.subr.mxu0 0.0
    %1828 = vmatpush1.msra.mxu0 %v589
    %1829 = vmatprep.subr.mxu0 0.0
    %1830 = vmatpush1.msra.mxu0 %v594
    %1831 = vmatprep.subr.mxu0 0.0
    %1832 = vmatpush1.msra.mxu0 %v599
    %1833 = vmatprep.subr.mxu0 0.0
    %1834 = vmatpush1.msra.mxu0 %v604
    %1835 = vmatprep.subr.mxu0 0.0
    %1836 = vmatpush1.msra.mxu0 %v609
    %1837 = vmatprep.subr.mxu0 0.0
    %1838 = vmatpush1.msra.mxu0 %v614
    %1839 = vmatprep.subr.mxu0 0.0
    %1840 = vmatpush1.msra.mxu0 %v619
    %1841 = vmatprep.subr.mxu0 0.0
    %1842 = vmatpush1.msra.mxu0 %v624
    %1843 = vmatprep.subr.mxu0 0.0
    %1844 = vmatpush1.msra.mxu0 %v629
    %1845 = vmatprep.subr.mxu0 0.0
    %1846 = vmatpush1.msra.mxu0 %v634
    %1847 = vmatprep.subr.mxu0 0.0
    %1848 = vmatpush1.msra.mxu0 %v639
    %1849 = vmatprep.subr.mxu0 0.0
    %1850 = vmatpush1.msra.mxu0 %v644
    %1851 = vmatprep.subr.mxu0 0.0
    %1852 = vmatpush1.msra.mxu0 %v649
    %1853 = vmatprep.subr.mxu0 0.0
    %1854 = vmatpush1.msra.mxu0 %v654
    %1855 = vmatprep.subr.mxu0 0.0
    %1856 = vmatpush1.msra.mxu0 %v659
    %1857 = vmatprep.subr.mxu0 0.0
    %1858 = vmatpush1.msra.mxu0 %v664
    %1859 = vmatprep.subr.mxu0 0.0
    %1860 = vmatpush1.msra.mxu0 0.0
    %1861 = vmatprep.subr.mxu0 0.0
    %1862 = vmatpush1.msra.mxu0 0.0
    %1863 = vmatprep.subr.mxu0 0.0
    %1864 = vmatpush1.msra.mxu0 0.0
    %1865 = vmatprep.subr.mxu0 0.0
    %1866 = vmatpush1.msra.mxu0 0.0
    %1867 = vmatprep.subr.mxu0 0.0
    %1868 = vmatpush1.msra.mxu0 0.0
    %1869 = vmatprep.subr.mxu0 0.0
    %1870 = vmatpush1.msra.mxu0 0.0
    %1871 = vmatprep.subr.mxu0 0.0
    %1872 = vmatpush1.msra.mxu0 0.0
    %1873 = vmatprep.subr.mxu0 0.0
    %1874 = vmatpush1.msra.mxu0 0.0
    %1875 = vmatprep.subr.mxu0 0.0
    %1876 = vmatpush1.msra.mxu0 0.0
    %1877 = vmatprep.subr.mxu0 0.0
    %1878 = vmatpush1.msra.mxu0 0.0
    %1879 = vmatprep.subr.mxu0 0.0
    %1880 = vmatpush1.msra.mxu0 0.0
    %1881 = vmatprep.subr.mxu0 0.0
    %1882 = vmatpush1.msra.mxu0 0.0
    %1883 = vmatprep.subr.mxu0 0.0
    %1884 = vmatpush1.msra.mxu0 0.0
    %1885 = vmatprep.subr.mxu0 0.0
    %1886 = vmatpush1.msra.mxu0 0.0
    %1887 = vmatprep.subr.mxu0 0.0
    %1888 = vmatpush1.msra.mxu0 0.0
    %1889 = vmatprep.subr.mxu0 0.0
    %1890 = vmatpush1.msra.mxu0 0.0
    %1891 = vmatprep.mubr.f32.mxu0 0.0
    %1892 = vmatmul.mubr.f32.gmra.mrb[0].mxu0 %v444
    %v1893 = vpop.f32.mrb[0].mxu0
    %v1894 = vadd.f32 0.0, %v1893
    %v1895 = vpop.f32.mrb[0].mxu0
    %1896 = vmatprep.mubr.f32.mxu0 0.0
    %1897 = vmatmul.mubr.f32.gmra.mrb[0].mxu0 %v449
    %v1898 = vpop.f32.mrb[0].mxu0
    %v1899 = vadd.f32 0.0, %v1898
    %v1900 = vpop.f32.mrb[0].mxu0
    %1901 = vmatprep.mubr.f32.mxu0 0.0
    %1902 = vmatmul.mubr.f32.gmra.mrb[0].mxu0 %v454
    %v1903 = vpop.f32.mrb[0].mxu0
    %v1904 = vadd.f32 0.0, %v1903
    %v1905 = vpop.f32.mrb[0].mxu0
    %1906 = vmatprep.mubr.f32.mxu0 0.0
    %1907 = vmatmul.mubr.f32.gmra.mrb[0].mxu0 %v459
    %v1908 = vpop.f32.mrb[0].mxu0
    %v1909 = vadd.f32 0.0, %v1908
    %v1910 = vpop.f32.mrb[0].mxu0
    %1911 = vmatprep.mubr.f32.mxu0 0.0
    %1912 = vmatmul.mubr.f32.gmra.mrb[0].mxu0 %v464
    %v1913 = vpop.f32.mrb[0].mxu0
    %v1914 = vadd.f32 0.0, %v1913
    %v1915 = vpop.f32.mrb[0].mxu0
    %1916 = vmatprep.mubr.f32.mxu0 0.0
    %1917 = vmatmul.mubr.f32.gmra.mrb[0].mxu0 %v469
    %v1918 = vpop.f32.mrb[0].mxu0
    %v1919 = vadd.f32 0.0, %v1918
    %v1920 = vpop.f32.mrb[0].mxu0
    %1921 = vmatprep.mubr.f32.mxu0 0.0
    %1922 = vmatmul.mubr.f32.gmra.mrb[0].mxu0 %v474
    %v1923 = vpop.f32.mrb[0].mxu0
    %v1924 = vadd.f32 0.0, %v1923
    %v1925 = vpop.f32.mrb[0].mxu0
    %1926 = vmatprep.mubr.f32.mxu0 0.0
    %1927 = vmatmul.mubr.f32.gmra.mrb[0].mxu0 %v479
    %v1928 = vpop.f32.mrb[0].mxu0
    %v1929 = vadd.f32 0.0, %v1928
    %v1930 = vpop.f32.mrb[0].mxu0
    %1931 = vmatprep.mubr.f32.mxu0 0.0
    %1932 = vmatmul.mubr.f32.gmra.mrb[0].mxu0 %v484
    %v1933 = vpop.f32.mrb[0].mxu0
    %v1934 = vadd.f32 0.0, %v1933
    %v1935 = vpop.f32.mrb[0].mxu0
    %1936 = vmatprep.mubr.f32.mxu0 0.0
    %1937 = vmatmul.mubr.f32.gmra.mrb[0].mxu0 %v489
    %v1938 = vpop.f32.mrb[0].mxu0
    %v1939 = vadd.f32 0.0, %v1938
    %v1940 = vpop.f32.mrb[0].mxu0
    %1941 = vmatprep.mubr.f32.mxu0 0.0
    %1942 = vmatmul.mubr.f32.gmra.mrb[0].mxu0 %v494
    %v1943 = vpop.f32.mrb[0].mxu0
    %v1944 = vadd.f32 0.0, %v1943
    %v1945 = vpop.f32.mrb[0].mxu0
    %1946 = vmatprep.mubr.f32.mxu0 0.0
    %1947 = vmatmul.mubr.f32.gmra.mrb[0].mxu0 %v499
    %v1948 = vpop.f32.mrb[0].mxu0
    %v1949 = vadd.f32 0.0, %v1948
    %v1950 = vpop.f32.mrb[0].mxu0
    %1951 = vmatprep.mubr.f32.mxu0 0.0
    %1952 = vmatmul.mubr.f32.gmra.mrb[0].mxu0 %v504
    %v1953 = vpop.f32.mrb[0].mxu0
    %v1954 = vadd.f32 0.0, %v1953
    %v1955 = vpop.f32.mrb[0].mxu0
    %1956 = vmatprep.mubr.f32.mxu0 0.0
    %1957 = vmatmul.mubr.f32.gmra.mrb[0].mxu0 %v509
    %v1958 = vpop.f32.mrb[0].mxu0
    %v1959 = vadd.f32 0.0, %v1958
    %v1960 = vpop.f32.mrb[0].mxu0
    %1961 = vmatprep.mubr.f32.mxu0 0.0
    %1962 = vmatmul.mubr.f32.gmra.mrb[0].mxu0 %v514
    %v1963 = vpop.f32.mrb[0].mxu0
    %v1964 = vadd.f32 0.0, %v1963
    %v1965 = vpop.f32.mrb[0].mxu0
    %1966 = vmatprep.mubr.f32.mxu0 0.0
    %1967 = vmatmul.mubr.f32.gmra.mrb[0].mxu0 %v519
    %v1968 = vpop.f32.mrb[0].mxu0
    %v1969 = vadd.f32 0.0, %v1968
    %v1970 = vpop.f32.mrb[0].mxu0
    %1971 = vdwg.mxu0
    %1972 = vmatprep.subr.mxu0 0.0
    %1973 = vmatpush1.msra.mxu0 %v879
    %1974 = vmatprep.subr.mxu0 0.0
    %1975 = vmatpush1.msra.mxu0 %v884
    %1976 = vmatprep.subr.mxu0 0.0
    %1977 = vmatpush1.msra.mxu0 %v889
    %1978 = vmatprep.subr.mxu0 0.0
    %1979 = vmatpush1.msra.mxu0 %v894
    %1980 = vmatprep.subr.mxu0 0.0
    %1981 = vmatpush1.msra.mxu0 %v899
    %1982 = vmatprep.subr.mxu0 0.0
    %1983 = vmatpush1.msra.mxu0 %v904
    %1984 = vmatprep.subr.mxu0 0.0
    %1985 = vmatpush1.msra.mxu0 %v909
    %1986 = vmatprep.subr.mxu0 0.0
    %1987 = vmatpush1.msra.mxu0 %v914
    %1988 = vmatprep.subr.mxu0 0.0
    %1989 = vmatpush1.msra.mxu0 %v919
    %1990 = vmatprep.subr.mxu0 0.0
    %1991 = vmatpush1.msra.mxu0 %v924
    %1992 = vmatprep.subr.mxu0 0.0
    %1993 = vmatpush1.msra.mxu0 %v929
    %1994 = vmatprep.subr.mxu0 0.0
    %1995 = vmatpush1.msra.mxu0 %v934
    %1996 = vmatprep.subr.mxu0 0.0
    %1997 = vmatpush1.msra.mxu0 %v939
    %1998 = vmatprep.subr.mxu0 0.0
    %1999 = vmatpush1.msra.mxu0 %v944
    %2000 = vmatprep.subr.mxu0 0.0
    %2001 = vmatpush1.msra.mxu0 %v949
    %2002 = vmatprep.subr.mxu0 0.0
    %2003 = vmatpush1.msra.mxu0 %v954
    %2004 = vmatprep.subr.mxu0 0.0
    %2005 = vmatpush1.msra.mxu0 0.0
    %2006 = vmatprep.subr.mxu0 0.0
    %2007 = vmatpush1.msra.mxu0 0.0
    %2008 = vmatprep.subr.mxu0 0.0
    %2009 = vmatpush1.msra.mxu0 0.0
    %2010 = vmatprep.subr.mxu0 0.0
    %2011 = vmatpush1.msra.mxu0 0.0
    %2012 = vmatprep.subr.mxu0 0.0
    %2013 = vmatpush1.msra.mxu0 0.0
    %2014 = vmatprep.subr.mxu0 0.0
    %2015 = vmatpush1.msra.mxu0 0.0
    %2016 = vmatprep.subr.mxu0 0.0
    %2017 = vmatpush1.msra.mxu0 0.0
    %2018 = vmatprep.subr.mxu0 0.0
    %2019 = vmatpush1.msra.mxu0 0.0
    %2020 = vmatprep.subr.mxu0 0.0
    %2021 = vmatpush1.msra.mxu0 0.0
    %2022 = vmatprep.subr.mxu0 0.0
    %2023 = vmatpush1.msra.mxu0 0.0
    %2024 = vmatprep.subr.mxu0 0.0
    %2025 = vmatpush1.msra.mxu0 0.0
    %2026 = vmatprep.subr.mxu0 0.0
    %2027 = vmatpush1.msra.mxu0 0.0
    %2028 = vmatprep.subr.mxu0 0.0
    %2029 = vmatpush1.msra.mxu0 0.0
    %2030 = vmatprep.subr.mxu0 0.0
    %2031 = vmatpush1.msra.mxu0 0.0
    %2032 = vmatprep.subr.mxu0 0.0
    %2033 = vmatpush1.msra.mxu0 0.0
    %2034 = vmatprep.subr.mxu0 0.0
    %2035 = vmatpush1.msra.mxu0 0.0
    %2036 = vmatprep.mubr.f32.mxu0 0.0
    %2037 = vmatmul.mubr.f32.gmra.mrb[0].mxu0 %v734
    %v2038 = vpop.f32.mrb[0].mxu0
    %v2039 = vadd.f32 0.0, %v2038
    %v2040 = vpop.f32.mrb[0].mxu0
    %2041 = vmatprep.mubr.f32.mxu0 0.0
    %2042 = vmatmul.mubr.f32.gmra.mrb[0].mxu0 %v739
    %v2043 = vpop.f32.mrb[0].mxu0
    %v2044 = vadd.f32 0.0, %v2043
    %v2045 = vpop.f32.mrb[0].mxu0
    %2046 = vmatprep.mubr.f32.mxu0 0.0
    %2047 = vmatmul.mubr.f32.gmra.mrb[0].mxu0 %v744
    %v2048 = vpop.f32.mrb[0].mxu0
    %v2049 = vadd.f32 0.0, %v2048
    %v2050 = vpop.f32.mrb[0].mxu0
    %2051 = vmatprep.mubr.f32.mxu0 0.0
    %2052 = vmatmul.mubr.f32.gmra.mrb[0].mxu0 %v749
    %v2053 = vpop.f32.mrb[0].mxu0
    %v2054 = vadd.f32 0.0, %v2053
    %v2055 = vpop.f32.mrb[0].mxu0
    %2056 = vmatprep.mubr.f32.mxu0 0.0
    %2057 = vmatmul.mubr.f32.gmra.mrb[0].mxu0 %v754
    %v2058 = vpop.f32.mrb[0].mxu0
    %v2059 = vadd.f32 0.0, %v2058
    %v2060 = vpop.f32.mrb[0].mxu0
    %2061 = vmatprep.mubr.f32.mxu0 0.0
    %2062 = vmatmul.mubr.f32.gmra.mrb[0].mxu0 %v759
    %v2063 = vpop.f32.mrb[0].mxu0
    %v2064 = vadd.f32 0.0, %v2063
    %v2065 = vpop.f32.mrb[0].mxu0
    %2066 = vmatprep.mubr.f32.mxu0 0.0
    %2067 = vmatmul.mubr.f32.gmra.mrb[0].mxu0 %v764
    %v2068 = vpop.f32.mrb[0].mxu0
    %v2069 = vadd.f32 0.0, %v2068
    %v2070 = vpop.f32.mrb[0].mxu0
    %2071 = vmatprep.mubr.f32.mxu0 0.0
    %2072 = vmatmul.mubr.f32.gmra.mrb[0].mxu0 %v769
    %v2073 = vpop.f32.mrb[0].mxu0
    %v2074 = vadd.f32 0.0, %v2073
    %v2075 = vpop.f32.mrb[0].mxu0
    %2076 = vmatprep.mubr.f32.mxu0 0.0
    %2077 = vmatmul.mubr.f32.gmra.mrb[0].mxu0 %v774
    %v2078 = vpop.f32.mrb[0].mxu0
    %v2079 = vadd.f32 0.0, %v2078
    %v2080 = vpop.f32.mrb[0].mxu0
    %2081 = vmatprep.mubr.f32.mxu0 0.0
    %2082 = vmatmul.mubr.f32.gmra.mrb[0].mxu0 %v779
    %v2083 = vpop.f32.mrb[0].mxu0
    %v2084 = vadd.f32 0.0, %v2083
    %v2085 = vpop.f32.mrb[0].mxu0
    %2086 = vmatprep.mubr.f32.mxu0 0.0
    %2087 = vmatmul.mubr.f32.gmra.mrb[0].mxu0 %v784
    %v2088 = vpop.f32.mrb[0].mxu0
    %v2089 = vadd.f32 0.0, %v2088
    %v2090 = vpop.f32.mrb[0].mxu0
    %2091 = vmatprep.mubr.f32.mxu0 0.0
    %2092 = vmatmul.mubr.f32.gmra.mrb[0].mxu0 %v789
    %v2093 = vpop.f32.mrb[0].mxu0
    %v2094 = vadd.f32 0.0, %v2093
    %v2095 = vpop.f32.mrb[0].mxu0
    %2096 = vmatprep.mubr.f32.mxu0 0.0
    %2097 = vmatmul.mubr.f32.gmra.mrb[0].mxu0 %v794
    %v2098 = vpop.f32.mrb[0].mxu0
    %v2099 = vadd.f32 0.0, %v2098
    %v2100 = vpop.f32.mrb[0].mxu0
    %2101 = vmatprep.mubr.f32.mxu0 0.0
    %2102 = vmatmul.mubr.f32.gmra.mrb[0].mxu0 %v799
    %v2103 = vpop.f32.mrb[0].mxu0
    %v2104 = vadd.f32 0.0, %v2103
    %v2105 = vpop.f32.mrb[0].mxu0
    %2106 = vmatprep.mubr.f32.mxu0 0.0
    %2107 = vmatmul.mubr.f32.gmra.mrb[0].mxu0 %v804
    %v2108 = vpop.f32.mrb[0].mxu0
    %v2109 = vadd.f32 0.0, %v2108
    %v2110 = vpop.f32.mrb[0].mxu0
    %2111 = vmatprep.mubr.f32.mxu0 0.0
    %2112 = vmatmul.mubr.f32.gmra.mrb[0].mxu0 %v809
    %v2113 = vpop.f32.mrb[0].mxu0
    %v2114 = vadd.f32 0.0, %v2113
    %v2115 = vpop.f32.mrb[0].mxu0
    %2116 = vdwg.mxu0
    %2117 = vmatprep.subr.mxu0 0.0
    %2118 = vmatpush1.msra.mxu0 %v1169
    %2119 = vmatprep.subr.mxu0 0.0
    %2120 = vmatpush1.msra.mxu0 %v1174
    %2121 = vmatprep.subr.mxu0 0.0
    %2122 = vmatpush1.msra.mxu0 %v1179
    %2123 = vmatprep.subr.mxu0 0.0
    %2124 = vmatpush1.msra.mxu0 %v1184
    %2125 = vmatprep.subr.mxu0 0.0
    %2126 = vmatpush1.msra.mxu0 %v1189
    %2127 = vmatprep.subr.mxu0 0.0
    %2128 = vmatpush1.msra.mxu0 %v1194
    %2129 = vmatprep.subr.mxu0 0.0
    %2130 = vmatpush1.msra.mxu0 %v1199
    %2131 = vmatprep.subr.mxu0 0.0
    %2132 = vmatpush1.msra.mxu0 %v1204
    %2133 = vmatprep.subr.mxu0 0.0
    %2134 = vmatpush1.msra.mxu0 %v1209
    %2135 = vmatprep.subr.mxu0 0.0
    %2136 = vmatpush1.msra.mxu0 %v1214
    %2137 = vmatprep.subr.mxu0 0.0
    %2138 = vmatpush1.msra.mxu0 %v1219
    %2139 = vmatprep.subr.mxu0 0.0
    %2140 = vmatpush1.msra.mxu0 %v1224
    %2141 = vmatprep.subr.mxu0 0.0
    %2142 = vmatpush1.msra.mxu0 %v1229
    %2143 = vmatprep.subr.mxu0 0.0
    %2144 = vmatpush1.msra.mxu0 %v1234
    %2145 = vmatprep.subr.mxu0 0.0
    %2146 = vmatpush1.msra.mxu0 %v1239
    %2147 = vmatprep.subr.mxu0 0.0
    %2148 = vmatpush1.msra.mxu0 %v1244
    %2149 = vmatprep.subr.mxu0 0.0
    %2150 = vmatpush1.msra.mxu0 0.0
    %2151 = vmatprep.subr.mxu0 0.0
    %2152 = vmatpush1.msra.mxu0 0.0
    %2153 = vmatprep.subr.mxu0 0.0
    %2154 = vmatpush1.msra.mxu0 0.0
    %2155 = vmatprep.subr.mxu0 0.0
    %2156 = vmatpush1.msra.mxu0 0.0
    %2157 = vmatprep.subr.mxu0 0.0
    %2158 = vmatpush1.msra.mxu0 0.0
    %2159 = vmatprep.subr.mxu0 0.0
    %2160 = vmatpush1.msra.mxu0 0.0
    %2161 = vmatprep.subr.mxu0 0.0
    %2162 = vmatpush1.msra.mxu0 0.0
    %2163 = vmatprep.subr.mxu0 0.0
    %2164 = vmatpush1.msra.mxu0 0.0
    %2165 = vmatprep.subr.mxu0 0.0
    %2166 = vmatpush1.msra.mxu0 0.0
    %2167 = vmatprep.subr.mxu0 0.0
    %2168 = vmatpush1.msra.mxu0 0.0
    %2169 = vmatprep.subr.mxu0 0.0
    %2170 = vmatpush1.msra.mxu0 0.0
    %2171 = vmatprep.subr.mxu0 0.0
    %2172 = vmatpush1.msra.mxu0 0.0
    %2173 = vmatprep.subr.mxu0 0.0
    %2174 = vmatpush1.msra.mxu0 0.0
    %2175 = vmatprep.subr.mxu0 0.0
    %2176 = vmatpush1.msra.mxu0 0.0
    %2177 = vmatprep.subr.mxu0 0.0
    %2178 = vmatpush1.msra.mxu0 0.0
    %2179 = vmatprep.subr.mxu0 0.0
    %2180 = vmatpush1.msra.mxu0 0.0
    %2181 = vmatprep.mubr.f32.mxu0 0.0
    %2182 = vmatmul.mubr.f32.gmra.mrb[0].mxu0 %v1024
    %v2183 = vpop.f32.mrb[0].mxu0
    %v2184 = vadd.f32 0.0, %v2183
    %v2185 = vpop.f32.mrb[0].mxu0
    %2186 = vmatprep.mubr.f32.mxu0 0.0
    %2187 = vmatmul.mubr.f32.gmra.mrb[0].mxu0 %v1029
    %v2188 = vpop.f32.mrb[0].mxu0
    %v2189 = vadd.f32 0.0, %v2188
    %v2190 = vpop.f32.mrb[0].mxu0
    %2191 = vmatprep.mubr.f32.mxu0 0.0
    %2192 = vmatmul.mubr.f32.gmra.mrb[0].mxu0 %v1034
    %v2193 = vpop.f32.mrb[0].mxu0
    %v2194 = vadd.f32 0.0, %v2193
    %v2195 = vpop.f32.mrb[0].mxu0
    %2196 = vmatprep.mubr.f32.mxu0 0.0
    %2197 = vmatmul.mubr.f32.gmra.mrb[0].mxu0 %v1039
    %v2198 = vpop.f32.mrb[0].mxu0
    %v2199 = vadd.f32 0.0, %v2198
    %v2200 = vpop.f32.mrb[0].mxu0
    %2201 = vmatprep.mubr.f32.mxu0 0.0
    %2202 = vmatmul.mubr.f32.gmra.mrb[0].mxu0 %v1044
    %v2203 = vpop.f32.mrb[0].mxu0
    %v2204 = vadd.f32 0.0, %v2203
    %v2205 = vpop.f32.mrb[0].mxu0
    %2206 = vmatprep.mubr.f32.mxu0 0.0
    %2207 = vmatmul.mubr.f32.gmra.mrb[0].mxu0 %v1049
    %v2208 = vpop.f32.mrb[0].mxu0
    %v2209 = vadd.f32 0.0, %v2208
    %v2210 = vpop.f32.mrb[0].mxu0
    %2211 = vmatprep.mubr.f32.mxu0 0.0
    %2212 = vmatmul.mubr.f32.gmra.mrb[0].mxu0 %v1054
    %v2213 = vpop.f32.mrb[0].mxu0
    %v2214 = vadd.f32 0.0, %v2213
    %v2215 = vpop.f32.mrb[0].mxu0
    %2216 = vmatprep.mubr.f32.mxu0 0.0
    %2217 = vmatmul.mubr.f32.gmra.mrb[0].mxu0 %v1059
    %v2218 = vpop.f32.mrb[0].mxu0
    %v2219 = vadd.f32 0.0, %v2218
    %v2220 = vpop.f32.mrb[0].mxu0
    %2221 = vmatprep.mubr.f32.mxu0 0.0
    %2222 = vmatmul.mubr.f32.gmra.mrb[0].mxu0 %v1064
    %v2223 = vpop.f32.mrb[0].mxu0
    %v2224 = vadd.f32 0.0, %v2223
    %v2225 = vpop.f32.mrb[0].mxu0
    %2226 = vmatprep.mubr.f32.mxu0 0.0
    %2227 = vmatmul.mubr.f32.gmra.mrb[0].mxu0 %v1069
    %v2228 = vpop.f32.mrb[0].mxu0
    %v2229 = vadd.f32 0.0, %v2228
    %v2230 = vpop.f32.mrb[0].mxu0
    %2231 = vmatprep.mubr.f32.mxu0 0.0
    %2232 = vmatmul.mubr.f32.gmra.mrb[0].mxu0 %v1074
    %v2233 = vpop.f32.mrb[0].mxu0
    %v2234 = vadd.f32 0.0, %v2233
    %v2235 = vpop.f32.mrb[0].mxu0
    %2236 = vmatprep.mubr.f32.mxu0 0.0
    %2237 = vmatmul.mubr.f32.gmra.mrb[0].mxu0 %v1079
    %v2238 = vpop.f32.mrb[0].mxu0
    %v2239 = vadd.f32 0.0, %v2238
    %v2240 = vpop.f32.mrb[0].mxu0
    %2241 = vmatprep.mubr.f32.mxu0 0.0
    %2242 = vmatmul.mubr.f32.gmra.mrb[0].mxu0 %v1084
    %v2243 = vpop.f32.mrb[0].mxu0
    %v2244 = vadd.f32 0.0, %v2243
    %v2245 = vpop.f32.mrb[0].mxu0
    %2246 = vmatprep.mubr.f32.mxu0 0.0
    %2247 = vmatmul.mubr.f32.gmra.mrb[0].mxu0 %v1089
    %v2248 = vpop.f32.mrb[0].mxu0
    %v2249 = vadd.f32 0.0, %v2248
    %v2250 = vpop.f32.mrb[0].mxu0
    %2251 = vmatprep.mubr.f32.mxu0 0.0
    %2252 = vmatmul.mubr.f32.gmra.mrb[0].mxu0 %v1094
    %v2253 = vpop.f32.mrb[0].mxu0
    %v2254 = vadd.f32 0.0, %v2253
    %v2255 = vpop.f32.mrb[0].mxu0
    %2256 = vmatprep.mubr.f32.mxu0 0.0
    %2257 = vmatmul.mubr.f32.gmra.mrb[0].mxu0 %v1099
    %v2258 = vpop.f32.mrb[0].mxu0
    %v2259 = vadd.f32 0.0, %v2258
    %v2260 = vpop.f32.mrb[0].mxu0
    %2261 = vdwg.mxu0
    %2262 = vmatprep.subr.mxu0 0.0
    %2263 = vmatpush1.msra.mxu0 %v1459
    %2264 = vmatprep.subr.mxu0 0.0
    %2265 = vmatpush1.msra.mxu0 %v1464
    %2266 = vmatprep.subr.mxu0 0.0
    %2267 = vmatpush1.msra.mxu0 %v1469
    %2268 = vmatprep.subr.mxu0 0.0
    %2269 = vmatpush1.msra.mxu0 %v1474
    %2270 = vmatprep.subr.mxu0 0.0
    %2271 = vmatpush1.msra.mxu0 %v1479
    %2272 = vmatprep.subr.mxu0 0.0
    %2273 = vmatpush1.msra.mxu0 %v1484
    %2274 = vmatprep.subr.mxu0 0.0
    %2275 = vmatpush1.msra.mxu0 %v1489
    %2276 = vmatprep.subr.mxu0 0.0
    %2277 = vmatpush1.msra.mxu0 %v1494
    %2278 = vmatprep.subr.mxu0 0.0
    %2279 = vmatpush1.msra.mxu0 %v1499
    %2280 = vmatprep.subr.mxu0 0.0
    %2281 = vmatpush1.msra.mxu0 %v1504
    %2282 = vmatprep.subr.mxu0 0.0
    %2283 = vmatpush1.msra.mxu0 %v1509
    %2284 = vmatprep.subr.mxu0 0.0
    %2285 = vmatpush1.msra.mxu0 %v1514
    %2286 = vmatprep.subr.mxu0 0.0
    %2287 = vmatpush1.msra.mxu0 %v1519
    %2288 = vmatprep.subr.mxu0 0.0
    %2289 = vmatpush1.msra.mxu0 %v1524
    %2290 = vmatprep.subr.mxu0 0.0
    %2291 = vmatpush1.msra.mxu0 %v1529
    %2292 = vmatprep.subr.mxu0 0.0
    %2293 = vmatpush1.msra.mxu0 %v1534
    %2294 = vmatprep.subr.mxu0 0.0
    %2295 = vmatpush1.msra.mxu0 0.0
    %2296 = vmatprep.subr.mxu0 0.0
    %2297 = vmatpush1.msra.mxu0 0.0
    %2298 = vmatprep.subr.mxu0 0.0
    %2299 = vmatpush1.msra.mxu0 0.0
    %2300 = vmatprep.subr.mxu0 0.0
    %2301 = vmatpush1.msra.mxu0 0.0
    %2302 = vmatprep.subr.mxu0 0.0
    %2303 = vmatpush1.msra.mxu0 0.0
    %2304 = vmatprep.subr.mxu0 0.0
    %2305 = vmatpush1.msra.mxu0 0.0
    %2306 = vmatprep.subr.mxu0 0.0
    %2307 = vmatpush1.msra.mxu0 0.0
    %2308 = vmatprep.subr.mxu0 0.0
    %2309 = vmatpush1.msra.mxu0 0.0
    %2310 = vmatprep.subr.mxu0 0.0
    %2311 = vmatpush1.msra.mxu0 0.0
    %2312 = vmatprep.subr.mxu0 0.0
    %2313 = vmatpush1.msra.mxu0 0.0
    %2314 = vmatprep.subr.mxu0 0.0
    %2315 = vmatpush1.msra.mxu0 0.0
    %2316 = vmatprep.subr.mxu0 0.0
    %2317 = vmatpush1.msra.mxu0 0.0
    %2318 = vmatprep.subr.mxu0 0.0
    %2319 = vmatpush1.msra.mxu0 0.0
    %2320 = vmatprep.subr.mxu0 0.0
    %2321 = vmatpush1.msra.mxu0 0.0
    %2322 = vmatprep.subr.mxu0 0.0
    %2323 = vmatpush1.msra.mxu0 0.0
    %2324 = vmatprep.subr.mxu0 0.0
    %2325 = vmatpush1.msra.mxu0 0.0
    %2326 = vmatprep.mubr.f32.mxu0 0.0
    %2327 = vmatmul.mubr.f32.gmra.mrb[0].mxu0 %v1314
    %v2328 = vpop.f32.mrb[0].mxu0
    %v2329 = vadd.f32 0.0, %v2328
    %v2330 = vpop.f32.mrb[0].mxu0
    %2331 = vmatprep.mubr.f32.mxu0 0.0
    %2332 = vmatmul.mubr.f32.gmra.mrb[0].mxu0 %v1319
    %v2333 = vpop.f32.mrb[0].mxu0
    %v2334 = vadd.f32 0.0, %v2333
    %v2335 = vpop.f32.mrb[0].mxu0
    %2336 = vmatprep.mubr.f32.mxu0 0.0
    %2337 = vmatmul.mubr.f32.gmra.mrb[0].mxu0 %v1324
    %v2338 = vpop.f32.mrb[0].mxu0
    %v2339 = vadd.f32 0.0, %v2338
    %v2340 = vpop.f32.mrb[0].mxu0
    %2341 = vmatprep.mubr.f32.mxu0 0.0
    %2342 = vmatmul.mubr.f32.gmra.mrb[0].mxu0 %v1329
    %v2343 = vpop.f32.mrb[0].mxu0
    %v2344 = vadd.f32 0.0, %v2343
    %v2345 = vpop.f32.mrb[0].mxu0
    %2346 = vmatprep.mubr.f32.mxu0 0.0
    %2347 = vmatmul.mubr.f32.gmra.mrb[0].mxu0 %v1334
    %v2348 = vpop.f32.mrb[0].mxu0
    %v2349 = vadd.f32 0.0, %v2348
    %v2350 = vpop.f32.mrb[0].mxu0
    %2351 = vmatprep.mubr.f32.mxu0 0.0
    %2352 = vmatmul.mubr.f32.gmra.mrb[0].mxu0 %v1339
    %v2353 = vpop.f32.mrb[0].mxu0
    %v2354 = vadd.f32 0.0, %v2353
    %v2355 = vpop.f32.mrb[0].mxu0
    %2356 = vmatprep.mubr.f32.mxu0 0.0
    %2357 = vmatmul.mubr.f32.gmra.mrb[0].mxu0 %v1344
    %v2358 = vpop.f32.mrb[0].mxu0
    %v2359 = vadd.f32 0.0, %v2358
    %v2360 = vpop.f32.mrb[0].mxu0
    %2361 = vmatprep.mubr.f32.mxu0 0.0
    %2362 = vmatmul.mubr.f32.gmra.mrb[0].mxu0 %v1349
    %v2363 = vpop.f32.mrb[0].mxu0
    %v2364 = vadd.f32 0.0, %v2363
    %v2365 = vpop.f32.mrb[0].mxu0
    %2366 = vmatprep.mubr.f32.mxu0 0.0
    %2367 = vmatmul.mubr.f32.gmra.mrb[0].mxu0 %v1354
    %v2368 = vpop.f32.mrb[0].mxu0
    %v2369 = vadd.f32 0.0, %v2368
    %v2370 = vpop.f32.mrb[0].mxu0
    %2371 = vmatprep.mubr.f32.mxu0 0.0
    %2372 = vmatmul.mubr.f32.gmra.mrb[0].mxu0 %v1359
    %v2373 = vpop.f32.mrb[0].mxu0
    %v2374 = vadd.f32 0.0, %v2373
    %v2375 = vpop.f32.mrb[0].mxu0
    %2376 = vmatprep.mubr.f32.mxu0 0.0
    %2377 = vmatmul.mubr.f32.gmra.mrb[0].mxu0 %v1364
    %v2378 = vpop.f32.mrb[0].mxu0
    %v2379 = vadd.f32 0.0, %v2378
    %v2380 = vpop.f32.mrb[0].mxu0
    %2381 = vmatprep.mubr.f32.mxu0 0.0
    %2382 = vmatmul.mubr.f32.gmra.mrb[0].mxu0 %v1369
    %v2383 = vpop.f32.mrb[0].mxu0
    %v2384 = vadd.f32 0.0, %v2383
    %v2385 = vpop.f32.mrb[0].mxu0
    %2386 = vmatprep.mubr.f32.mxu0 0.0
    %2387 = vmatmul.mubr.f32.gmra.mrb[0].mxu0 %v1374
    %v2388 = vpop.f32.mrb[0].mxu0
    %v2389 = vadd.f32 0.0, %v2388
    %v2390 = vpop.f32.mrb[0].mxu0
    %2391 = vmatprep.mubr.f32.mxu0 0.0
    %2392 = vmatmul.mubr.f32.gmra.mrb[0].mxu0 %v1379
    %v2393 = vpop.f32.mrb[0].mxu0
    %v2394 = vadd.f32 0.0, %v2393
    %v2395 = vpop.f32.mrb[0].mxu0
    %2396 = vmatprep.mubr.f32.mxu0 0.0
    %2397 = vmatmul.mubr.f32.gmra.mrb[0].mxu0 %v1384
    %v2398 = vpop.f32.mrb[0].mxu0
    %v2399 = vadd.f32 0.0, %v2398
    %v2400 = vpop.f32.mrb[0].mxu0
    %2401 = vmatprep.mubr.f32.mxu0 0.0
    %2402 = vmatmul.mubr.f32.gmra.mrb[0].mxu0 %v1389
    %v2403 = vpop.f32.mrb[0].mxu0
    %v2404 = vadd.f32 0.0, %v2403
    %v2405 = vpop.f32.mrb[0].mxu0
    %2406 = vdwg.mxu0
    %2407 = vmatprep.subr.mxu0 0.0
    %2408 = vmatpush1.msra.mxu0 %v1749
    %2409 = vmatprep.subr.mxu0 0.0
    %2410 = vmatpush1.msra.mxu0 %v1754
    %2411 = vmatprep.subr.mxu0 0.0
    %2412 = vmatpush1.msra.mxu0 %v1759
    %2413 = vmatprep.subr.mxu0 0.0
    %2414 = vmatpush1.msra.mxu0 %v1764
    %2415 = vmatprep.subr.mxu0 0.0
    %2416 = vmatpush1.msra.mxu0 %v1769
    %2417 = vmatprep.subr.mxu0 0.0
    %2418 = vmatpush1.msra.mxu0 %v1774
    %2419 = vmatprep.subr.mxu0 0.0
    %2420 = vmatpush1.msra.mxu0 %v1779
    %2421 = vmatprep.subr.mxu0 0.0
    %2422 = vmatpush1.msra.mxu0 %v1784
    %2423 = vmatprep.subr.mxu0 0.0
    %2424 = vmatpush1.msra.mxu0 %v1789
    %2425 = vmatprep.subr.mxu0 0.0
    %2426 = vmatpush1.msra.mxu0 %v1794
    %2427 = vmatprep.subr.mxu0 0.0
    %2428 = vmatpush1.msra.mxu0 %v1799
    %2429 = vmatprep.subr.mxu0 0.0
    %2430 = vmatpush1.msra.mxu0 %v1804
    %2431 = vmatprep.subr.mxu0 0.0
    %2432 = vmatpush1.msra.mxu0 %v1809
    %2433 = vmatprep.subr.mxu0 0.0
    %2434 = vmatpush1.msra.mxu0 %v1814
    %2435 = vmatprep.subr.mxu0 0.0
    %2436 = vmatpush1.msra.mxu0 %v1819
    %2437 = vmatprep.subr.mxu0 0.0
    %2438 = vmatpush1.msra.mxu0 %v1824
    %2439 = vmatprep.subr.mxu0 0.0
    %2440 = vmatpush1.msra.mxu0 0.0
    %2441 = vmatprep.subr.mxu0 0.0
    %2442 = vmatpush1.msra.mxu0 0.0
    %2443 = vmatprep.subr.mxu0 0.0
    %2444 = vmatpush1.msra.mxu0 0.0
    %2445 = vmatprep.subr.mxu0 0.0
    %2446 = vmatpush1.msra.mxu0 0.0
    %2447 = vmatprep.subr.mxu0 0.0
    %2448 = vmatpush1.msra.mxu0 0.0
    %2449 = vmatprep.subr.mxu0 0.0
    %2450 = vmatpush1.msra.mxu0 0.0
    %2451 = vmatprep.subr.mxu0 0.0
    %2452 = vmatpush1.msra.mxu0 0.0
    %2453 = vmatprep.subr.mxu0 0.0
    %2454 = vmatpush1.msra.mxu0 0.0
    %2455 = vmatprep.subr.mxu0 0.0
    %2456 = vmatpush1.msra.mxu0 0.0
    %2457 = vmatprep.subr.mxu0 0.0
    %2458 = vmatpush1.msra.mxu0 0.0
    %2459 = vmatprep.subr.mxu0 0.0
    %2460 = vmatpush1.msra.mxu0 0.0
    %2461 = vmatprep.subr.mxu0 0.0
    %2462 = vmatpush1.msra.mxu0 0.0
    %2463 = vmatprep.subr.mxu0 0.0
    %2464 = vmatpush1.msra.mxu0 0.0
    %2465 = vmatprep.subr.mxu0 0.0
    %2466 = vmatpush1.msra.mxu0 0.0
    %2467 = vmatprep.subr.mxu0 0.0
    %2468 = vmatpush1.msra.mxu0 0.0
    %2469 = vmatprep.subr.mxu0 0.0
    %2470 = vmatpush1.msra.mxu0 0.0
    %2471 = vmatprep.mubr.f32.mxu0 0.0
    %2472 = vmatmul.mubr.f32.gmra.mrb[0].mxu0 %v1604
    %v2473 = vpop.f32.mrb[0].mxu0
    %v2474 = vadd.f32 0.0, %v2473
    %v2475 = vpop.f32.mrb[0].mxu0
    %2476 = vmatprep.mubr.f32.mxu0 0.0
    %2477 = vmatmul.mubr.f32.gmra.mrb[0].mxu0 %v1609
    %v2478 = vpop.f32.mrb[0].mxu0
    %v2479 = vadd.f32 0.0, %v2478
    %v2480 = vpop.f32.mrb[0].mxu0
    %2481 = vmatprep.mubr.f32.mxu0 0.0
    %2482 = vmatmul.mubr.f32.gmra.mrb[0].mxu0 %v1614
    %v2483 = vpop.f32.mrb[0].mxu0
    %v2484 = vadd.f32 0.0, %v2483
    %v2485 = vpop.f32.mrb[0].mxu0
    %2486 = vmatprep.mubr.f32.mxu0 0.0
    %2487 = vmatmul.mubr.f32.gmra.mrb[0].mxu0 %v1619
    %v2488 = vpop.f32.mrb[0].mxu0
    %v2489 = vadd.f32 0.0, %v2488
    %v2490 = vpop.f32.mrb[0].mxu0
    %2491 = vmatprep.mubr.f32.mxu0 0.0
    %2492 = vmatmul.mubr.f32.gmra.mrb[0].mxu0 %v1624
    %v2493 = vpop.f32.mrb[0].mxu0
    %v2494 = vadd.f32 0.0, %v2493
    %v2495 = vpop.f32.mrb[0].mxu0
    %2496 = vmatprep.mubr.f32.mxu0 0.0
    %2497 = vmatmul.mubr.f32.gmra.mrb[0].mxu0 %v1629
    %v2498 = vpop.f32.mrb[0].mxu0
    %v2499 = vadd.f32 0.0, %v2498
    %v2500 = vpop.f32.mrb[0].mxu0
    %2501 = vmatprep.mubr.f32.mxu0 0.0
    %2502 = vmatmul.mubr.f32.gmra.mrb[0].mxu0 %v1634
    %v2503 = vpop.f32.mrb[0].mxu0
    %v2504 = vadd.f32 0.0, %v2503
    %v2505 = vpop.f32.mrb[0].mxu0
    %2506 = vmatprep.mubr.f32.mxu0 0.0
    %2507 = vmatmul.mubr.f32.gmra.mrb[0].mxu0 %v1639
    %v2508 = vpop.f32.mrb[0].mxu0
    %v2509 = vadd.f32 0.0, %v2508
    %v2510 = vpop.f32.mrb[0].mxu0
    %2511 = vmatprep.mubr.f32.mxu0 0.0
    %2512 = vmatmul.mubr.f32.gmra.mrb[0].mxu0 %v1644
    %v2513 = vpop.f32.mrb[0].mxu0
    %v2514 = vadd.f32 0.0, %v2513
    %v2515 = vpop.f32.mrb[0].mxu0
    %2516 = vmatprep.mubr.f32.mxu0 0.0
    %2517 = vmatmul.mubr.f32.gmra.mrb[0].mxu0 %v1649
    %v2518 = vpop.f32.mrb[0].mxu0
    %v2519 = vadd.f32 0.0, %v2518
    %v2520 = vpop.f32.mrb[0].mxu0
    %2521 = vmatprep.mubr.f32.mxu0 0.0
    %2522 = vmatmul.mubr.f32.gmra.mrb[0].mxu0 %v1654
    %v2523 = vpop.f32.mrb[0].mxu0
    %v2524 = vadd.f32 0.0, %v2523
    %v2525 = vpop.f32.mrb[0].mxu0
    %2526 = vmatprep.mubr.f32.mxu0 0.0
    %2527 = vmatmul.mubr.f32.gmra.mrb[0].mxu0 %v1659
    %v2528 = vpop.f32.mrb[0].mxu0
    %v2529 = vadd.f32 0.0, %v2528
    %v2530 = vpop.f32.mrb[0].mxu0
    %2531 = vmatprep.mubr.f32.mxu0 0.0
    %2532 = vmatmul.mubr.f32.gmra.mrb[0].mxu0 %v1664
    %v2533 = vpop.f32.mrb[0].mxu0
    %v2534 = vadd.f32 0.0, %v2533
    %v2535 = vpop.f32.mrb[0].mxu0
    %2536 = vmatprep.mubr.f32.mxu0 0.0
    %2537 = vmatmul.mubr.f32.gmra.mrb[0].mxu0 %v1669
    %v2538 = vpop.f32.mrb[0].mxu0
    %v2539 = vadd.f32 0.0, %v2538
    %v2540 = vpop.f32.mrb[0].mxu0
    %2541 = vmatprep.mubr.f32.mxu0 0.0
    %2542 = vmatmul.mubr.f32.gmra.mrb[0].mxu0 %v1674
    %v2543 = vpop.f32.mrb[0].mxu0
    %v2544 = vadd.f32 0.0, %v2543
    %v2545 = vpop.f32.mrb[0].mxu0
    %2546 = vmatprep.mubr.f32.mxu0 0.0
    %2547 = vmatmul.mubr.f32.gmra.mrb[0].mxu0 %v1679
    %v2548 = vpop.f32.mrb[0].mxu0
    %v2549 = vadd.f32 0.0, %v2548
    %v2550 = vpop.f32.mrb[0].mxu0
    %2551 = vdwg.mxu0
    %2552 = vmatprep.subr.mxu0 0.0
    %2553 = vmatpush1.msra.mxu0 %v2039
    %2554 = vmatprep.subr.mxu0 0.0
    %2555 = vmatpush1.msra.mxu0 %v2044
    %2556 = vmatprep.subr.mxu0 0.0
    %2557 = vmatpush1.msra.mxu0 %v2049
    %2558 = vmatprep.subr.mxu0 0.0
    %2559 = vmatpush1.msra.mxu0 %v2054
    %2560 = vmatprep.subr.mxu0 0.0
    %2561 = vmatpush1.msra.mxu0 %v2059
    %2562 = vmatprep.subr.mxu0 0.0
    %2563 = vmatpush1.msra.mxu0 %v2064
    %2564 = vmatprep.subr.mxu0 0.0
    %2565 = vmatpush1.msra.mxu0 %v2069
    %2566 = vmatprep.subr.mxu0 0.0
    %2567 = vmatpush1.msra.mxu0 %v2074
    %2568 = vmatprep.subr.mxu0 0.0
    %2569 = vmatpush1.msra.mxu0 %v2079
    %2570 = vmatprep.subr.mxu0 0.0
    %2571 = vmatpush1.msra.mxu0 %v2084
    %2572 = vmatprep.subr.mxu0 0.0
    %2573 = vmatpush1.msra.mxu0 %v2089
    %2574 = vmatprep.subr.mxu0 0.0
    %2575 = vmatpush1.msra.mxu0 %v2094
    %2576 = vmatprep.subr.mxu0 0.0
    %2577 = vmatpush1.msra.mxu0 %v2099
    %2578 = vmatprep.subr.mxu0 0.0
    %2579 = vmatpush1.msra.mxu0 %v2104
    %2580 = vmatprep.subr.mxu0 0.0
    %2581 = vmatpush1.msra.mxu0 %v2109
    %2582 = vmatprep.subr.mxu0 0.0
    %2583 = vmatpush1.msra.mxu0 %v2114
    %2584 = vmatprep.subr.mxu0 0.0
    %2585 = vmatpush1.msra.mxu0 0.0
    %2586 = vmatprep.subr.mxu0 0.0
    %2587 = vmatpush1.msra.mxu0 0.0
    %2588 = vmatprep.subr.mxu0 0.0
    %2589 = vmatpush1.msra.mxu0 0.0
    %2590 = vmatprep.subr.mxu0 0.0
    %2591 = vmatpush1.msra.mxu0 0.0
    %2592 = vmatprep.subr.mxu0 0.0
    %2593 = vmatpush1.msra.mxu0 0.0
    %2594 = vmatprep.subr.mxu0 0.0
    %2595 = vmatpush1.msra.mxu0 0.0
    %2596 = vmatprep.subr.mxu0 0.0
    %2597 = vmatpush1.msra.mxu0 0.0
    %2598 = vmatprep.subr.mxu0 0.0
    %2599 = vmatpush1.msra.mxu0 0.0
    %2600 = vmatprep.subr.mxu0 0.0
    %2601 = vmatpush1.msra.mxu0 0.0
    %2602 = vmatprep.subr.mxu0 0.0
    %2603 = vmatpush1.msra.mxu0 0.0
    %2604 = vmatprep.subr.mxu0 0.0
    %2605 = vmatpush1.msra.mxu0 0.0
    %2606 = vmatprep.subr.mxu0 0.0
    %2607 = vmatpush1.msra.mxu0 0.0
    %2608 = vmatprep.subr.mxu0 0.0
    %2609 = vmatpush1.msra.mxu0 0.0
    %2610 = vmatprep.subr.mxu0 0.0
    %2611 = vmatpush1.msra.mxu0 0.0
    %2612 = vmatprep.subr.mxu0 0.0
    %2613 = vmatpush1.msra.mxu0 0.0
    %2614 = vmatprep.subr.mxu0 0.0
    %2615 = vmatpush1.msra.mxu0 0.0
    %2616 = vmatprep.mubr.f32.mxu0 0.0
    %2617 = vmatmul.mubr.f32.gmra.mrb[0].mxu0 %v1894
    %v2618 = vpop.f32.mrb[0].mxu0
    %v2619 = vadd.f32 0.0, %v2618
    %v2620 = vpop.f32.mrb[0].mxu0
    %2621 = vmatprep.mubr.f32.mxu0 0.0
    %2622 = vmatmul.mubr.f32.gmra.mrb[0].mxu0 %v1899
    %v2623 = vpop.f32.mrb[0].mxu0
    %v2624 = vadd.f32 0.0, %v2623
    %v2625 = vpop.f32.mrb[0].mxu0
    %2626 = vmatprep.mubr.f32.mxu0 0.0
    %2627 = vmatmul.mubr.f32.gmra.mrb[0].mxu0 %v1904
    %v2628 = vpop.f32.mrb[0].mxu0
    %v2629 = vadd.f32 0.0, %v2628
    %v2630 = vpop.f32.mrb[0].mxu0
    %2631 = vmatprep.mubr.f32.mxu0 0.0
    %2632 = vmatmul.mubr.f32.gmra.mrb[0].mxu0 %v1909
    %v2633 = vpop.f32.mrb[0].mxu0
    %v2634 = vadd.f32 0.0, %v2633
    %v2635 = vpop.f32.mrb[0].mxu0
    %2636 = vmatprep.mubr.f32.mxu0 0.0
    %2637 = vmatmul.mubr.f32.gmra.mrb[0].mxu0 %v1914
    %v2638 = vpop.f32.mrb[0].mxu0
    %v2639 = vadd.f32 0.0, %v2638
    %v2640 = vpop.f32.mrb[0].mxu0
    %2641 = vmatprep.mubr.f32.mxu0 0.0
    %2642 = vmatmul.mubr.f32.gmra.mrb[0].mxu0 %v1919
    %v2643 = vpop.f32.mrb[0].mxu0
    %v2644 = vadd.f32 0.0, %v2643
    %v2645 = vpop.f32.mrb[0].mxu0
    %2646 = vmatprep.mubr.f32.mxu0 0.0
    %2647 = vmatmul.mubr.f32.gmra.mrb[0].mxu0 %v1924
    %v2648 = vpop.f32.mrb[0].mxu0
    %v2649 = vadd.f32 0.0, %v2648
    %v2650 = vpop.f32.mrb[0].mxu0
    %2651 = vmatprep.mubr.f32.mxu0 0.0
    %2652 = vmatmul.mubr.f32.gmra.mrb[0].mxu0 %v1929
    %v2653 = vpop.f32.mrb[0].mxu0
    %v2654 = vadd.f32 0.0, %v2653
    %v2655 = vpop.f32.mrb[0].mxu0
    %2656 = vmatprep.mubr.f32.mxu0 0.0
    %2657 = vmatmul.mubr.f32.gmra.mrb[0].mxu0 %v1934
    %v2658 = vpop.f32.mrb[0].mxu0
    %v2659 = vadd.f32 0.0, %v2658
    %v2660 = vpop.f32.mrb[0].mxu0
    %2661 = vmatprep.mubr.f32.mxu0 0.0
    %2662 = vmatmul.mubr.f32.gmra.mrb[0].mxu0 %v1939
    %v2663 = vpop.f32.mrb[0].mxu0
    %v2664 = vadd.f32 0.0, %v2663
    %v2665 = vpop.f32.mrb[0].mxu0
    %2666 = vmatprep.mubr.f32.mxu0 0.0
    %2667 = vmatmul.mubr.f32.gmra.mrb[0].mxu0 %v1944
    %v2668 = vpop.f32.mrb[0].mxu0
    %v2669 = vadd.f32 0.0, %v2668
    %v2670 = vpop.f32.mrb[0].mxu0
    %2671 = vmatprep.mubr.f32.mxu0 0.0
    %2672 = vmatmul.mubr.f32.gmra.mrb[0].mxu0 %v1949
    %v2673 = vpop.f32.mrb[0].mxu0
    %v2674 = vadd.f32 0.0, %v2673
    %v2675 = vpop.f32.mrb[0].mxu0
    %2676 = vmatprep.mubr.f32.mxu0 0.0
    %2677 = vmatmul.mubr.f32.gmra.mrb[0].mxu0 %v1954
    %v2678 = vpop.f32.mrb[0].mxu0
    %v2679 = vadd.f32 0.0, %v2678
    %v2680 = vpop.f32.mrb[0].mxu0
    %2681 = vmatprep.mubr.f32.mxu0 0.0
    %2682 = vmatmul.mubr.f32.gmra.mrb[0].mxu0 %v1959
    %v2683 = vpop.f32.mrb[0].mxu0
    %v2684 = vadd.f32 0.0, %v2683
    %v2685 = vpop.f32.mrb[0].mxu0
    %2686 = vmatprep.mubr.f32.mxu0 0.0
    %2687 = vmatmul.mubr.f32.gmra.mrb[0].mxu0 %v1964
    %v2688 = vpop.f32.mrb[0].mxu0
    %v2689 = vadd.f32 0.0, %v2688
    %v2690 = vpop.f32.mrb[0].mxu0
    %2691 = vmatprep.mubr.f32.mxu0 0.0
    %2692 = vmatmul.mubr.f32.gmra.mrb[0].mxu0 %v1969
    %v2693 = vpop.f32.mrb[0].mxu0
    %v2694 = vadd.f32 0.0, %v2693
    %v2695 = vpop.f32.mrb[0].mxu0
    %2696 = vdwg.mxu0
    %2697 = vmatprep.subr.mxu0 0.0
    %2698 = vmatpush1.msra.mxu0 %v2329
    %2699 = vmatprep.subr.mxu0 0.0
    %2700 = vmatpush1.msra.mxu0 %v2334
    %2701 = vmatprep.subr.mxu0 0.0
    %2702 = vmatpush1.msra.mxu0 %v2339
    %2703 = vmatprep.subr.mxu0 0.0
    %2704 = vmatpush1.msra.mxu0 %v2344
    %2705 = vmatprep.subr.mxu0 0.0
    %2706 = vmatpush1.msra.mxu0 %v2349
    %2707 = vmatprep.subr.mxu0 0.0
    %2708 = vmatpush1.msra.mxu0 %v2354
    %2709 = vmatprep.subr.mxu0 0.0
    %2710 = vmatpush1.msra.mxu0 %v2359
    %2711 = vmatprep.subr.mxu0 0.0
    %2712 = vmatpush1.msra.mxu0 %v2364
    %2713 = vmatprep.subr.mxu0 0.0
    %2714 = vmatpush1.msra.mxu0 %v2369
    %2715 = vmatprep.subr.mxu0 0.0
    %2716 = vmatpush1.msra.mxu0 %v2374
    %2717 = vmatprep.subr.mxu0 0.0
    %2718 = vmatpush1.msra.mxu0 %v2379
    %2719 = vmatprep.subr.mxu0 0.0
    %2720 = vmatpush1.msra.mxu0 %v2384
    %2721 = vmatprep.subr.mxu0 0.0
    %2722 = vmatpush1.msra.mxu0 %v2389
    %2723 = vmatprep.subr.mxu0 0.0
    %2724 = vmatpush1.msra.mxu0 %v2394
    %2725 = vmatprep.subr.mxu0 0.0
    %2726 = vmatpush1.msra.mxu0 %v2399
    %2727 = vmatprep.subr.mxu0 0.0
    %2728 = vmatpush1.msra.mxu0 %v2404
    %2729 = vmatprep.subr.mxu0 0.0
    %2730 = vmatpush1.msra.mxu0 0.0
    %2731 = vmatprep.subr.mxu0 0.0
    %2732 = vmatpush1.msra.mxu0 0.0
    %2733 = vmatprep.subr.mxu0 0.0
    %2734 = vmatpush1.msra.mxu0 0.0
    %2735 = vmatprep.subr.mxu0 0.0
    %2736 = vmatpush1.msra.mxu0 0.0
    %2737 = vmatprep.subr.mxu0 0.0
    %2738 = vmatpush1.msra.mxu0 0.0
    %2739 = vmatprep.subr.mxu0 0.0
    %2740 = vmatpush1.msra.mxu0 0.0
    %2741 = vmatprep.subr.mxu0 0.0
    %2742 = vmatpush1.msra.mxu0 0.0
    %2743 = vmatprep.subr.mxu0 0.0
    %2744 = vmatpush1.msra.mxu0 0.0
    %2745 = vmatprep.subr.mxu0 0.0
    %2746 = vmatpush1.msra.mxu0 0.0
    %2747 = vmatprep.subr.mxu0 0.0
    %2748 = vmatpush1.msra.mxu0 0.0
    %2749 = vmatprep.subr.mxu0 0.0
    %2750 = vmatpush1.msra.mxu0 0.0
    %2751 = vmatprep.subr.mxu0 0.0
    %2752 = vmatpush1.msra.mxu0 0.0
    %2753 = vmatprep.subr.mxu0 0.0
    %2754 = vmatpush1.msra.mxu0 0.0
    %2755 = vmatprep.subr.mxu0 0.0
    %2756 = vmatpush1.msra.mxu0 0.0
    %2757 = vmatprep.subr.mxu0 0.0
    %2758 = vmatpush1.msra.mxu0 0.0
    %2759 = vmatprep.subr.mxu0 0.0
    %2760 = vmatpush1.msra.mxu0 0.0
    %2761 = vmatprep.mubr.f32.mxu0 0.0
    %2762 = vmatmul.mubr.f32.gmra.mrb[0].mxu0 %v2184
    %v2763 = vpop.f32.mrb[0].mxu0
    %v2764 = vadd.f32 0.0, %v2763
    %v2765 = vpop.f32.mrb[0].mxu0
    %2766 = vmatprep.mubr.f32.mxu0 0.0
    %2767 = vmatmul.mubr.f32.gmra.mrb[0].mxu0 %v2189
    %v2768 = vpop.f32.mrb[0].mxu0
    %v2769 = vadd.f32 0.0, %v2768
    %v2770 = vpop.f32.mrb[0].mxu0
    %2771 = vmatprep.mubr.f32.mxu0 0.0
    %2772 = vmatmul.mubr.f32.gmra.mrb[0].mxu0 %v2194
    %v2773 = vpop.f32.mrb[0].mxu0
    %v2774 = vadd.f32 0.0, %v2773
    %v2775 = vpop.f32.mrb[0].mxu0
    %2776 = vmatprep.mubr.f32.mxu0 0.0
    %2777 = vmatmul.mubr.f32.gmra.mrb[0].mxu0 %v2199
    %v2778 = vpop.f32.mrb[0].mxu0
    %v2779 = vadd.f32 0.0, %v2778
    %v2780 = vpop.f32.mrb[0].mxu0
    %2781 = vmatprep.mubr.f32.mxu0 0.0
    %2782 = vmatmul.mubr.f32.gmra.mrb[0].mxu0 %v2204
    %v2783 = vpop.f32.mrb[0].mxu0
    %v2784 = vadd.f32 0.0, %v2783
    %v2785 = vpop.f32.mrb[0].mxu0
    %2786 = vmatprep.mubr.f32.mxu0 0.0
    %2787 = vmatmul.mubr.f32.gmra.mrb[0].mxu0 %v2209
    %v2788 = vpop.f32.mrb[0].mxu0
    %v2789 = vadd.f32 0.0, %v2788
    %v2790 = vpop.f32.mrb[0].mxu0
    %2791 = vmatprep.mubr.f32.mxu0 0.0
    %2792 = vmatmul.mubr.f32.gmra.mrb[0].mxu0 %v2214
    %v2793 = vpop.f32.mrb[0].mxu0
    %v2794 = vadd.f32 0.0, %v2793
    %v2795 = vpop.f32.mrb[0].mxu0
    %2796 = vmatprep.mubr.f32.mxu0 0.0
    %2797 = vmatmul.mubr.f32.gmra.mrb[0].mxu0 %v2219
    %v2798 = vpop.f32.mrb[0].mxu0
    %v2799 = vadd.f32 0.0, %v2798
    %v2800 = vpop.f32.mrb[0].mxu0
    %2801 = vmatprep.mubr.f32.mxu0 0.0
    %2802 = vmatmul.mubr.f32.gmra.mrb[0].mxu0 %v2224
    %v2803 = vpop.f32.mrb[0].mxu0
    %v2804 = vadd.f32 0.0, %v2803
    %v2805 = vpop.f32.mrb[0].mxu0
    %2806 = vmatprep.mubr.f32.mxu0 0.0
    %2807 = vmatmul.mubr.f32.gmra.mrb[0].mxu0 %v2229
    %v2808 = vpop.f32.mrb[0].mxu0
    %v2809 = vadd.f32 0.0, %v2808
    %v2810 = vpop.f32.mrb[0].mxu0
    %2811 = vmatprep.mubr.f32.mxu0 0.0
    %2812 = vmatmul.mubr.f32.gmra.mrb[0].mxu0 %v2234
    %v2813 = vpop.f32.mrb[0].mxu0
    %v2814 = vadd.f32 0.0, %v2813
    %v2815 = vpop.f32.mrb[0].mxu0
    %2816 = vmatprep.mubr.f32.mxu0 0.0
    %2817 = vmatmul.mubr.f32.gmra.mrb[0].mxu0 %v2239
    %v2818 = vpop.f32.mrb[0].mxu0
    %v2819 = vadd.f32 0.0, %v2818
    %v2820 = vpop.f32.mrb[0].mxu0
    %2821 = vmatprep.mubr.f32.mxu0 0.0
    %2822 = vmatmul.mubr.f32.gmra.mrb[0].mxu0 %v2244
    %v2823 = vpop.f32.mrb[0].mxu0
    %v2824 = vadd.f32 0.0, %v2823
    %v2825 = vpop.f32.mrb[0].mxu0
    %2826 = vmatprep.mubr.f32.mxu0 0.0
    %2827 = vmatmul.mubr.f32.gmra.mrb[0].mxu0 %v2249
    %v2828 = vpop.f32.mrb[0].mxu0
    %v2829 = vadd.f32 0.0, %v2828
    %v2830 = vpop.f32.mrb[0].mxu0
    %2831 = vmatprep.mubr.f32.mxu0 0.0
    %2832 = vmatmul.mubr.f32.gmra.mrb[0].mxu0 %v2254
    %v2833 = vpop.f32.mrb[0].mxu0
    %v2834 = vadd.f32 0.0, %v2833
    %v2835 = vpop.f32.mrb[0].mxu0
    %2836 = vmatprep.mubr.f32.mxu0 0.0
    %2837 = vmatmul.mubr.f32.gmra.mrb[0].mxu0 %v2259
    %v2838 = vpop.f32.mrb[0].mxu0
    %v2839 = vadd.f32 0.0, %v2838
    %v2840 = vpop.f32.mrb[0].mxu0
    %2841 = vdwg.mxu0
    %2842 = vmatprep.subr.mxu0 0.0
    %2843 = vmatpush1.msra.mxu0 %v2764
    %2844 = vmatprep.subr.mxu0 0.0
    %2845 = vmatpush1.msra.mxu0 %v2769
    %2846 = vmatprep.subr.mxu0 0.0
    %2847 = vmatpush1.msra.mxu0 %v2774
    %2848 = vmatprep.subr.mxu0 0.0
    %2849 = vmatpush1.msra.mxu0 %v2779
    %2850 = vmatprep.subr.mxu0 0.0
    %2851 = vmatpush1.msra.mxu0 %v2784
    %2852 = vmatprep.subr.mxu0 0.0
    %2853 = vmatpush1.msra.mxu0 %v2789
    %2854 = vmatprep.subr.mxu0 0.0
    %2855 = vmatpush1.msra.mxu0 %v2794
    %2856 = vmatprep.subr.mxu0 0.0
    %2857 = vmatpush1.msra.mxu0 %v2799
    %2858 = vmatprep.subr.mxu0 0.0
    %2859 = vmatpush1.msra.mxu0 %v2804
    %2860 = vmatprep.subr.mxu0 0.0
    %2861 = vmatpush1.msra.mxu0 %v2809
    %2862 = vmatprep.subr.mxu0 0.0
    %2863 = vmatpush1.msra.mxu0 %v2814
    %2864 = vmatprep.subr.mxu0 0.0
    %2865 = vmatpush1.msra.mxu0 %v2819
    %2866 = vmatprep.subr.mxu0 0.0
    %2867 = vmatpush1.msra.mxu0 %v2824
    %2868 = vmatprep.subr.mxu0 0.0
    %2869 = vmatpush1.msra.mxu0 %v2829
    %2870 = vmatprep.subr.mxu0 0.0
    %2871 = vmatpush1.msra.mxu0 %v2834
    %2872 = vmatprep.subr.mxu0 0.0
    %2873 = vmatpush1.msra.mxu0 %v2839
    %2874 = vmatprep.subr.mxu0 0.0
    %2875 = vmatpush1.msra.mxu0 0.0
    %2876 = vmatprep.subr.mxu0 0.0
    %2877 = vmatpush1.msra.mxu0 0.0
    %2878 = vmatprep.subr.mxu0 0.0
    %2879 = vmatpush1.msra.mxu0 0.0
    %2880 = vmatprep.subr.mxu0 0.0
    %2881 = vmatpush1.msra.mxu0 0.0
    %2882 = vmatprep.subr.mxu0 0.0
    %2883 = vmatpush1.msra.mxu0 0.0
    %2884 = vmatprep.subr.mxu0 0.0
    %2885 = vmatpush1.msra.mxu0 0.0
    %2886 = vmatprep.subr.mxu0 0.0
    %2887 = vmatpush1.msra.mxu0 0.0
    %2888 = vmatprep.subr.mxu0 0.0
    %2889 = vmatpush1.msra.mxu0 0.0
    %2890 = vmatprep.subr.mxu0 0.0
    %2891 = vmatpush1.msra.mxu0 0.0
    %2892 = vmatprep.subr.mxu0 0.0
    %2893 = vmatpush1.msra.mxu0 0.0
    %2894 = vmatprep.subr.mxu0 0.0
    %2895 = vmatpush1.msra.mxu0 0.0
    %2896 = vmatprep.subr.mxu0 0.0
    %2897 = vmatpush1.msra.mxu0 0.0
    %2898 = vmatprep.subr.mxu0 0.0
    %2899 = vmatpush1.msra.mxu0 0.0
    %2900 = vmatprep.subr.mxu0 0.0
    %2901 = vmatpush1.msra.mxu0 0.0
    %2902 = vmatprep.subr.mxu0 0.0
    %2903 = vmatpush1.msra.mxu0 0.0
    %2904 = vmatprep.subr.mxu0 0.0
    %2905 = vmatpush1.msra.mxu0 0.0
    %2906 = vmatprep.mubr.f32.mxu0 0.0
    %2907 = vmatmul.mubr.f32.gmra.mrb[0].mxu0 %v2619
    %v2908 = vpop.f32.mrb[0].mxu0
    %v2909 = vadd.f32 0.0, %v2908
    %v2910 = vpop.f32.mrb[0].mxu0
    %2911 = vmatprep.mubr.f32.mxu0 0.0
    %2912 = vmatmul.mubr.f32.gmra.mrb[0].mxu0 %v2624
    %v2913 = vpop.f32.mrb[0].mxu0
    %v2914 = vadd.f32 0.0, %v2913
    %v2915 = vpop.f32.mrb[0].mxu0
    %2916 = vmatprep.mubr.f32.mxu0 0.0
    %2917 = vmatmul.mubr.f32.gmra.mrb[0].mxu0 %v2629
    %v2918 = vpop.f32.mrb[0].mxu0
    %v2919 = vadd.f32 0.0, %v2918
    %v2920 = vpop.f32.mrb[0].mxu0
    %2921 = vmatprep.mubr.f32.mxu0 0.0
    %2922 = vmatmul.mubr.f32.gmra.mrb[0].mxu0 %v2634
    %v2923 = vpop.f32.mrb[0].mxu0
    %v2924 = vadd.f32 0.0, %v2923
    %v2925 = vpop.f32.mrb[0].mxu0
    %2926 = vmatprep.mubr.f32.mxu0 0.0
    %2927 = vmatmul.mubr.f32.gmra.mrb[0].mxu0 %v2639
    %v2928 = vpop.f32.mrb[0].mxu0
    %v2929 = vadd.f32 0.0, %v2928
    %v2930 = vpop.f32.mrb[0].mxu0
    %2931 = vmatprep.mubr.f32.mxu0 0.0
    %2932 = vmatmul.mubr.f32.gmra.mrb[0].mxu0 %v2644
    %v2933 = vpop.f32.mrb[0].mxu0
    %v2934 = vadd.f32 0.0, %v2933
    %v2935 = vpop.f32.mrb[0].mxu0
    %2936 = vmatprep.mubr.f32.mxu0 0.0
    %2937 = vmatmul.mubr.f32.gmra.mrb[0].mxu0 %v2649
    %v2938 = vpop.f32.mrb[0].mxu0
    %v2939 = vadd.f32 0.0, %v2938
    %v2940 = vpop.f32.mrb[0].mxu0
    %2941 = vmatprep.mubr.f32.mxu0 0.0
    %2942 = vmatmul.mubr.f32.gmra.mrb[0].mxu0 %v2654
    %v2943 = vpop.f32.mrb[0].mxu0
    %v2944 = vadd.f32 0.0, %v2943
    %v2945 = vpop.f32.mrb[0].mxu0
    %2946 = vmatprep.mubr.f32.mxu0 0.0
    %2947 = vmatmul.mubr.f32.gmra.mrb[0].mxu0 %v2659
    %v2948 = vpop.f32.mrb[0].mxu0
    %v2949 = vadd.f32 0.0, %v2948
    %v2950 = vpop.f32.mrb[0].mxu0
    %2951 = vmatprep.mubr.f32.mxu0 0.0
    %2952 = vmatmul.mubr.f32.gmra.mrb[0].mxu0 %v2664
    %v2953 = vpop.f32.mrb[0].mxu0
    %v2954 = vadd.f32 0.0, %v2953
    %v2955 = vpop.f32.mrb[0].mxu0
    %2956 = vmatprep.mubr.f32.mxu0 0.0
    %2957 = vmatmul.mubr.f32.gmra.mrb[0].mxu0 %v2669
    %v2958 = vpop.f32.mrb[0].mxu0
    %v2959 = vadd.f32 0.0, %v2958
    %v2960 = vpop.f32.mrb[0].mxu0
    %2961 = vmatprep.mubr.f32.mxu0 0.0
    %2962 = vmatmul.mubr.f32.gmra.mrb[0].mxu0 %v2674
    %v2963 = vpop.f32.mrb[0].mxu0
    %v2964 = vadd.f32 0.0, %v2963
    %v2965 = vpop.f32.mrb[0].mxu0
    %2966 = vmatprep.mubr.f32.mxu0 0.0
    %2967 = vmatmul.mubr.f32.gmra.mrb[0].mxu0 %v2679
    %v2968 = vpop.f32.mrb[0].mxu0
    %v2969 = vadd.f32 0.0, %v2968
    %v2970 = vpop.f32.mrb[0].mxu0
    %2971 = vmatprep.mubr.f32.mxu0 0.0
    %2972 = vmatmul.mubr.f32.gmra.mrb[0].mxu0 %v2684
    %v2973 = vpop.f32.mrb[0].mxu0
    %v2974 = vadd.f32 0.0, %v2973
    %v2975 = vpop.f32.mrb[0].mxu0
    %2976 = vmatprep.mubr.f32.mxu0 0.0
    %2977 = vmatmul.mubr.f32.gmra.mrb[0].mxu0 %v2689
    %v2978 = vpop.f32.mrb[0].mxu0
    %v2979 = vadd.f32 0.0, %v2978
    %v2980 = vpop.f32.mrb[0].mxu0
    %2981 = vmatprep.mubr.f32.mxu0 0.0
    %2982 = vmatmul.mubr.f32.gmra.mrb[0].mxu0 %v2694
    %v2983 = vpop.f32.mrb[0].mxu0
    %v2984 = vadd.f32 0.0, %v2983
    %v2985 = vpop.f32.mrb[0].mxu0
    %2986 = vdwg.mxu0
    %2987 = vmatprep.subr.mxu0 0.0
    %2988 = vmatpush1.msra.mxu0 %v2474
    %2989 = vmatprep.subr.mxu0 0.0
    %2990 = vmatpush1.msra.mxu0 %v2479
    %2991 = vmatprep.subr.mxu0 0.0
    %2992 = vmatpush1.msra.mxu0 %v2484
    %2993 = vmatprep.subr.mxu0 0.0
    %2994 = vmatpush1.msra.mxu0 %v2489
    %2995 = vmatprep.subr.mxu0 0.0
    %2996 = vmatpush1.msra.mxu0 %v2494
    %2997 = vmatprep.subr.mxu0 0.0
    %2998 = vmatpush1.msra.mxu0 %v2499
    %2999 = vmatprep.subr.mxu0 0.0
    %3000 = vmatpush1.msra.mxu0 %v2504
    %3001 = vmatprep.subr.mxu0 0.0
    %3002 = vmatpush1.msra.mxu0 %v2509
    %3003 = vmatprep.subr.mxu0 0.0
    %3004 = vmatpush1.msra.mxu0 %v2514
    %3005 = vmatprep.subr.mxu0 0.0
    %3006 = vmatpush1.msra.mxu0 %v2519
    %3007 = vmatprep.subr.mxu0 0.0
    %3008 = vmatpush1.msra.mxu0 %v2524
    %3009 = vmatprep.subr.mxu0 0.0
    %3010 = vmatpush1.msra.mxu0 %v2529
    %3011 = vmatprep.subr.mxu0 0.0
    %3012 = vmatpush1.msra.mxu0 %v2534
    %3013 = vmatprep.subr.mxu0 0.0
    %3014 = vmatpush1.msra.mxu0 %v2539
    %3015 = vmatprep.subr.mxu0 0.0
    %3016 = vmatpush1.msra.mxu0 %v2544
    %3017 = vmatprep.subr.mxu0 0.0
    %3018 = vmatpush1.msra.mxu0 %v2549
    %3019 = vmatprep.subr.mxu0 0.0
    %3020 = vmatpush1.msra.mxu0 0.0
    %3021 = vmatprep.subr.mxu0 0.0
    %3022 = vmatpush1.msra.mxu0 0.0
    %3023 = vmatprep.subr.mxu0 0.0
    %3024 = vmatpush1.msra.mxu0 0.0
    %3025 = vmatprep.subr.mxu0 0.0
    %3026 = vmatpush1.msra.mxu0 0.0
    %3027 = vmatprep.subr.mxu0 0.0
    %3028 = vmatpush1.msra.mxu0 0.0
    %3029 = vmatprep.subr.mxu0 0.0
    %3030 = vmatpush1.msra.mxu0 0.0
    %3031 = vmatprep.subr.mxu0 0.0
    %3032 = vmatpush1.msra.mxu0 0.0
    %3033 = vmatprep.subr.mxu0 0.0
    %3034 = vmatpush1.msra.mxu0 0.0
    %3035 = vmatprep.subr.mxu0 0.0
    %3036 = vmatpush1.msra.mxu0 0.0
    %3037 = vmatprep.subr.mxu0 0.0
    %3038 = vmatpush1.msra.mxu0 0.0
    %3039 = vmatprep.subr.mxu0 0.0
    %3040 = vmatpush1.msra.mxu0 0.0
    %3041 = vmatprep.subr.mxu0 0.0
    %3042 = vmatpush1.msra.mxu0 0.0
    %3043 = vmatprep.subr.mxu0 0.0
    %3044 = vmatpush1.msra.mxu0 0.0
    %3045 = vmatprep.subr.mxu0 0.0
    %3046 = vmatpush1.msra.mxu0 0.0
    %3047 = vmatprep.subr.mxu0 0.0
    %3048 = vmatpush1.msra.mxu0 0.0
    %3049 = vmatprep.subr.mxu0 0.0
    %3050 = vmatpush1.msra.mxu0 0.0
    %3051 = vmatprep.mubr.f32.mxu0 0.0
    %3052 = vmatmul.mubr.f32.gmra.mrb[0].mxu0 %v2909
    %v3053 = vpop.f32.mrb[0].mxu0
    %v3054 = vadd.f32 0.0, %v3053
    %v3055 = vpop.f32.mrb[0].mxu0
    %3056 = vmatprep.mubr.f32.mxu0 0.0
    %3057 = vmatmul.mubr.f32.gmra.mrb[0].mxu0 %v2914
    %v3058 = vpop.f32.mrb[0].mxu0
    %v3059 = vadd.f32 0.0, %v3058
    %v3060 = vpop.f32.mrb[0].mxu0
    %3061 = vmatprep.mubr.f32.mxu0 0.0
    %3062 = vmatmul.mubr.f32.gmra.mrb[0].mxu0 %v2919
    %v3063 = vpop.f32.mrb[0].mxu0
    %v3064 = vadd.f32 0.0, %v3063
    %v3065 = vpop.f32.mrb[0].mxu0
    %3066 = vmatprep.mubr.f32.mxu0 0.0
    %3067 = vmatmul.mubr.f32.gmra.mrb[0].mxu0 %v2924
    %v3068 = vpop.f32.mrb[0].mxu0
    %v3069 = vadd.f32 0.0, %v3068
    %v3070 = vpop.f32.mrb[0].mxu0
    %3071 = vmatprep.mubr.f32.mxu0 0.0
    %3072 = vmatmul.mubr.f32.gmra.mrb[0].mxu0 %v2929
    %v3073 = vpop.f32.mrb[0].mxu0
    %v3074 = vadd.f32 0.0, %v3073
    %v3075 = vpop.f32.mrb[0].mxu0
    %3076 = vmatprep.mubr.f32.mxu0 0.0
    %3077 = vmatmul.mubr.f32.gmra.mrb[0].mxu0 %v2934
    %v3078 = vpop.f32.mrb[0].mxu0
    %v3079 = vadd.f32 0.0, %v3078
    %v3080 = vpop.f32.mrb[0].mxu0
    %3081 = vmatprep.mubr.f32.mxu0 0.0
    %3082 = vmatmul.mubr.f32.gmra.mrb[0].mxu0 %v2939
    %v3083 = vpop.f32.mrb[0].mxu0
    %v3084 = vadd.f32 0.0, %v3083
    %v3085 = vpop.f32.mrb[0].mxu0
    %3086 = vmatprep.mubr.f32.mxu0 0.0
    %3087 = vmatmul.mubr.f32.gmra.mrb[0].mxu0 %v2944
    %v3088 = vpop.f32.mrb[0].mxu0
    %v3089 = vadd.f32 0.0, %v3088
    %v3090 = vpop.f32.mrb[0].mxu0
    %3091 = vmatprep.mubr.f32.mxu0 0.0
    %3092 = vmatmul.mubr.f32.gmra.mrb[0].mxu0 %v2949
    %v3093 = vpop.f32.mrb[0].mxu0
    %v3094 = vadd.f32 0.0, %v3093
    %v3095 = vpop.f32.mrb[0].mxu0
    %3096 = vmatprep.mubr.f32.mxu0 0.0
    %3097 = vmatmul.mubr.f32.gmra.mrb[0].mxu0 %v2954
    %v3098 = vpop.f32.mrb[0].mxu0
    %v3099 = vadd.f32 0.0, %v3098
    %v3100 = vpop.f32.mrb[0].mxu0
    %3101 = vmatprep.mubr.f32.mxu0 0.0
    %3102 = vmatmul.mubr.f32.gmra.mrb[0].mxu0 %v2959
    %v3103 = vpop.f32.mrb[0].mxu0
    %v3104 = vadd.f32 0.0, %v3103
    %v3105 = vpop.f32.mrb[0].mxu0
    %3106 = vmatprep.mubr.f32.mxu0 0.0
    %3107 = vmatmul.mubr.f32.gmra.mrb[0].mxu0 %v2964
    %v3108 = vpop.f32.mrb[0].mxu0
    %v3109 = vadd.f32 0.0, %v3108
    %v3110 = vpop.f32.mrb[0].mxu0
    %3111 = vmatprep.mubr.f32.mxu0 0.0
    %3112 = vmatmul.mubr.f32.gmra.mrb[0].mxu0 %v2969
    %v3113 = vpop.f32.mrb[0].mxu0
    %v3114 = vadd.f32 0.0, %v3113
    %v3115 = vpop.f32.mrb[0].mxu0
    %3116 = vmatprep.mubr.f32.mxu0 0.0
    %3117 = vmatmul.mubr.f32.gmra.mrb[0].mxu0 %v2974
    %v3118 = vpop.f32.mrb[0].mxu0
    %v3119 = vadd.f32 0.0, %v3118
    %v3120 = vpop.f32.mrb[0].mxu0
    %3121 = vmatprep.mubr.f32.mxu0 0.0
    %3122 = vmatmul.mubr.f32.gmra.mrb[0].mxu0 %v2979
    %v3123 = vpop.f32.mrb[0].mxu0
    %v3124 = vadd.f32 0.0, %v3123
    %v3125 = vpop.f32.mrb[0].mxu0
    %3126 = vmatprep.mubr.f32.mxu0 0.0
    %3127 = vmatmul.mubr.f32.gmra.mrb[0].mxu0 %v2984
    %v3128 = vpop.f32.mrb[0].mxu0
    %v3129 = vadd.f32 0.0, %v3128
    %v3130 = vpop.f32.mrb[0].mxu0
    %3131 = vdwg.mxu0
    %v3132 = vld [vmem:[#allocation2] sm:$0xff]
    %3133 = vmatprep.subr.mxu0 0.0
    %3134 = vmatpush1.msra.mxu0 %v3054
    %3135 = vmatprep.subr.mxu0 0.0
    %3136 = vmatpush1.msra.mxu0 %v3059
    %3137 = vmatprep.subr.mxu0 0.0
    %3138 = vmatpush1.msra.mxu0 %v3064
    %3139 = vmatprep.subr.mxu0 0.0
    %3140 = vmatpush1.msra.mxu0 %v3069
    %3141 = vmatprep.subr.mxu0 0.0
    %3142 = vmatpush1.msra.mxu0 %v3074
    %3143 = vmatprep.subr.mxu0 0.0
    %3144 = vmatpush1.msra.mxu0 %v3079
    %3145 = vmatprep.subr.mxu0 0.0
    %3146 = vmatpush1.msra.mxu0 %v3084
    %3147 = vmatprep.subr.mxu0 0.0
    %3148 = vmatpush1.msra.mxu0 %v3089
    %3149 = vmatprep.subr.mxu0 0.0
    %3150 = vmatpush1.msra.mxu0 %v3094
    %3151 = vmatprep.subr.mxu0 0.0
    %3152 = vmatpush1.msra.mxu0 %v3099
    %3153 = vmatprep.subr.mxu0 0.0
    %3154 = vmatpush1.msra.mxu0 %v3104
    %3155 = vmatprep.subr.mxu0 0.0
    %3156 = vmatpush1.msra.mxu0 %v3109
    %3157 = vmatprep.subr.mxu0 0.0
    %3158 = vmatpush1.msra.mxu0 %v3114
    %3159 = vmatprep.subr.mxu0 0.0
    %3160 = vmatpush1.msra.mxu0 %v3119
    %3161 = vmatprep.subr.mxu0 0.0
    %3162 = vmatpush1.msra.mxu0 %v3124
    %3163 = vmatprep.subr.mxu0 0.0
    %3164 = vmatpush1.msra.mxu0 %v3129
    %3165 = vmatprep.subr.mxu0 0.0
    %3166 = vmatpush1.msra.mxu0 0.0
    %3167 = vmatprep.subr.mxu0 0.0
    %3168 = vmatpush1.msra.mxu0 0.0
    %3169 = vmatprep.subr.mxu0 0.0
    %3170 = vmatpush1.msra.mxu0 0.0
    %3171 = vmatprep.subr.mxu0 0.0
    %3172 = vmatpush1.msra.mxu0 0.0
    %3173 = vmatprep.subr.mxu0 0.0
    %3174 = vmatpush1.msra.mxu0 0.0
    %3175 = vmatprep.subr.mxu0 0.0
    %3176 = vmatpush1.msra.mxu0 0.0
    %3177 = vmatprep.subr.mxu0 0.0
    %3178 = vmatpush1.msra.mxu0 0.0
    %3179 = vmatprep.subr.mxu0 0.0
    %3180 = vmatpush1.msra.mxu0 0.0
    %3181 = vmatprep.subr.mxu0 0.0
    %3182 = vmatpush1.msra.mxu0 0.0
    %3183 = vmatprep.subr.mxu0 0.0
    %3184 = vmatpush1.msra.mxu0 0.0
    %3185 = vmatprep.subr.mxu0 0.0
    %3186 = vmatpush1.msra.mxu0 0.0
    %3187 = vmatprep.subr.mxu0 0.0
    %3188 = vmatpush1.msra.mxu0 0.0
    %3189 = vmatprep.subr.mxu0 0.0
    %3190 = vmatpush1.msra.mxu0 0.0
    %3191 = vmatprep.subr.mxu0 0.0
    %3192 = vmatpush1.msra.mxu0 0.0
    %3193 = vmatprep.subr.mxu0 0.0
    %3194 = vmatpush1.msra.mxu0 0.0
    %3195 = vmatprep.subr.mxu0 0.0
    %3196 = vmatpush1.msra.mxu0 0.0
    %3197 = vmatprep.mubr.f32.mxu0 0.0
    %3198 = vmatmul.mubr.f32.gmra.mrb[0].mxu0 %v3132
    %v3199 = vpop.f32.mrb[0].mxu0
    %v3200 = vadd.f32 0.0, %v3199
    %v3201 = vpop.f32.mrb[0].mxu0
    %3202 = vdwg.mxu0
    %3203 = vst [vmem:[#allocation7] sm:$0xff] %v3200
    // Predicated region
    $region18: #{tpu_custom_call.1} parent=1 // pred_check
      _
    $region19: #{tpu_custom_call.1} parent=1 // pred_check_branch
      %3205 = sbr.rel (0) target = $region21
    $region20: #{tpu_custom_call.1} parent=1 // pred_region
      %s3207 = ssub.s32 128, 128
      %3208 = vsyncadd [#allocation4], %s3207
      %s3210 = sshll.u32 [#allocation7], 4
      %s3211 = int_to_ptr.vmem [resolvable:$true] %s3210
      %3213 = dma.vmem_to_hbm [thread:$0]  %s3211, 128, %s2, [#allocation4]
    $region21: #{tpu_custom_call.1} parent=1 // pred_fallthru
      _
    // Predicated region
    $region22: #{tpu_custom_call.1} parent=1 // pred_check
      _
    $region23: #{tpu_custom_call.1} parent=1 // pred_check_branch
      %3215 = sbr.rel (0) target = $region25
    $region24: #{tpu_custom_call.1} parent=1 // pred_region
      %3216 = dma.done [#allocation4], 128
    $region25: #{tpu_custom_call.1} parent=1 // pred_fallthru
      _
    %3217 = vsyncpa [#allocation3], 1
    %3218 = vsyncpa [#allocation6], 1
    %3219 = vsyncpa [#allocation4], 1

</llo_original>
